<compile_context>
chip_gen: v5e
topology: v5e:2x2
jax: 0.10.0
libtpu: 0.0.40
codegen_flags: <defaults>
</compile_context>

<pallas_src>
import functools

import jax
import jax.numpy as jnp
from jax import lax
from jax.experimental import pallas as pl
from jax.experimental.pallas import tpu as pltpu


# ----------------------------------------------------------------------------
# small helpers
# ----------------------------------------------------------------------------
def _round_up(x, m):
    return ((x + m - 1) // m) * m


def _pad2d(a, rows, cols):
    r, c = a.shape
    if r == rows and c == cols:
        return a
    return jnp.pad(a, ((0, rows - r), (0, cols - c)))


_VMEM_BUDGET = 40 * 1024 * 1024     # double-buffered working-set cap (v7x safe)
_VMEM_LIMIT = 48 * 1024 * 1024      # scoped VMEM limit (< 64 MiB physical on v7x)


def _choose_tile_m(m, kp, np_, out_itemsize):
    """Row-tile: multiple of 16 (bf16 sublane packing); 256 granularity for
    large M, capped so the double-buffered working set stays under budget."""
    if m <= 256:
        return _round_up(max(m, 16), 16)
    fixed = 2 * (kp * np_ * 2) + 2 * (np_ * 4) + 4 * (8 * np_ * 4)
    per_row = 2 * (kp * 2 + np_ * out_itemsize)
    t = (_VMEM_BUDGET - fixed) // per_row
    t = max(256, min(t, 2048, _round_up(m, 256)))
    return (t // 256) * 256


# ----------------------------------------------------------------------------
# Fused Pallas kernels: bf16 matmul + bias + [ReLU] (+ per-tile BN statistics)
# ----------------------------------------------------------------------------
def _matmul_bias_kernel(p_ref, w_ref, b_ref, o_ref, *, relu):
    acc = jnp.dot(p_ref[...], w_ref[...], preferred_element_type=jnp.float32)
    acc = acc + b_ref[...]                       # (1, Np) broadcasts
    if relu:
        acc = jnp.maximum(acc, 0.0)
    o_ref[...] = acc.astype(o_ref.dtype)


def _matmul_bias_stats_kernel(p_ref, w_ref, b_ref, o_ref, sum_ref, ssq_ref, *, relu):
    acc = jnp.dot(p_ref[...], w_ref[...], preferred_element_type=jnp.float32)
    acc = acc + b_ref[...]
    if relu:
        acc = jnp.maximum(acc, 0.0)
    o_ref[...] = acc.astype(o_ref.dtype)
    # Per-tile partial statistics (no masking; padded-row contribution is
    # subtracted analytically at the JAX level).
    s = jnp.sum(acc, axis=0, keepdims=True)              # (1, Np)
    ss = jnp.sum(acc * acc, axis=0, keepdims=True)       # (1, Np)
    sum_ref[...] = jnp.broadcast_to(s, sum_ref.shape)
    ssq_ref[...] = jnp.broadcast_to(ss, ssq_ref.shape)


def _pallas_fused_matmul(p, wm, b2, *, relu, with_stats, out_dtype, tile_m):
    """p: (Mp, Kp) bf16, wm: (Kp, Np) bf16, b2: (1, Np) f32."""
    mp, kp = p.shape
    kp2, np_ = wm.shape
    assert kp == kp2 and mp % tile_m == 0 and np_ % 128 == 0
    n_tiles = mp // tile_m
    grid = (n_tiles,)

    in_specs = [
        pl.BlockSpec((tile_m, kp), lambda i: (i, 0)),
        pl.BlockSpec((kp, np_), lambda i: (0, 0)),      # weight resident
        pl.BlockSpec((1, np_), lambda i: (0, 0)),
    ]
    act_spec = pl.BlockSpec((tile_m, np_), lambda i: (i, 0))   # lane-dense stores

    if with_stats:
        kernel = functools.partial(_matmul_bias_stats_kernel, relu=relu)
        out_shape = (
            jax.ShapeDtypeStruct((mp, np_), out_dtype),
            jax.ShapeDtypeStruct((n_tiles * 8, np_), jnp.float32),
            jax.ShapeDtypeStruct((n_tiles * 8, np_), jnp.float32),
        )
        out_specs = (
            act_spec,
            pl.BlockSpec((8, np_), lambda i: (i, 0)),
            pl.BlockSpec((8, np_), lambda i: (i, 0)),
        )
    else:
        kernel = functools.partial(_matmul_bias_kernel, relu=relu)
        out_shape = jax.ShapeDtypeStruct((mp, np_), out_dtype)
        out_specs = act_spec

    res = pl.pallas_call(
        kernel,
        out_shape=out_shape,
        grid=grid,
        in_specs=in_specs,
        out_specs=out_specs,
        compiler_params=pltpu.CompilerParams(
            dimension_semantics=("parallel",),
            vmem_limit_bytes=_VMEM_LIMIT,
        ),
    )(p, wm, b2)

    if with_stats:
        out, s8, ss8 = res
        s = s8.reshape(n_tiles, 8, np_)[:, 0, :].sum(axis=0)
        ss = ss8.reshape(n_tiles, 8, np_)[:, 0, :].sum(axis=0)
        return out, s, ss
    return res, None, None


def _fused_layer(p, wm, b2, *, relu, with_stats, out_dtype):
    """Pad the raw (M, K) patch matrix, cast to bf16, run the fused kernel."""
    m, k = p.shape
    kp, np_ = wm.shape
    assert k <= kp
    tile_m = _choose_tile_m(m, kp, np_, jnp.dtype(out_dtype).itemsize)
    mp = _round_up(m, tile_m)
    p = _pad2d(p.astype(jnp.bfloat16), mp, kp)
    out, s, ss = _pallas_fused_matmul(p, wm, b2, relu=relu, with_stats=with_stats,
                                      out_dtype=out_dtype, tile_m=tile_m)
    if with_stats:
        pad_rows = mp - m
        if pad_rows:
            # Each zero-padded patch row produced exactly relu(bias) per channel.
            pad_val = jnp.maximum(b2[0], 0.0) if relu else b2[0]
            s = s - pad_rows * pad_val
            ss = ss - pad_rows * pad_val * pad_val
    return out, s, ss


# ----------------------------------------------------------------------------
# BatchNorm (train mode) folded into the FOLLOWING layer:
#   y = a*scale + shift  ==>  next_layer(y) = next_layer_scaledW(a + shift/scale)
# ----------------------------------------------------------------------------
def _bn_fold_params(s, ss, count, gamma, beta, eps=1e-5):
    mean = s / count
    var = jnp.maximum(ss / count - mean * mean, 0.0)    # biased (train mode)
    scale = gamma * lax.rsqrt(var + eps)                # folded into next weights
    shift = beta / scale - mean                         # added before next layer
    return scale, shift


def _prep_weight(lp, in_scale, num_taps):
    """Fold the previous BN per-channel scale into this layer's weight rows
    (rows are ordered tap-major, input-channel-minor) and cast to bf16."""
    wm = lp["wm_f32"]
    if in_scale is not None:
        row_scale = jnp.tile(in_scale, num_taps)
        pad = wm.shape[0] - row_scale.shape[0]
        if pad:
            row_scale = jnp.concatenate([row_scale, jnp.ones((pad,), jnp.float32)])
        wm = wm * row_scale[:, None]
    return wm.astype(jnp.bfloat16)


# ----------------------------------------------------------------------------
# Layer blocks (patch extraction at JAX level; matmul+bias+ReLU+stats in Pallas)
# ----------------------------------------------------------------------------
def _encoder_block(x, pre, lp):
    """3x3 / stride 2 / pad 1 conv + bias + ReLU; previous BN folded in."""
    n, h, w, cin = x.shape
    if pre is not None:
        x = x + pre["shift"].astype(x.dtype)
    ho = (h + 2 - 3) // 2 + 1
    wo = (w + 2 - 3) // 2 + 1
    xp = jnp.pad(x, ((0, 0), (1, 1), (1, 1), (0, 0)))
    cols = []
    for di in range(3):
        for dj in range(3):
            cols.append(xp[:, di:di + 2 * ho:2, dj:dj + 2 * wo:2, :])
    patches = jnp.stack(cols, axis=3).reshape(n * ho * wo, 9 * cin)
    # TODO(synk): im2col above is still a materialized bf16 (M, 9*Cin) tensor.

    wm = _prep_weight(lp, None if pre is None else pre["scale"], 9)
    out, s, ss = _fused_layer(patches, wm, lp["b2"], relu=True,
                              with_stats=True, out_dtype=jnp.bfloat16)
    cout = lp["cout"]
    m = n * ho * wo
    act = out[:m, :cout].reshape(n, ho, wo, cout)
    scale, shift = _bn_fold_params(s[:cout], ss[:cout], m, lp["gamma"], lp["beta"])
    return act, dict(scale=scale, shift=shift)


def _decoder_block(x, pre, lp):
    """3x3 / stride 2 / pad 1 / output_padding 1 ConvTranspose2d + bias + ReLU
    via subpixel decomposition (one matmul vs a (4*Cin, 4*Cout) weight)."""
    n, h, w, cin = x.shape
    if pre is not None:
        x = x + pre["shift"].astype(x.dtype)
    xp = jnp.pad(x, ((0, 0), (0, 1), (0, 1), (0, 0)))
    patches = jnp.concatenate(
        [xp[:, :h, :w, :], xp[:, :h, 1:, :], xp[:, 1:, :w, :], xp[:, 1:, 1:, :]],
        axis=-1).reshape(n * h * w, 4 * cin)

    wm = _prep_weight(lp, None if pre is None else pre["scale"], 4)
    out, s, ss = _fused_layer(patches, wm, lp["b2"], relu=True,
                              with_stats=True, out_dtype=jnp.bfloat16)
    cout = lp["cout"]
    m = n * h * w
    act = out[:m, :4 * cout].reshape(n, h, w, 2, 2, cout)
    act = jnp.transpose(act, (0, 1, 3, 2, 4, 5)).reshape(n, 2 * h, 2 * w, cout)

    s_c = s[:4 * cout].reshape(4, cout).sum(axis=0)
    ss_c = ss[:4 * cout].reshape(4, cout).sum(axis=0)
    scale, shift = _bn_fold_params(s_c, ss_c, 4 * m, lp["gamma"], lp["beta"])
    return act, dict(scale=scale, shift=shift)


def _classifier_block(x, pre, lp):
    n, h, w, cin = x.shape
    if pre is not None:
        x = x + pre["shift"].astype(x.dtype)
    p = x.reshape(n * h * w, cin)
    wm = _prep_weight(lp, None if pre is None else pre["scale"], 1)
    out, _, _ = _fused_layer(p, wm, lp["b2"], relu=False,
                             with_stats=False, out_dtype=jnp.float32)
    cout = lp["cout"]
    return out[:n * h * w, :cout].reshape(n, h, w, cout)


# ----------------------------------------------------------------------------
# Parameters: PyTorch-style init, then pre-packed matmul weights (f32, padded;
# cast to bf16 per forward after the BN-scale fold)
# ----------------------------------------------------------------------------
def _init_torch_conv(key, cout, cin, k, transposed=False):
    fan_in = cin * k * k
    bound = 1.0 / (fan_in ** 0.5)
    kw, kb = jax.random.split(key)
    shape = (cin, cout, k, k) if transposed else (cout, cin, k, k)
    w = jax.random.uniform(kw, shape, jnp.float32, -bound, bound)
    b = jax.random.uniform(kb, (cout,), jnp.float32, -bound, bound)
    return w, b


def _pack_encoder(w, b):
    cout, cin, k, _ = w.shape
    wm = jnp.transpose(w, (2, 3, 1, 0)).reshape(k * k * cin, cout)
    kp = _round_up(k * k * cin, 16)
    np_ = _round_up(cout, 128)                  # lane-dense output columns
    return dict(
        wm_f32=_pad2d(wm, kp, np_),
        b2=_pad2d(b.reshape(1, cout), 1, np_),
        gamma=jnp.ones((cout,), jnp.float32),
        beta=jnp.zeros((cout,), jnp.float32),
        cout=cout,
    )


def _pack_decoder(w, b):
    # w: (Cin, Cout, 3, 3) PyTorch ConvTranspose2d layout.
    # Patch taps per output (i, j): [x(i,j), x(i,j+1), x(i+1,j), x(i+1,j+1)];
    # columns grouped by output parity (ph, pw) in order (0,0),(0,1),(1,0),(1,1).
    cin, cout = w.shape[0], w.shape[1]
    zeros = jnp.zeros((cin, cout), w.dtype)
    col_blocks = []
    for ph in (0, 1):
        for pw in (0, 1):
            rows = []
            for dh in (0, 1):
                for dw in (0, 1):
                    use = (ph == 1 or dh == 0) and (pw == 1 or dw == 0)
                    if use:
                        kh = 1 if ph == 0 else (2 if dh == 0 else 0)
                        kw_ = 1 if pw == 0 else (2 if dw == 0 else 0)
                        rows.append(w[:, :, kh, kw_])
                    else:
                        rows.append(zeros)
            col_blocks.append(jnp.concatenate(rows, axis=0))   # (4*Cin, Cout)
    wm = jnp.concatenate(col_blocks, axis=1)                   # (4*Cin, 4*Cout)
    kp = _round_up(4 * cin, 16)
    np_ = _round_up(4 * cout, 128)
    b4 = jnp.tile(b, 4).reshape(1, 4 * cout)
    return dict(
        wm_f32=_pad2d(wm, kp, np_),
        b2=_pad2d(b4, 1, np_),
        gamma=jnp.ones((cout,), jnp.float32),
        beta=jnp.zeros((cout,), jnp.float32),
        cout=cout,
    )


def _pack_classifier(w, b):
    cout, cin = w.shape[0], w.shape[1]
    wm = w.reshape(cout, cin).T
    kp = _round_up(cin, 16)
    np_ = _round_up(cout, 128)
    return dict(
        wm_f32=_pad2d(wm, kp, np_),
        b2=_pad2d(b.reshape(1, cout), 1, np_),
        cout=cout,
    )


def init_fcn_params(key, num_classes):
    keys = jax.random.split(key, 9)
    params = {}
    enc = [(3, 32), (32, 64), (64, 128), (128, 256)]
    for i, (cin, cout) in enumerate(enc):
        w, b = _init_torch_conv(keys[i], cout, cin, 3)
        params[f"conv{i + 1}"] = _pack_encoder(w, b)
    dec = [(256, 128), (128, 64), (64, 32), (32, 32)]
    for i, (cin, cout) in enumerate(dec):
        w, b = _init_torch_conv(keys[4 + i], cout, cin, 3, transposed=True)
        params[f"deconv{i + 1}"] = _pack_decoder(w, b)
    w, b = _init_torch_conv(keys[8], num_classes, 32, 1)
    params["classifier"] = _pack_classifier(w, b)
    return params


# ----------------------------------------------------------------------------
# Forward pass (matches FCN.forward: conv->ReLU->BN x4, deconv->ReLU->BN x4, 1x1)
# ----------------------------------------------------------------------------
def fcn_forward(x_nchw, params):
    x = jnp.transpose(x_nchw, (0, 2, 3, 1)).astype(jnp.float32)   # NCHW -> NHWC
    pre = None
    for i in range(1, 5):
        x, pre = _encoder_block(x, pre, params[f"conv{i}"])
    for i in range(1, 5):
        x, pre = _decoder_block(x, pre, params[f"deconv{i}"])
    score = _classifier_block(x, pre, params["classifier"])
    return jnp.transpose(score, (0, 3, 1, 2)).astype(jnp.float32)  # NHWC -> NCHW


# ----------------------------------------------------------------------------
if __name__ == "__main__":
    num_classes = 5
    key = jax.random.PRNGKey(0)
    k_x, k_p = jax.random.split(key)

    x = jax.random.normal(k_x, (2, 3, 16, 16), jnp.float32)   # NCHW like PyTorch
    params = init_fcn_params(k_p, num_classes)

    fwd = jax.jit(lambda xx: fcn_forward(xx, params))
    out = fwd(x)
    jax.block_until_ready(out)

    assert out.shape == (2, num_classes, 16, 16), out.shape
    assert out.dtype == jnp.float32
    assert bool(jnp.all(jnp.isfinite(out)))
    print("KERNEL_OK")
</pallas_src>

<mosaic_0001>
module attributes {stable_mosaic.version = 11 : i64} {
  func.func @_matmul_bias_stats_kernel(%arg0: i32, %arg1: memref<128x32xbf16, #tpu.memory_space<vmem>>, %arg2: memref<32x128xbf16, #tpu.memory_space<vmem>>, %arg3: memref<1x128xf32, #tpu.memory_space<vmem>>, %arg4: memref<128x128xbf16, #tpu.memory_space<vmem>>, %arg5: memref<8x128xf32, #tpu.memory_space<vmem>>, %arg6: memref<8x128xf32, #tpu.memory_space<vmem>>) attributes {dimension_semantics = [#tpu.dimension_semantics<parallel>], iteration_bounds = array<i64: 1>, scalar_prefetch = 0 : i64, scratch_operands = 0 : i64, tpu.core_type = #tpu.core_type<tc>, window_params = [{transform_indices = @transform_0, window_bounds = array<i64: 128, 32>}, {pipeline_mode = #tpu.pipeline_mode<synchronous>, transform_indices = @transform_1, window_bounds = array<i64: 32, 128>}, {pipeline_mode = #tpu.pipeline_mode<synchronous>, transform_indices = @transform_2, window_bounds = array<i64: 1, 128>}, {transform_indices = @transform_3, window_bounds = array<i64: 128, 128>}, {transform_indices = @transform_4, window_bounds = array<i64: 8, 128>}, {transform_indices = @transform_5, window_bounds = array<i64: 8, 128>}]} {
    %c0 = arith.constant 0 : index
    %c0_0 = arith.constant 0 : index
    %0 = vector.load %arg1[%c0, %c0_0] : memref<128x32xbf16, #tpu.memory_space<vmem>>, vector<128x32xbf16>
    %c0_1 = arith.constant 0 : index
    %c0_2 = arith.constant 0 : index
    %1 = vector.load %arg2[%c0_1, %c0_2] : memref<32x128xbf16, #tpu.memory_space<vmem>>, vector<32x128xbf16>
    %cst = arith.constant dense<0.000000e+00> : vector<128x128xf32>
    %2 = tpu.matmul %0, %1, %cst {dimension_numbers = #tpu.dot_dimension_numbers<[1], [0], [0], [1], [0, 0, 1, 1], [], []>} : vector<128x32xbf16>, vector<32x128xbf16>, vector<128x128xf32> -> vector<128x128xf32>
    %c0_3 = arith.constant 0 : index
    %c0_4 = arith.constant 0 : index
    %3 = vector.load %arg3[%c0_3, %c0_4] : memref<1x128xf32, #tpu.memory_space<vmem>>, vector<1x128xf32>
    %4 = vector.broadcast %3 : vector<1x128xf32> to vector<128x128xf32>
    %5 = arith.addf %2, %4 : vector<128x128xf32>
    %cst_5 = arith.constant 0.000000e+00 : f32
    %6 = vector.broadcast %cst_5 : f32 to vector<128x128xf32>
    %7 = arith.maximumf %5, %6 : vector<128x128xf32>
    %8 = arith.truncf %7 : vector<128x128xf32> to vector<128x128xbf16>
    %c0_6 = arith.constant 0 : index
    %c0_7 = arith.constant 0 : index
    %9 = vector.load %arg4[%c0_6, %c0_7] : memref<128x128xbf16, #tpu.memory_space<vmem>>, vector<128x128xbf16>
    tpu.vector_store %arg4[%c0_6, %c0_7], %8 {strides = array<i32>} : memref<128x128xbf16, #tpu.memory_space<vmem>>, vector<128x128xbf16>,
    %cst_8 = arith.constant dense<0.000000e+00> : vector<128xf32>
    %10 = vector.multi_reduction <add>, %7, %cst_8 [0] : vector<128x128xf32> to vector<128xf32>
    %11 = vector.shape_cast %10 : vector<128xf32> to vector<1x128xf32>
    %12 = arith.mulf %7, %7 : vector<128x128xf32>
    %cst_9 = arith.constant dense<0.000000e+00> : vector<128xf32>
    %13 = vector.multi_reduction <add>, %12, %cst_9 [0] : vector<128x128xf32> to vector<128xf32>
    %14 = vector.shape_cast %13 : vector<128xf32> to vector<1x128xf32>
    %15 = vector.shape_cast %11 : vector<1x128xf32> to vector<1x128xf32>
    %16 = vector.broadcast %15 : vector<1x128xf32> to vector<8x128xf32>
    %c0_10 = arith.constant 0 : index
    %c0_11 = arith.constant 0 : index
    %17 = vector.load %arg5[%c0_10, %c0_11] : memref<8x128xf32, #tpu.memory_space<vmem>>, vector<8x128xf32>
    tpu.vector_store %arg5[%c0_10, %c0_11], %16 {strides = array<i32>} : memref<8x128xf32, #tpu.memory_space<vmem>>, vector<8x128xf32>,
    %18 = vector.shape_cast %14 : vector<1x128xf32> to vector<1x128xf32>
    %19 = vector.broadcast %18 : vector<1x128xf32> to vector<8x128xf32>
    %c0_12 = arith.constant 0 : index
    %c0_13 = arith.constant 0 : index
    %20 = vector.load %arg6[%c0_12, %c0_13] : memref<8x128xf32, #tpu.memory_space<vmem>>, vector<8x128xf32>
    tpu.vector_store %arg6[%c0_12, %c0_13], %19 {strides = array<i32>} : memref<8x128xf32, #tpu.memory_space<vmem>>, vector<8x128xf32>,
    return
  }
  func.func @transform_0(%arg0: i32) -> (i32, i32) {
    %c0_i32 = arith.constant 0 : i32
    %c0_i32_0 = arith.constant 0 : i32
    return %arg0, %c0_i32 : i32, i32
  }
  func.func @transform_1(%arg0: i32) -> (i32, i32) {
    %c0_i32 = arith.constant 0 : i32
    %c0_i32_0 = arith.constant 0 : i32
    %c0_i32_1 = arith.constant 0 : i32
    return %c0_i32, %c0_i32_0 : i32, i32
  }
  func.func @transform_2(%arg0: i32) -> (i32, i32) {
    %c0_i32 = arith.constant 0 : i32
    %c0_i32_0 = arith.constant 0 : i32
    %c0_i32_1 = arith.constant 0 : i32
    return %c0_i32, %c0_i32_0 : i32, i32
  }
  func.func @transform_3(%arg0: i32) -> (i32, i32) {
    %c0_i32 = arith.constant 0 : i32
    %c0_i32_0 = arith.constant 0 : i32
    return %arg0, %c0_i32 : i32, i32
  }
  func.func @transform_4(%arg0: i32) -> (i32, i32) {
    %c0_i32 = arith.constant 0 : i32
    %c0_i32_0 = arith.constant 0 : i32
    return %arg0, %c0_i32 : i32, i32
  }
  func.func @transform_5(%arg0: i32) -> (i32, i32) {
    %c0_i32 = arith.constant 0 : i32
    %c0_i32_0 = arith.constant 0 : i32
    return %arg0, %c0_i32 : i32, i32
  }
}

module attributes {stable_mosaic.version = 11 : i64} {
  func.func @_matmul_bias_stats_kernel(%arg0: i32, %arg1: memref<32x288xbf16, #tpu.memory_space<vmem>>, %arg2: memref<288x128xbf16, #tpu.memory_space<vmem>>, %arg3: memref<1x128xf32, #tpu.memory_space<vmem>>, %arg4: memref<32x128xbf16, #tpu.memory_space<vmem>>, %arg5: memref<8x128xf32, #tpu.memory_space<vmem>>, %arg6: memref<8x128xf32, #tpu.memory_space<vmem>>) attributes {dimension_semantics = [#tpu.dimension_semantics<parallel>], iteration_bounds = array<i64: 1>, scalar_prefetch = 0 : i64, scratch_operands = 0 : i64, tpu.core_type = #tpu.core_type<tc>, window_params = [{transform_indices = @transform_0, window_bounds = array<i64: 32, 288>}, {pipeline_mode = #tpu.pipeline_mode<synchronous>, transform_indices = @transform_1, window_bounds = array<i64: 288, 128>}, {pipeline_mode = #tpu.pipeline_mode<synchronous>, transform_indices = @transform_2, window_bounds = array<i64: 1, 128>}, {transform_indices = @transform_3, window_bounds = array<i64: 32, 128>}, {transform_indices = @transform_4, window_bounds = array<i64: 8, 128>}, {transform_indices = @transform_5, window_bounds = array<i64: 8, 128>}]} {
    %c0 = arith.constant 0 : index
    %c0_0 = arith.constant 0 : index
    %0 = vector.load %arg1[%c0, %c0_0] : memref<32x288xbf16, #tpu.memory_space<vmem>>, vector<32x288xbf16>
    %c0_1 = arith.constant 0 : index
    %c0_2 = arith.constant 0 : index
    %1 = vector.load %arg2[%c0_1, %c0_2] : memref<288x128xbf16, #tpu.memory_space<vmem>>, vector<288x128xbf16>
    %cst = arith.constant dense<0.000000e+00> : vector<32x128xf32>
    %2 = tpu.matmul %0, %1, %cst {dimension_numbers = #tpu.dot_dimension_numbers<[1], [0], [0], [1], [0, 0, 1, 1], [], []>} : vector<32x288xbf16>, vector<288x128xbf16>, vector<32x128xf32> -> vector<32x128xf32>
    %c0_3 = arith.constant 0 : index
    %c0_4 = arith.constant 0 : index
    %3 = vector.load %arg3[%c0_3, %c0_4] : memref<1x128xf32, #tpu.memory_space<vmem>>, vector<1x128xf32>
    %4 = vector.broadcast %3 : vector<1x128xf32> to vector<32x128xf32>
    %5 = arith.addf %2, %4 : vector<32x128xf32>
    %cst_5 = arith.constant 0.000000e+00 : f32
    %6 = vector.broadcast %cst_5 : f32 to vector<32x128xf32>
    %7 = arith.maximumf %5, %6 : vector<32x128xf32>
    %8 = arith.truncf %7 : vector<32x128xf32> to vector<32x128xbf16>
    %c0_6 = arith.constant 0 : index
    %c0_7 = arith.constant 0 : index
    %9 = vector.load %arg4[%c0_6, %c0_7] : memref<32x128xbf16, #tpu.memory_space<vmem>>, vector<32x128xbf16>
    tpu.vector_store %arg4[%c0_6, %c0_7], %8 {strides = array<i32>} : memref<32x128xbf16, #tpu.memory_space<vmem>>, vector<32x128xbf16>,
    %cst_8 = arith.constant dense<0.000000e+00> : vector<128xf32>
    %10 = vector.multi_reduction <add>, %7, %cst_8 [0] : vector<32x128xf32> to vector<128xf32>
    %11 = vector.shape_cast %10 : vector<128xf32> to vector<1x128xf32>
    %12 = arith.mulf %7, %7 : vector<32x128xf32>
    %cst_9 = arith.constant dense<0.000000e+00> : vector<128xf32>
    %13 = vector.multi_reduction <add>, %12, %cst_9 [0] : vector<32x128xf32> to vector<128xf32>
    %14 = vector.shape_cast %13 : vector<128xf32> to vector<1x128xf32>
    %15 = vector.shape_cast %11 : vector<1x128xf32> to vector<1x128xf32>
    %16 = vector.broadcast %15 : vector<1x128xf32> to vector<8x128xf32>
    %c0_10 = arith.constant 0 : index
    %c0_11 = arith.constant 0 : index
    %17 = vector.load %arg5[%c0_10, %c0_11] : memref<8x128xf32, #tpu.memory_space<vmem>>, vector<8x128xf32>
    tpu.vector_store %arg5[%c0_10, %c0_11], %16 {strides = array<i32>} : memref<8x128xf32, #tpu.memory_space<vmem>>, vector<8x128xf32>,
    %18 = vector.shape_cast %14 : vector<1x128xf32> to vector<1x128xf32>
    %19 = vector.broadcast %18 : vector<1x128xf32> to vector<8x128xf32>
    %c0_12 = arith.constant 0 : index
    %c0_13 = arith.constant 0 : index
    %20 = vector.load %arg6[%c0_12, %c0_13] : memref<8x128xf32, #tpu.memory_space<vmem>>, vector<8x128xf32>
    tpu.vector_store %arg6[%c0_12, %c0_13], %19 {strides = array<i32>} : memref<8x128xf32, #tpu.memory_space<vmem>>, vector<8x128xf32>,
    return
  }
  func.func @transform_0(%arg0: i32) -> (i32, i32) {
    %c0_i32 = arith.constant 0 : i32
    %c0_i32_0 = arith.constant 0 : i32
    return %arg0, %c0_i32 : i32, i32
  }
  func.func @transform_1(%arg0: i32) -> (i32, i32) {
    %c0_i32 = arith.constant 0 : i32
    %c0_i32_0 = arith.constant 0 : i32
    %c0_i32_1 = arith.constant 0 : i32
    return %c0_i32, %c0_i32_0 : i32, i32
  }
  func.func @transform_2(%arg0: i32) -> (i32, i32) {
    %c0_i32 = arith.constant 0 : i32
    %c0_i32_0 = arith.constant 0 : i32
    %c0_i32_1 = arith.constant 0 : i32
    return %c0_i32, %c0_i32_0 : i32, i32
  }
  func.func @transform_3(%arg0: i32) -> (i32, i32) {
    %c0_i32 = arith.constant 0 : i32
    %c0_i32_0 = arith.constant 0 : i32
    return %arg0, %c0_i32 : i32, i32
  }
  func.func @transform_4(%arg0: i32) -> (i32, i32) {
    %c0_i32 = arith.constant 0 : i32
    %c0_i32_0 = arith.constant 0 : i32
    return %arg0, %c0_i32 : i32, i32
  }
  func.func @transform_5(%arg0: i32) -> (i32, i32) {
    %c0_i32 = arith.constant 0 : i32
    %c0_i32_0 = arith.constant 0 : i32
    return %arg0, %c0_i32 : i32, i32
  }
}

module attributes {stable_mosaic.version = 11 : i64} {
  func.func @_matmul_bias_stats_kernel(%arg0: i32, %arg1: memref<16x576xbf16, #tpu.memory_space<vmem>>, %arg2: memref<576x128xbf16, #tpu.memory_space<vmem>>, %arg3: memref<1x128xf32, #tpu.memory_space<vmem>>, %arg4: memref<16x128xbf16, #tpu.memory_space<vmem>>, %arg5: memref<8x128xf32, #tpu.memory_space<vmem>>, %arg6: memref<8x128xf32, #tpu.memory_space<vmem>>) attributes {dimension_semantics = [#tpu.dimension_semantics<parallel>], iteration_bounds = array<i64: 1>, scalar_prefetch = 0 : i64, scratch_operands = 0 : i64, tpu.core_type = #tpu.core_type<tc>, window_params = [{transform_indices = @transform_0, window_bounds = array<i64: 16, 576>}, {pipeline_mode = #tpu.pipeline_mode<synchronous>, transform_indices = @transform_1, window_bounds = array<i64: 576, 128>}, {pipeline_mode = #tpu.pipeline_mode<synchronous>, transform_indices = @transform_2, window_bounds = array<i64: 1, 128>}, {transform_indices = @transform_3, window_bounds = array<i64: 16, 128>}, {transform_indices = @transform_4, window_bounds = array<i64: 8, 128>}, {transform_indices = @transform_5, window_bounds = array<i64: 8, 128>}]} {
    %c0 = arith.constant 0 : index
    %c0_0 = arith.constant 0 : index
    %0 = vector.load %arg1[%c0, %c0_0] : memref<16x576xbf16, #tpu.memory_space<vmem>>, vector<16x576xbf16>
    %c0_1 = arith.constant 0 : index
    %c0_2 = arith.constant 0 : index
    %1 = vector.load %arg2[%c0_1, %c0_2] : memref<576x128xbf16, #tpu.memory_space<vmem>>, vector<576x128xbf16>
    %cst = arith.constant dense<0.000000e+00> : vector<16x128xf32>
    %2 = tpu.matmul %0, %1, %cst {dimension_numbers = #tpu.dot_dimension_numbers<[1], [0], [0], [1], [0, 0, 1, 1], [], []>} : vector<16x576xbf16>, vector<576x128xbf16>, vector<16x128xf32> -> vector<16x128xf32>
    %c0_3 = arith.constant 0 : index
    %c0_4 = arith.constant 0 : index
    %3 = vector.load %arg3[%c0_3, %c0_4] : memref<1x128xf32, #tpu.memory_space<vmem>>, vector<1x128xf32>
    %4 = vector.broadcast %3 : vector<1x128xf32> to vector<16x128xf32>
    %5 = arith.addf %2, %4 : vector<16x128xf32>
    %cst_5 = arith.constant 0.000000e+00 : f32
    %6 = vector.broadcast %cst_5 : f32 to vector<16x128xf32>
    %7 = arith.maximumf %5, %6 : vector<16x128xf32>
    %8 = arith.truncf %7 : vector<16x128xf32> to vector<16x128xbf16>
    %c0_6 = arith.constant 0 : index
    %c0_7 = arith.constant 0 : index
    %9 = vector.load %arg4[%c0_6, %c0_7] : memref<16x128xbf16, #tpu.memory_space<vmem>>, vector<16x128xbf16>
    tpu.vector_store %arg4[%c0_6, %c0_7], %8 {strides = array<i32>} : memref<16x128xbf16, #tpu.memory_space<vmem>>, vector<16x128xbf16>,
    %cst_8 = arith.constant dense<0.000000e+00> : vector<128xf32>
    %10 = vector.multi_reduction <add>, %7, %cst_8 [0] : vector<16x128xf32> to vector<128xf32>
    %11 = vector.shape_cast %10 : vector<128xf32> to vector<1x128xf32>
    %12 = arith.mulf %7, %7 : vector<16x128xf32>
    %cst_9 = arith.constant dense<0.000000e+00> : vector<128xf32>
    %13 = vector.multi_reduction <add>, %12, %cst_9 [0] : vector<16x128xf32> to vector<128xf32>
    %14 = vector.shape_cast %13 : vector<128xf32> to vector<1x128xf32>
    %15 = vector.shape_cast %11 : vector<1x128xf32> to vector<1x128xf32>
    %16 = vector.broadcast %15 : vector<1x128xf32> to vector<8x128xf32>
    %c0_10 = arith.constant 0 : index
    %c0_11 = arith.constant 0 : index
    %17 = vector.load %arg5[%c0_10, %c0_11] : memref<8x128xf32, #tpu.memory_space<vmem>>, vector<8x128xf32>
    tpu.vector_store %arg5[%c0_10, %c0_11], %16 {strides = array<i32>} : memref<8x128xf32, #tpu.memory_space<vmem>>, vector<8x128xf32>,
    %18 = vector.shape_cast %14 : vector<1x128xf32> to vector<1x128xf32>
    %19 = vector.broadcast %18 : vector<1x128xf32> to vector<8x128xf32>
    %c0_12 = arith.constant 0 : index
    %c0_13 = arith.constant 0 : index
    %20 = vector.load %arg6[%c0_12, %c0_13] : memref<8x128xf32, #tpu.memory_space<vmem>>, vector<8x128xf32>
    tpu.vector_store %arg6[%c0_12, %c0_13], %19 {strides = array<i32>} : memref<8x128xf32, #tpu.memory_space<vmem>>, vector<8x128xf32>,
    return
  }
  func.func @transform_0(%arg0: i32) -> (i32, i32) {
    %c0_i32 = arith.constant 0 : i32
    %c0_i32_0 = arith.constant 0 : i32
    return %arg0, %c0_i32 : i32, i32
  }
  func.func @transform_1(%arg0: i32) -> (i32, i32) {
    %c0_i32 = arith.constant 0 : i32
    %c0_i32_0 = arith.constant 0 : i32
    %c0_i32_1 = arith.constant 0 : i32
    return %c0_i32, %c0_i32_0 : i32, i32
  }
  func.func @transform_2(%arg0: i32) -> (i32, i32) {
    %c0_i32 = arith.constant 0 : i32
    %c0_i32_0 = arith.constant 0 : i32
    %c0_i32_1 = arith.constant 0 : i32
    return %c0_i32, %c0_i32_0 : i32, i32
  }
  func.func @transform_3(%arg0: i32) -> (i32, i32) {
    %c0_i32 = arith.constant 0 : i32
    %c0_i32_0 = arith.constant 0 : i32
    return %arg0, %c0_i32 : i32, i32
  }
  func.func @transform_4(%arg0: i32) -> (i32, i32) {
    %c0_i32 = arith.constant 0 : i32
    %c0_i32_0 = arith.constant 0 : i32
    return %arg0, %c0_i32 : i32, i32
  }
  func.func @transform_5(%arg0: i32) -> (i32, i32) {
    %c0_i32 = arith.constant 0 : i32
    %c0_i32_0 = arith.constant 0 : i32
    return %arg0, %c0_i32 : i32, i32
  }
}

module attributes {stable_mosaic.version = 11 : i64} {
  func.func @_matmul_bias_stats_kernel(%arg0: i32, %arg1: memref<16x1152xbf16, #tpu.memory_space<vmem>>, %arg2: memref<1152x256xbf16, #tpu.memory_space<vmem>>, %arg3: memref<1x256xf32, #tpu.memory_space<vmem>>, %arg4: memref<16x256xbf16, #tpu.memory_space<vmem>>, %arg5: memref<8x256xf32, #tpu.memory_space<vmem>>, %arg6: memref<8x256xf32, #tpu.memory_space<vmem>>) attributes {dimension_semantics = [#tpu.dimension_semantics<parallel>], iteration_bounds = array<i64: 1>, scalar_prefetch = 0 : i64, scratch_operands = 0 : i64, tpu.core_type = #tpu.core_type<tc>, window_params = [{transform_indices = @transform_0, window_bounds = array<i64: 16, 1152>}, {pipeline_mode = #tpu.pipeline_mode<synchronous>, transform_indices = @transform_1, window_bounds = array<i64: 1152, 256>}, {pipeline_mode = #tpu.pipeline_mode<synchronous>, transform_indices = @transform_2, window_bounds = array<i64: 1, 256>}, {transform_indices = @transform_3, window_bounds = array<i64: 16, 256>}, {transform_indices = @transform_4, window_bounds = array<i64: 8, 256>}, {transform_indices = @transform_5, window_bounds = array<i64: 8, 256>}]} {
    %c0 = arith.constant 0 : index
    %c0_0 = arith.constant 0 : index
    %0 = vector.load %arg1[%c0, %c0_0] : memref<16x1152xbf16, #tpu.memory_space<vmem>>, vector<16x1152xbf16>
    %c0_1 = arith.constant 0 : index
    %c0_2 = arith.constant 0 : index
    %1 = vector.load %arg2[%c0_1, %c0_2] : memref<1152x256xbf16, #tpu.memory_space<vmem>>, vector<1152x256xbf16>
    %cst = arith.constant dense<0.000000e+00> : vector<16x256xf32>
    %2 = tpu.matmul %0, %1, %cst {dimension_numbers = #tpu.dot_dimension_numbers<[1], [0], [0], [1], [0, 0, 1, 1], [], []>} : vector<16x1152xbf16>, vector<1152x256xbf16>, vector<16x256xf32> -> vector<16x256xf32>
    %c0_3 = arith.constant 0 : index
    %c0_4 = arith.constant 0 : index
    %3 = vector.load %arg3[%c0_3, %c0_4] : memref<1x256xf32, #tpu.memory_space<vmem>>, vector<1x256xf32>
    %4 = vector.broadcast %3 : vector<1x256xf32> to vector<16x256xf32>
    %5 = arith.addf %2, %4 : vector<16x256xf32>
    %cst_5 = arith.constant 0.000000e+00 : f32
    %6 = vector.broadcast %cst_5 : f32 to vector<16x256xf32>
    %7 = arith.maximumf %5, %6 : vector<16x256xf32>
    %8 = arith.truncf %7 : vector<16x256xf32> to vector<16x256xbf16>
    %c0_6 = arith.constant 0 : index
    %c0_7 = arith.constant 0 : index
    %9 = vector.load %arg4[%c0_6, %c0_7] : memref<16x256xbf16, #tpu.memory_space<vmem>>, vector<16x256xbf16>
    tpu.vector_store %arg4[%c0_6, %c0_7], %8 {strides = array<i32>} : memref<16x256xbf16, #tpu.memory_space<vmem>>, vector<16x256xbf16>,
    %cst_8 = arith.constant dense<0.000000e+00> : vector<256xf32>
    %10 = vector.multi_reduction <add>, %7, %cst_8 [0] : vector<16x256xf32> to vector<256xf32>
    %11 = vector.shape_cast %10 : vector<256xf32> to vector<1x256xf32>
    %12 = arith.mulf %7, %7 : vector<16x256xf32>
    %cst_9 = arith.constant dense<0.000000e+00> : vector<256xf32>
    %13 = vector.multi_reduction <add>, %12, %cst_9 [0] : vector<16x256xf32> to vector<256xf32>
    %14 = vector.shape_cast %13 : vector<256xf32> to vector<1x256xf32>
    %15 = vector.shape_cast %11 : vector<1x256xf32> to vector<1x256xf32>
    %16 = vector.broadcast %15 : vector<1x256xf32> to vector<8x256xf32>
    %c0_10 = arith.constant 0 : index
    %c0_11 = arith.constant 0 : index
    %17 = vector.load %arg5[%c0_10, %c0_11] : memref<8x256xf32, #tpu.memory_space<vmem>>, vector<8x256xf32>
    tpu.vector_store %arg5[%c0_10, %c0_11], %16 {strides = array<i32>} : memref<8x256xf32, #tpu.memory_space<vmem>>, vector<8x256xf32>,
    %18 = vector.shape_cast %14 : vector<1x256xf32> to vector<1x256xf32>
    %19 = vector.broadcast %18 : vector<1x256xf32> to vector<8x256xf32>
    %c0_12 = arith.constant 0 : index
    %c0_13 = arith.constant 0 : index
    %20 = vector.load %arg6[%c0_12, %c0_13] : memref<8x256xf32, #tpu.memory_space<vmem>>, vector<8x256xf32>
    tpu.vector_store %arg6[%c0_12, %c0_13], %19 {strides = array<i32>} : memref<8x256xf32, #tpu.memory_space<vmem>>, vector<8x256xf32>,
    return
  }
  func.func @transform_0(%arg0: i32) -> (i32, i32) {
    %c0_i32 = arith.constant 0 : i32
    %c0_i32_0 = arith.constant 0 : i32
    return %arg0, %c0_i32 : i32, i32
  }
  func.func @transform_1(%arg0: i32) -> (i32, i32) {
    %c0_i32 = arith.constant 0 : i32
    %c0_i32_0 = arith.constant 0 : i32
    %c0_i32_1 = arith.constant 0 : i32
    return %c0_i32, %c0_i32_0 : i32, i32
  }
  func.func @transform_2(%arg0: i32) -> (i32, i32) {
    %c0_i32 = arith.constant 0 : i32
    %c0_i32_0 = arith.constant 0 : i32
    %c0_i32_1 = arith.constant 0 : i32
    return %c0_i32, %c0_i32_0 : i32, i32
  }
  func.func @transform_3(%arg0: i32) -> (i32, i32) {
    %c0_i32 = arith.constant 0 : i32
    %c0_i32_0 = arith.constant 0 : i32
    return %arg0, %c0_i32 : i32, i32
  }
  func.func @transform_4(%arg0: i32) -> (i32, i32) {
    %c0_i32 = arith.constant 0 : i32
    %c0_i32_0 = arith.constant 0 : i32
    return %arg0, %c0_i32 : i32, i32
  }
  func.func @transform_5(%arg0: i32) -> (i32, i32) {
    %c0_i32 = arith.constant 0 : i32
    %c0_i32_0 = arith.constant 0 : i32
    return %arg0, %c0_i32 : i32, i32
  }
}

module attributes {stable_mosaic.version = 11 : i64} {
  func.func @_matmul_bias_stats_kernel(%arg0: i32, %arg1: memref<16x1024xbf16, #tpu.memory_space<vmem>>, %arg2: memref<1024x512xbf16, #tpu.memory_space<vmem>>, %arg3: memref<1x512xf32, #tpu.memory_space<vmem>>, %arg4: memref<16x512xbf16, #tpu.memory_space<vmem>>, %arg5: memref<8x512xf32, #tpu.memory_space<vmem>>, %arg6: memref<8x512xf32, #tpu.memory_space<vmem>>) attributes {dimension_semantics = [#tpu.dimension_semantics<parallel>], iteration_bounds = array<i64: 1>, scalar_prefetch = 0 : i64, scratch_operands = 0 : i64, tpu.core_type = #tpu.core_type<tc>, window_params = [{transform_indices = @transform_0, window_bounds = array<i64: 16, 1024>}, {pipeline_mode = #tpu.pipeline_mode<synchronous>, transform_indices = @transform_1, window_bounds = array<i64: 1024, 512>}, {pipeline_mode = #tpu.pipeline_mode<synchronous>, transform_indices = @transform_2, window_bounds = array<i64: 1, 512>}, {transform_indices = @transform_3, window_bounds = array<i64: 16, 512>}, {transform_indices = @transform_4, window_bounds = array<i64: 8, 512>}, {transform_indices = @transform_5, window_bounds = array<i64: 8, 512>}]} {
    %c0 = arith.constant 0 : index
    %c0_0 = arith.constant 0 : index
    %0 = vector.load %arg1[%c0, %c0_0] : memref<16x1024xbf16, #tpu.memory_space<vmem>>, vector<16x1024xbf16>
    %c0_1 = arith.constant 0 : index
    %c0_2 = arith.constant 0 : index
    %1 = vector.load %arg2[%c0_1, %c0_2] : memref<1024x512xbf16, #tpu.memory_space<vmem>>, vector<1024x512xbf16>
    %cst = arith.constant dense<0.000000e+00> : vector<16x512xf32>
    %2 = tpu.matmul %0, %1, %cst {dimension_numbers = #tpu.dot_dimension_numbers<[1], [0], [0], [1], [0, 0, 1, 1], [], []>} : vector<16x1024xbf16>, vector<1024x512xbf16>, vector<16x512xf32> -> vector<16x512xf32>
    %c0_3 = arith.constant 0 : index
    %c0_4 = arith.constant 0 : index
    %3 = vector.load %arg3[%c0_3, %c0_4] : memref<1x512xf32, #tpu.memory_space<vmem>>, vector<1x512xf32>
    %4 = vector.broadcast %3 : vector<1x512xf32> to vector<16x512xf32>
    %5 = arith.addf %2, %4 : vector<16x512xf32>
    %cst_5 = arith.constant 0.000000e+00 : f32
    %6 = vector.broadcast %cst_5 : f32 to vector<16x512xf32>
    %7 = arith.maximumf %5, %6 : vector<16x512xf32>
    %8 = arith.truncf %7 : vector<16x512xf32> to vector<16x512xbf16>
    %c0_6 = arith.constant 0 : index
    %c0_7 = arith.constant 0 : index
    %9 = vector.load %arg4[%c0_6, %c0_7] : memref<16x512xbf16, #tpu.memory_space<vmem>>, vector<16x512xbf16>
    tpu.vector_store %arg4[%c0_6, %c0_7], %8 {strides = array<i32>} : memref<16x512xbf16, #tpu.memory_space<vmem>>, vector<16x512xbf16>,
    %cst_8 = arith.constant dense<0.000000e+00> : vector<512xf32>
    %10 = vector.multi_reduction <add>, %7, %cst_8 [0] : vector<16x512xf32> to vector<512xf32>
    %11 = vector.shape_cast %10 : vector<512xf32> to vector<1x512xf32>
    %12 = arith.mulf %7, %7 : vector<16x512xf32>
    %cst_9 = arith.constant dense<0.000000e+00> : vector<512xf32>
    %13 = vector.multi_reduction <add>, %12, %cst_9 [0] : vector<16x512xf32> to vector<512xf32>
    %14 = vector.shape_cast %13 : vector<512xf32> to vector<1x512xf32>
    %15 = vector.shape_cast %11 : vector<1x512xf32> to vector<1x512xf32>
    %16 = vector.broadcast %15 : vector<1x512xf32> to vector<8x512xf32>
    %c0_10 = arith.constant 0 : index
    %c0_11 = arith.constant 0 : index
    %17 = vector.load %arg5[%c0_10, %c0_11] : memref<8x512xf32, #tpu.memory_space<vmem>>, vector<8x512xf32>
    tpu.vector_store %arg5[%c0_10, %c0_11], %16 {strides = array<i32>} : memref<8x512xf32, #tpu.memory_space<vmem>>, vector<8x512xf32>,
    %18 = vector.shape_cast %14 : vector<1x512xf32> to vector<1x512xf32>
    %19 = vector.broadcast %18 : vector<1x512xf32> to vector<8x512xf32>
    %c0_12 = arith.constant 0 : index
    %c0_13 = arith.constant 0 : index
    %20 = vector.load %arg6[%c0_12, %c0_13] : memref<8x512xf32, #tpu.memory_space<vmem>>, vector<8x512xf32>
    tpu.vector_store %arg6[%c0_12, %c0_13], %19 {strides = array<i32>} : memref<8x512xf32, #tpu.memory_space<vmem>>, vector<8x512xf32>,
    return
  }
  func.func @transform_0(%arg0: i32) -> (i32, i32) {
    %c0_i32 = arith.constant 0 : i32
    %c0_i32_0 = arith.constant 0 : i32
    return %arg0, %c0_i32 : i32, i32
  }
  func.func @transform_1(%arg0: i32) -> (i32, i32) {
    %c0_i32 = arith.constant 0 : i32
    %c0_i32_0 = arith.constant 0 : i32
    %c0_i32_1 = arith.constant 0 : i32
    return %c0_i32, %c0_i32_0 : i32, i32
  }
  func.func @transform_2(%arg0: i32) -> (i32, i32) {
    %c0_i32 = arith.constant 0 : i32
    %c0_i32_0 = arith.constant 0 : i32
    %c0_i32_1 = arith.constant 0 : i32
    return %c0_i32, %c0_i32_0 : i32, i32
  }
  func.func @transform_3(%arg0: i32) -> (i32, i32) {
    %c0_i32 = arith.constant 0 : i32
    %c0_i32_0 = arith.constant 0 : i32
    return %arg0, %c0_i32 : i32, i32
  }
  func.func @transform_4(%arg0: i32) -> (i32, i32) {
    %c0_i32 = arith.constant 0 : i32
    %c0_i32_0 = arith.constant 0 : i32
    return %arg0, %c0_i32 : i32, i32
  }
  func.func @transform_5(%arg0: i32) -> (i32, i32) {
    %c0_i32 = arith.constant 0 : i32
    %c0_i32_0 = arith.constant 0 : i32
    return %arg0, %c0_i32 : i32, i32
  }
}

module attributes {stable_mosaic.version = 11 : i64} {
  func.func @_matmul_bias_stats_kernel(%arg0: i32, %arg1: memref<16x512xbf16, #tpu.memory_space<vmem>>, %arg2: memref<512x256xbf16, #tpu.memory_space<vmem>>, %arg3: memref<1x256xf32, #tpu.memory_space<vmem>>, %arg4: memref<16x256xbf16, #tpu.memory_space<vmem>>, %arg5: memref<8x256xf32, #tpu.memory_space<vmem>>, %arg6: memref<8x256xf32, #tpu.memory_space<vmem>>) attributes {dimension_semantics = [#tpu.dimension_semantics<parallel>], iteration_bounds = array<i64: 1>, scalar_prefetch = 0 : i64, scratch_operands = 0 : i64, tpu.core_type = #tpu.core_type<tc>, window_params = [{transform_indices = @transform_0, window_bounds = array<i64: 16, 512>}, {pipeline_mode = #tpu.pipeline_mode<synchronous>, transform_indices = @transform_1, window_bounds = array<i64: 512, 256>}, {pipeline_mode = #tpu.pipeline_mode<synchronous>, transform_indices = @transform_2, window_bounds = array<i64: 1, 256>}, {transform_indices = @transform_3, window_bounds = array<i64: 16, 256>}, {transform_indices = @transform_4, window_bounds = array<i64: 8, 256>}, {transform_indices = @transform_5, window_bounds = array<i64: 8, 256>}]} {
    %c0 = arith.constant 0 : index
    %c0_0 = arith.constant 0 : index
    %0 = vector.load %arg1[%c0, %c0_0] : memref<16x512xbf16, #tpu.memory_space<vmem>>, vector<16x512xbf16>
    %c0_1 = arith.constant 0 : index
    %c0_2 = arith.constant 0 : index
    %1 = vector.load %arg2[%c0_1, %c0_2] : memref<512x256xbf16, #tpu.memory_space<vmem>>, vector<512x256xbf16>
    %cst = arith.constant dense<0.000000e+00> : vector<16x256xf32>
    %2 = tpu.matmul %0, %1, %cst {dimension_numbers = #tpu.dot_dimension_numbers<[1], [0], [0], [1], [0, 0, 1, 1], [], []>} : vector<16x512xbf16>, vector<512x256xbf16>, vector<16x256xf32> -> vector<16x256xf32>
    %c0_3 = arith.constant 0 : index
    %c0_4 = arith.constant 0 : index
    %3 = vector.load %arg3[%c0_3, %c0_4] : memref<1x256xf32, #tpu.memory_space<vmem>>, vector<1x256xf32>
    %4 = vector.broadcast %3 : vector<1x256xf32> to vector<16x256xf32>
    %5 = arith.addf %2, %4 : vector<16x256xf32>
    %cst_5 = arith.constant 0.000000e+00 : f32
    %6 = vector.broadcast %cst_5 : f32 to vector<16x256xf32>
    %7 = arith.maximumf %5, %6 : vector<16x256xf32>
    %8 = arith.truncf %7 : vector<16x256xf32> to vector<16x256xbf16>
    %c0_6 = arith.constant 0 : index
    %c0_7 = arith.constant 0 : index
    %9 = vector.load %arg4[%c0_6, %c0_7] : memref<16x256xbf16, #tpu.memory_space<vmem>>, vector<16x256xbf16>
    tpu.vector_store %arg4[%c0_6, %c0_7], %8 {strides = array<i32>} : memref<16x256xbf16, #tpu.memory_space<vmem>>, vector<16x256xbf16>,
    %cst_8 = arith.constant dense<0.000000e+00> : vector<256xf32>
    %10 = vector.multi_reduction <add>, %7, %cst_8 [0] : vector<16x256xf32> to vector<256xf32>
    %11 = vector.shape_cast %10 : vector<256xf32> to vector<1x256xf32>
    %12 = arith.mulf %7, %7 : vector<16x256xf32>
    %cst_9 = arith.constant dense<0.000000e+00> : vector<256xf32>
    %13 = vector.multi_reduction <add>, %12, %cst_9 [0] : vector<16x256xf32> to vector<256xf32>
    %14 = vector.shape_cast %13 : vector<256xf32> to vector<1x256xf32>
    %15 = vector.shape_cast %11 : vector<1x256xf32> to vector<1x256xf32>
    %16 = vector.broadcast %15 : vector<1x256xf32> to vector<8x256xf32>
    %c0_10 = arith.constant 0 : index
    %c0_11 = arith.constant 0 : index
    %17 = vector.load %arg5[%c0_10, %c0_11] : memref<8x256xf32, #tpu.memory_space<vmem>>, vector<8x256xf32>
    tpu.vector_store %arg5[%c0_10, %c0_11], %16 {strides = array<i32>} : memref<8x256xf32, #tpu.memory_space<vmem>>, vector<8x256xf32>,
    %18 = vector.shape_cast %14 : vector<1x256xf32> to vector<1x256xf32>
    %19 = vector.broadcast %18 : vector<1x256xf32> to vector<8x256xf32>
    %c0_12 = arith.constant 0 : index
    %c0_13 = arith.constant 0 : index
    %20 = vector.load %arg6[%c0_12, %c0_13] : memref<8x256xf32, #tpu.memory_space<vmem>>, vector<8x256xf32>
    tpu.vector_store %arg6[%c0_12, %c0_13], %19 {strides = array<i32>} : memref<8x256xf32, #tpu.memory_space<vmem>>, vector<8x256xf32>,
    return
  }
  func.func @transform_0(%arg0: i32) -> (i32, i32) {
    %c0_i32 = arith.constant 0 : i32
    %c0_i32_0 = arith.constant 0 : i32
    return %arg0, %c0_i32 : i32, i32
  }
  func.func @transform_1(%arg0: i32) -> (i32, i32) {
    %c0_i32 = arith.constant 0 : i32
    %c0_i32_0 = arith.constant 0 : i32
    %c0_i32_1 = arith.constant 0 : i32
    return %c0_i32, %c0_i32_0 : i32, i32
  }
  func.func @transform_2(%arg0: i32) -> (i32, i32) {
    %c0_i32 = arith.constant 0 : i32
    %c0_i32_0 = arith.constant 0 : i32
    %c0_i32_1 = arith.constant 0 : i32
    return %c0_i32, %c0_i32_0 : i32, i32
  }
  func.func @transform_3(%arg0: i32) -> (i32, i32) {
    %c0_i32 = arith.constant 0 : i32
    %c0_i32_0 = arith.constant 0 : i32
    return %arg0, %c0_i32 : i32, i32
  }
  func.func @transform_4(%arg0: i32) -> (i32, i32) {
    %c0_i32 = arith.constant 0 : i32
    %c0_i32_0 = arith.constant 0 : i32
    return %arg0, %c0_i32 : i32, i32
  }
  func.func @transform_5(%arg0: i32) -> (i32, i32) {
    %c0_i32 = arith.constant 0 : i32
    %c0_i32_0 = arith.constant 0 : i32
    return %arg0, %c0_i32 : i32, i32
  }
}

module attributes {stable_mosaic.version = 11 : i64} {
  func.func @_matmul_bias_stats_kernel(%arg0: i32, %arg1: memref<32x256xbf16, #tpu.memory_space<vmem>>, %arg2: memref<256x128xbf16, #tpu.memory_space<vmem>>, %arg3: memref<1x128xf32, #tpu.memory_space<vmem>>, %arg4: memref<32x128xbf16, #tpu.memory_space<vmem>>, %arg5: memref<8x128xf32, #tpu.memory_space<vmem>>, %arg6: memref<8x128xf32, #tpu.memory_space<vmem>>) attributes {dimension_semantics = [#tpu.dimension_semantics<parallel>], iteration_bounds = array<i64: 1>, scalar_prefetch = 0 : i64, scratch_operands = 0 : i64, tpu.core_type = #tpu.core_type<tc>, window_params = [{transform_indices = @transform_0, window_bounds = array<i64: 32, 256>}, {pipeline_mode = #tpu.pipeline_mode<synchronous>, transform_indices = @transform_1, window_bounds = array<i64: 256, 128>}, {pipeline_mode = #tpu.pipeline_mode<synchronous>, transform_indices = @transform_2, window_bounds = array<i64: 1, 128>}, {transform_indices = @transform_3, window_bounds = array<i64: 32, 128>}, {transform_indices = @transform_4, window_bounds = array<i64: 8, 128>}, {transform_indices = @transform_5, window_bounds = array<i64: 8, 128>}]} {
    %c0 = arith.constant 0 : index
    %c0_0 = arith.constant 0 : index
    %0 = vector.load %arg1[%c0, %c0_0] : memref<32x256xbf16, #tpu.memory_space<vmem>>, vector<32x256xbf16>
    %c0_1 = arith.constant 0 : index
    %c0_2 = arith.constant 0 : index
    %1 = vector.load %arg2[%c0_1, %c0_2] : memref<256x128xbf16, #tpu.memory_space<vmem>>, vector<256x128xbf16>
    %cst = arith.constant dense<0.000000e+00> : vector<32x128xf32>
    %2 = tpu.matmul %0, %1, %cst {dimension_numbers = #tpu.dot_dimension_numbers<[1], [0], [0], [1], [0, 0, 1, 1], [], []>} : vector<32x256xbf16>, vector<256x128xbf16>, vector<32x128xf32> -> vector<32x128xf32>
    %c0_3 = arith.constant 0 : index
    %c0_4 = arith.constant 0 : index
    %3 = vector.load %arg3[%c0_3, %c0_4] : memref<1x128xf32, #tpu.memory_space<vmem>>, vector<1x128xf32>
    %4 = vector.broadcast %3 : vector<1x128xf32> to vector<32x128xf32>
    %5 = arith.addf %2, %4 : vector<32x128xf32>
    %cst_5 = arith.constant 0.000000e+00 : f32
    %6 = vector.broadcast %cst_5 : f32 to vector<32x128xf32>
    %7 = arith.maximumf %5, %6 : vector<32x128xf32>
    %8 = arith.truncf %7 : vector<32x128xf32> to vector<32x128xbf16>
    %c0_6 = arith.constant 0 : index
    %c0_7 = arith.constant 0 : index
    %9 = vector.load %arg4[%c0_6, %c0_7] : memref<32x128xbf16, #tpu.memory_space<vmem>>, vector<32x128xbf16>
    tpu.vector_store %arg4[%c0_6, %c0_7], %8 {strides = array<i32>} : memref<32x128xbf16, #tpu.memory_space<vmem>>, vector<32x128xbf16>,
    %cst_8 = arith.constant dense<0.000000e+00> : vector<128xf32>
    %10 = vector.multi_reduction <add>, %7, %cst_8 [0] : vector<32x128xf32> to vector<128xf32>
    %11 = vector.shape_cast %10 : vector<128xf32> to vector<1x128xf32>
    %12 = arith.mulf %7, %7 : vector<32x128xf32>
    %cst_9 = arith.constant dense<0.000000e+00> : vector<128xf32>
    %13 = vector.multi_reduction <add>, %12, %cst_9 [0] : vector<32x128xf32> to vector<128xf32>
    %14 = vector.shape_cast %13 : vector<128xf32> to vector<1x128xf32>
    %15 = vector.shape_cast %11 : vector<1x128xf32> to vector<1x128xf32>
    %16 = vector.broadcast %15 : vector<1x128xf32> to vector<8x128xf32>
    %c0_10 = arith.constant 0 : index
    %c0_11 = arith.constant 0 : index
    %17 = vector.load %arg5[%c0_10, %c0_11] : memref<8x128xf32, #tpu.memory_space<vmem>>, vector<8x128xf32>
    tpu.vector_store %arg5[%c0_10, %c0_11], %16 {strides = array<i32>} : memref<8x128xf32, #tpu.memory_space<vmem>>, vector<8x128xf32>,
    %18 = vector.shape_cast %14 : vector<1x128xf32> to vector<1x128xf32>
    %19 = vector.broadcast %18 : vector<1x128xf32> to vector<8x128xf32>
    %c0_12 = arith.constant 0 : index
    %c0_13 = arith.constant 0 : index
    %20 = vector.load %arg6[%c0_12, %c0_13] : memref<8x128xf32, #tpu.memory_space<vmem>>, vector<8x128xf32>
    tpu.vector_store %arg6[%c0_12, %c0_13], %19 {strides = array<i32>} : memref<8x128xf32, #tpu.memory_space<vmem>>, vector<8x128xf32>,
    return
  }
  func.func @transform_0(%arg0: i32) -> (i32, i32) {
    %c0_i32 = arith.constant 0 : i32
    %c0_i32_0 = arith.constant 0 : i32
    return %arg0, %c0_i32 : i32, i32
  }
  func.func @transform_1(%arg0: i32) -> (i32, i32) {
    %c0_i32 = arith.constant 0 : i32
    %c0_i32_0 = arith.constant 0 : i32
    %c0_i32_1 = arith.constant 0 : i32
    return %c0_i32, %c0_i32_0 : i32, i32
  }
  func.func @transform_2(%arg0: i32) -> (i32, i32) {
    %c0_i32 = arith.constant 0 : i32
    %c0_i32_0 = arith.constant 0 : i32
    %c0_i32_1 = arith.constant 0 : i32
    return %c0_i32, %c0_i32_0 : i32, i32
  }
  func.func @transform_3(%arg0: i32) -> (i32, i32) {
    %c0_i32 = arith.constant 0 : i32
    %c0_i32_0 = arith.constant 0 : i32
    return %arg0, %c0_i32 : i32, i32
  }
  func.func @transform_4(%arg0: i32) -> (i32, i32) {
    %c0_i32 = arith.constant 0 : i32
    %c0_i32_0 = arith.constant 0 : i32
    return %arg0, %c0_i32 : i32, i32
  }
  func.func @transform_5(%arg0: i32) -> (i32, i32) {
    %c0_i32 = arith.constant 0 : i32
    %c0_i32_0 = arith.constant 0 : i32
    return %arg0, %c0_i32 : i32, i32
  }
}

module attributes {stable_mosaic.version = 11 : i64} {
  func.func @_matmul_bias_stats_kernel(%arg0: i32, %arg1: memref<128x128xbf16, #tpu.memory_space<vmem>>, %arg2: memref<128x128xbf16, #tpu.memory_space<vmem>>, %arg3: memref<1x128xf32, #tpu.memory_space<vmem>>, %arg4: memref<128x128xbf16, #tpu.memory_space<vmem>>, %arg5: memref<8x128xf32, #tpu.memory_space<vmem>>, %arg6: memref<8x128xf32, #tpu.memory_space<vmem>>) attributes {dimension_semantics = [#tpu.dimension_semantics<parallel>], iteration_bounds = array<i64: 1>, scalar_prefetch = 0 : i64, scratch_operands = 0 : i64, tpu.core_type = #tpu.core_type<tc>, window_params = [{transform_indices = @transform_0, window_bounds = array<i64: 128, 128>}, {pipeline_mode = #tpu.pipeline_mode<synchronous>, transform_indices = @transform_1, window_bounds = array<i64: 128, 128>}, {pipeline_mode = #tpu.pipeline_mode<synchronous>, transform_indices = @transform_2, window_bounds = array<i64: 1, 128>}, {transform_indices = @transform_3, window_bounds = array<i64: 128, 128>}, {transform_indices = @transform_4, window_bounds = array<i64: 8, 128>}, {transform_indices = @transform_5, window_bounds = array<i64: 8, 128>}]} {
    %c0 = arith.constant 0 : index
    %c0_0 = arith.constant 0 : index
    %0 = vector.load %arg1[%c0, %c0_0] : memref<128x128xbf16, #tpu.memory_space<vmem>>, vector<128x128xbf16>
    %c0_1 = arith.constant 0 : index
    %c0_2 = arith.constant 0 : index
    %1 = vector.load %arg2[%c0_1, %c0_2] : memref<128x128xbf16, #tpu.memory_space<vmem>>, vector<128x128xbf16>
    %cst = arith.constant dense<0.000000e+00> : vector<128x128xf32>
    %2 = tpu.matmul %0, %1, %cst {dimension_numbers = #tpu.dot_dimension_numbers<[1], [0], [0], [1], [0, 0, 1, 1], [], []>} : vector<128x128xbf16>, vector<128x128xbf16>, vector<128x128xf32> -> vector<128x128xf32>
    %c0_3 = arith.constant 0 : index
    %c0_4 = arith.constant 0 : index
    %3 = vector.load %arg3[%c0_3, %c0_4] : memref<1x128xf32, #tpu.memory_space<vmem>>, vector<1x128xf32>
    %4 = vector.broadcast %3 : vector<1x128xf32> to vector<128x128xf32>
    %5 = arith.addf %2, %4 : vector<128x128xf32>
    %cst_5 = arith.constant 0.000000e+00 : f32
    %6 = vector.broadcast %cst_5 : f32 to vector<128x128xf32>
    %7 = arith.maximumf %5, %6 : vector<128x128xf32>
    %8 = arith.truncf %7 : vector<128x128xf32> to vector<128x128xbf16>
    %c0_6 = arith.constant 0 : index
    %c0_7 = arith.constant 0 : index
    %9 = vector.load %arg4[%c0_6, %c0_7] : memref<128x128xbf16, #tpu.memory_space<vmem>>, vector<128x128xbf16>
    tpu.vector_store %arg4[%c0_6, %c0_7], %8 {strides = array<i32>} : memref<128x128xbf16, #tpu.memory_space<vmem>>, vector<128x128xbf16>,
    %cst_8 = arith.constant dense<0.000000e+00> : vector<128xf32>
    %10 = vector.multi_reduction <add>, %7, %cst_8 [0] : vector<128x128xf32> to vector<128xf32>
    %11 = vector.shape_cast %10 : vector<128xf32> to vector<1x128xf32>
    %12 = arith.mulf %7, %7 : vector<128x128xf32>
    %cst_9 = arith.constant dense<0.000000e+00> : vector<128xf32>
    %13 = vector.multi_reduction <add>, %12, %cst_9 [0] : vector<128x128xf32> to vector<128xf32>
    %14 = vector.shape_cast %13 : vector<128xf32> to vector<1x128xf32>
    %15 = vector.shape_cast %11 : vector<1x128xf32> to vector<1x128xf32>
    %16 = vector.broadcast %15 : vector<1x128xf32> to vector<8x128xf32>
    %c0_10 = arith.constant 0 : index
    %c0_11 = arith.constant 0 : index
    %17 = vector.load %arg5[%c0_10, %c0_11] : memref<8x128xf32, #tpu.memory_space<vmem>>, vector<8x128xf32>
    tpu.vector_store %arg5[%c0_10, %c0_11], %16 {strides = array<i32>} : memref<8x128xf32, #tpu.memory_space<vmem>>, vector<8x128xf32>,
    %18 = vector.shape_cast %14 : vector<1x128xf32> to vector<1x128xf32>
    %19 = vector.broadcast %18 : vector<1x128xf32> to vector<8x128xf32>
    %c0_12 = arith.constant 0 : index
    %c0_13 = arith.constant 0 : index
    %20 = vector.load %arg6[%c0_12, %c0_13] : memref<8x128xf32, #tpu.memory_space<vmem>>, vector<8x128xf32>
    tpu.vector_store %arg6[%c0_12, %c0_13], %19 {strides = array<i32>} : memref<8x128xf32, #tpu.memory_space<vmem>>, vector<8x128xf32>,
    return
  }
  func.func @transform_0(%arg0: i32) -> (i32, i32) {
    %c0_i32 = arith.constant 0 : i32
    %c0_i32_0 = arith.constant 0 : i32
    return %arg0, %c0_i32 : i32, i32
  }
  func.func @transform_1(%arg0: i32) -> (i32, i32) {
    %c0_i32 = arith.constant 0 : i32
    %c0_i32_0 = arith.constant 0 : i32
    %c0_i32_1 = arith.constant 0 : i32
    return %c0_i32, %c0_i32_0 : i32, i32
  }
  func.func @transform_2(%arg0: i32) -> (i32, i32) {
    %c0_i32 = arith.constant 0 : i32
    %c0_i32_0 = arith.constant 0 : i32
    %c0_i32_1 = arith.constant 0 : i32
    return %c0_i32, %c0_i32_0 : i32, i32
  }
  func.func @transform_3(%arg0: i32) -> (i32, i32) {
    %c0_i32 = arith.constant 0 : i32
    %c0_i32_0 = arith.constant 0 : i32
    return %arg0, %c0_i32 : i32, i32
  }
  func.func @transform_4(%arg0: i32) -> (i32, i32) {
    %c0_i32 = arith.constant 0 : i32
    %c0_i32_0 = arith.constant 0 : i32
    return %arg0, %c0_i32 : i32, i32
  }
  func.func @transform_5(%arg0: i32) -> (i32, i32) {
    %c0_i32 = arith.constant 0 : i32
    %c0_i32_0 = arith.constant 0 : i32
    return %arg0, %c0_i32 : i32, i32
  }
}

module attributes {stable_mosaic.version = 11 : i64} {
  func.func @_matmul_bias_kernel(%arg0: i32, %arg1: memref<512x32xbf16, #tpu.memory_space<vmem>>, %arg2: memref<32x128xbf16, #tpu.memory_space<vmem>>, %arg3: memref<1x128xf32, #tpu.memory_space<vmem>>, %arg4: memref<512x128xf32, #tpu.memory_space<vmem>>) attributes {dimension_semantics = [#tpu.dimension_semantics<parallel>], iteration_bounds = array<i64: 1>, scalar_prefetch = 0 : i64, scratch_operands = 0 : i64, tpu.core_type = #tpu.core_type<tc>, window_params = [{transform_indices = @transform_0, window_bounds = array<i64: 512, 32>}, {pipeline_mode = #tpu.pipeline_mode<synchronous>, transform_indices = @transform_1, window_bounds = array<i64: 32, 128>}, {pipeline_mode = #tpu.pipeline_mode<synchronous>, transform_indices = @transform_2, window_bounds = array<i64: 1, 128>}, {transform_indices = @transform_3, window_bounds = array<i64: 512, 128>}]} {
    %c0 = arith.constant 0 : index
    %c0_0 = arith.constant 0 : index
    %0 = vector.load %arg1[%c0, %c0_0] : memref<512x32xbf16, #tpu.memory_space<vmem>>, vector<512x32xbf16>
    %c0_1 = arith.constant 0 : index
    %c0_2 = arith.constant 0 : index
    %1 = vector.load %arg2[%c0_1, %c0_2] : memref<32x128xbf16, #tpu.memory_space<vmem>>, vector<32x128xbf16>
    %cst = arith.constant dense<0.000000e+00> : vector<512x128xf32>
    %2 = tpu.matmul %0, %1, %cst {dimension_numbers = #tpu.dot_dimension_numbers<[1], [0], [0], [1], [0, 0, 1, 1], [], []>} : vector<512x32xbf16>, vector<32x128xbf16>, vector<512x128xf32> -> vector<512x128xf32>
    %c0_3 = arith.constant 0 : index
    %c0_4 = arith.constant 0 : index
    %3 = vector.load %arg3[%c0_3, %c0_4] : memref<1x128xf32, #tpu.memory_space<vmem>>, vector<1x128xf32>
    %4 = vector.broadcast %3 : vector<1x128xf32> to vector<512x128xf32>
    %5 = arith.addf %2, %4 : vector<512x128xf32>
    %c0_5 = arith.constant 0 : index
    %c0_6 = arith.constant 0 : index
    %6 = vector.load %arg4[%c0_5, %c0_6] : memref<512x128xf32, #tpu.memory_space<vmem>>, vector<512x128xf32>
    tpu.vector_store %arg4[%c0_5, %c0_6], %5 {strides = array<i32>} : memref<512x128xf32, #tpu.memory_space<vmem>>, vector<512x128xf32>,
    return
  }
  func.func @transform_0(%arg0: i32) -> (i32, i32) {
    %c0_i32 = arith.constant 0 : i32
    %c0_i32_0 = arith.constant 0 : i32
    return %arg0, %c0_i32 : i32, i32
  }
  func.func @transform_1(%arg0: i32) -> (i32, i32) {
    %c0_i32 = arith.constant 0 : i32
    %c0_i32_0 = arith.constant 0 : i32
    %c0_i32_1 = arith.constant 0 : i32
    return %c0_i32, %c0_i32_0 : i32, i32
  }
  func.func @transform_2(%arg0: i32) -> (i32, i32) {
    %c0_i32 = arith.constant 0 : i32
    %c0_i32_0 = arith.constant 0 : i32
    %c0_i32_1 = arith.constant 0 : i32
    return %c0_i32, %c0_i32_0 : i32, i32
  }
  func.func @transform_3(%arg0: i32) -> (i32, i32) {
    %c0_i32 = arith.constant 0 : i32
    %c0_i32_0 = arith.constant 0 : i32
    return %arg0, %c0_i32 : i32, i32
  }
}

</mosaic_0001>

<llo_original>
// kernel: tile.39
$region0: #{tile.39}
  #allocation0 [shape = 's32[1]{0}', space=sflag, size = 0x4, scoped, tag = 'scoped memory for tile.39']
  %s0 = inlined_call_operand.vmem [shape: f32[32], index: 0, kind: input, shape index: {}]
  %s1 = inlined_call_operand.vmem [shape: f32[9,32], index: 1, kind: output, shape index: {}]
  // Predicated region
  $region2: #{tile.39} parent=0 // pred_check
    _
  $region3: #{tile.39} parent=0 // pred_check_branch
    %3 = sbr.rel (0) target = $region5
  $region4: #{tile.39} parent=0 // pred_region
    _
  $region5: #{tile.39} parent=0 // pred_fallthru
    _
  %v4 = vld [vmem:[%s0] ss:$0 sm:$0xff]
  %5 = vst [vmem:[%s1] sm:$0xff] %v4
  %s6 = scalar_lea.vmem %s1, 8
  %7 = vst [vmem:[%s6] sm:$0xff] %v4

// kernel: mul.42
$region0: #{mul.42}
  %s0 = inlined_call_operand.vmem [shape: f32[9,32], index: 0, kind: input, shape index: {}]
  %s1 = inlined_call_operand.vmem [shape: f32[288], index: 1, kind: output, shape index: {}]
  $region1: #{mul.42} parent=0
    #allocation0 [shape = 'u8[4096]{0}', space=vmem, size = 0x1000, scoped, tag = 'scoped mem for output reshape']
    %v2 = vld [vmem:[%s0] ss:$4 sm:$0x7]
    %vm3 = vcmask 261120
    %4 = vst.msk [vmem:[#allocation0] sm:$0x7] %vm3, %v2
    %s5 = scalar_lea.vmem %s0, 3
    %s6 = smov 3
    %v7 = vld [vmem:[%s5] ss:$4 sm:%s6]
    %8 = vrot.lane.b32.xlu0 %v7, 96
    %v9 = vpop.permute.xlu0 %8
    %vm10 = vcmask 1048320
    %11 = vst.msk [vmem:[#allocation0] sm:$0x3] %vm10, %v9
    %s12 = scalar_lea.vmem %s0, 2
    %s13 = smov 3
    %v14 = vld [vmem:[%s12] ss:$4 sm:%s13]
    %15 = vrot.lane.b32.xlu0 %v14, 64
    %v16 = vpop.permute.xlu0 %15
    %vm17 = vcmask 785920
    %18 = vst.msk [vmem:[#allocation0] sm:$0x3] %vm17, %v16
    %s19 = scalar_lea.vmem %s0, 1
    %s20 = smov 3
    %v21 = vld [vmem:[%s19] ss:$4 sm:%s20]
    %22 = vrot.lane.b32.xlu0 %v21, 32
    %v23 = vpop.permute.xlu0 %22
    %vm24 = vcmask 523520
    %25 = vst.msk [vmem:[#allocation0] sm:$0x3] %vm24, %v23
    %s27 = ssub.s32 16, 1
    %v28 = vld [vmem:[#allocation0] sm:%s27]
    %s30 = ssub.s32 16, 1
    %31 = vst [vmem:[%s1] sm:%s30] %v28

// kernel: _lambda_.9
$region0: #{_lambda_.9}
  #allocation0 [shape = 'u32[]', space=smem, size = 0x4, offset = 0x4, fixed_abs, tag = 'smem constant byte address 0x4 - core index']
  #allocation1 [shape = 'u32[72,128]{1,0:T(1,128)}', space=vmem, size = 0x9000, scoped, tag = 'internal scratch']
  %s0 = inlined_call_operand.vmem [shape: bf16[128,32], index: 0, kind: input, shape index: {}]
  %s1 = inlined_call_operand.hbm [shape: bf16[32,128], index: 1, kind: input, shape index: {}]
  %s2 = inlined_call_operand.hbm [shape: f32[1,128], index: 2, kind: input, shape index: {}]
  %s3 = inlined_call_operand.vmem [shape: bf16[128,128], index: 3, kind: output, shape index: {0}]
  %s4 = inlined_call_operand.vmem [shape: f32[8,128], index: 4, kind: output, shape index: {1}]
  %s5 = inlined_call_operand.vmem [shape: f32[8,128], index: 5, kind: output, shape index: {2}]
  %6 = xla_tuple %s3, %s4, %s5
  %s7 = sld [smem:[#allocation0]]
  $region46: #{_lambda_.9} parent=0
    _
  %s9 = ssub.s32 1, %s7
  %s10 = scalar_select 0, %s9, %s7
  $region1: #{_lambda_.9} parent=0
    #allocation2 [shape = 'u8[8192]{0}', space=vmem, size = 0x2000, scoped, tag = 'input window, operand 1, single buffered']
    #allocation3 [shape = 's32[1]{0}', space=sflag, size = 0x4, scoped, tag = 'scoped memory for _lambda_.9']
    #allocation4 [shape = 'u8[512]{0}', space=vmem, size = 0x400, scoped, tag = 'input window, operand 2, single buffered']
    #allocation5 [shape = 's32[1]{0}', space=sflag, size = 0x4, scoped, tag = 'scoped memory for _lambda_.9']
    %11 = vsyncpa [#allocation3], 0
    %12 = vsyncpa [#allocation5], 0
    // Predicated region
    $region2: #{_lambda_.9} parent=1 // pred_check
      _
    $region3: #{_lambda_.9} parent=1 // pred_check_branch
      %14 = sbr.rel (0) target = $region5
    $region4: #{_lambda_.9} parent=1 // pred_region
      _
    $region5: #{_lambda_.9} parent=1 // pred_fallthru
      _
    // Predicated region
    $region6: #{_lambda_.9} parent=1 // pred_check
      _
    $region7: #{_lambda_.9} parent=1 // pred_check_branch
      %16 = sbr.rel (0) target = $region9
    $region8: #{_lambda_.9} parent=1 // pred_region
      %18 = vsyncadd [#allocation3], 0
      %s19 = sshll.u32 %s1, 4
      %s20 = int_to_ptr.hbm [resolvable:$true] %s19
      %s21 = sshll.u32 [#allocation2], 4
      %s22 = int_to_ptr.vmem [resolvable:$true] %s21
      %27 = dma.hbm_to_vmem [thread:$0]  %s20, 256, %s22, [#allocation3], 64, 64, 4
    $region9: #{_lambda_.9} parent=1 // pred_fallthru
      _
    // Predicated region
    $region10: #{_lambda_.9} parent=1 // pred_check
      _
    $region11: #{_lambda_.9} parent=1 // pred_check_branch
      %29 = sbr.rel (0) target = $region13
    $region12: #{_lambda_.9} parent=1 // pred_region
      %31 = vsyncadd [#allocation5], 0
      %s33 = sshll.u32 %s2, 4
      %s34 = int_to_ptr.hbm [resolvable:$true] %s33
      %s35 = sshll.u32 [#allocation4], 4
      %s36 = int_to_ptr.vmem [resolvable:$true] %s35
      %38 = dma.hbm_to_vmem [thread:$0]  %s34, 16, %s36, [#allocation5]
    $region13: #{_lambda_.9} parent=1 // pred_fallthru
      _
    // Predicated region
    $region14: #{_lambda_.9} parent=1 // pred_check
      _
    $region15: #{_lambda_.9} parent=1 // pred_check_branch
      %40 = sbr.rel (0) target = $region17
    $region16: #{_lambda_.9} parent=1 // pred_region
      %42 = dma.done [#allocation3], 256
    $region17: #{_lambda_.9} parent=1 // pred_fallthru
      _
    // Predicated region
    $region18: #{_lambda_.9} parent=1 // pred_check
      _
    $region19: #{_lambda_.9} parent=1 // pred_check_branch
      %44 = sbr.rel (0) target = $region21
    $region20: #{_lambda_.9} parent=1 // pred_region
      %46 = dma.done [#allocation5], 16
    $region21: #{_lambda_.9} parent=1 // pred_fallthru
      _
    %v48 = vld [vmem:[%s0] sm:$0xf]
    %v49 = vld [vmem:[%s0 + $0x4] sm:$0xf]
    %v50 = vld [vmem:[%s0 + $0x8] sm:$0xf]
    %v51 = vld [vmem:[%s0 + $0xc] sm:$0xf]
    %v52 = vld [vmem:[%s0 + $0x10] sm:$0xf]
    %v53 = vld [vmem:[%s0 + $0x14] sm:$0xf]
    %v54 = vld [vmem:[%s0 + $0x18] sm:$0xf]
    %v55 = vld [vmem:[%s0 + $0x1c] sm:$0xf]
    %v56 = vld [vmem:[%s0 + $0x20] sm:$0xf]
    %v57 = vld [vmem:[%s0 + $0x24] sm:$0xf]
    %v58 = vld [vmem:[%s0 + $0x28] sm:$0xf]
    %v59 = vld [vmem:[%s0 + $0x2c] sm:$0xf]
    %v60 = vld [vmem:[%s0 + $0x30] sm:$0xf]
    %v61 = vld [vmem:[%s0 + $0x34] sm:$0xf]
    %v62 = vld [vmem:[%s0 + $0x38] sm:$0xf]
    %v63 = vld [vmem:[%s0 + $0x3c] sm:$0xf]
    %v64 = vld [vmem:[#allocation2] sm:$0xf]
    %v65 = vld [vmem:[#allocation2 + $0x4] sm:$0xf]
    %v66 = vld [vmem:[#allocation2 + $0x8] sm:$0xf]
    %v67 = vld [vmem:[#allocation2 + $0xc] sm:$0xf]
    %v68 = vld [vmem:[#allocation4] sm:$0x1]
    %v70 = vperm.slane %v68, 0
    %v88 = vunpack.c.l.b16 %v48
    %v89 = vunpack.c.l.b16 %v49
    %v90 = vunpack.c.l.b16 %v50
    %v91 = vunpack.c.l.b16 %v51
    %v92 = vunpack.c.l.b16 %v52
    %v93 = vunpack.c.l.b16 %v53
    %v94 = vunpack.c.l.b16 %v54
    %v95 = vunpack.c.l.b16 %v55
    %v96 = vunpack.c.l.b16 %v56
    %v97 = vunpack.c.l.b16 %v57
    %v98 = vunpack.c.l.b16 %v58
    %v99 = vunpack.c.l.b16 %v59
    %v100 = vunpack.c.l.b16 %v60
    %v101 = vunpack.c.l.b16 %v61
    %v102 = vunpack.c.l.b16 %v62
    %v103 = vunpack.c.l.b16 %v63
    %v104 = vpack.c.b16 %v89, %v88
    %v105 = vpack.c.b16 %v91, %v90
    %v106 = vpack.c.b16 %v93, %v92
    %v107 = vpack.c.b16 %v95, %v94
    %v108 = vpack.c.b16 %v97, %v96
    %v109 = vpack.c.b16 %v99, %v98
    %v110 = vpack.c.b16 %v101, %v100
    %v111 = vpack.c.b16 %v103, %v102
    %v116 = vunpack.c.l.b16 %v64
    %v117 = vunpack.c.l.b16 %v65
    %v118 = vunpack.c.l.b16 %v66
    %v119 = vunpack.c.l.b16 %v67
    %v120 = vpack.c.b16 %v117, %v116
    %v121 = vpack.c.b16 %v119, %v118
    %vm124 = vcmask 261120
    %v126 = vsel %vm124, %v104, 0
    %v129 = vsel %vm124, %v105, 0
    %v132 = vsel %vm124, %v106, 0
    %v135 = vsel %vm124, %v107, 0
    %v138 = vsel %vm124, %v108, 0
    %v141 = vsel %vm124, %v109, 0
    %v144 = vsel %vm124, %v110, 0
    %v147 = vsel %vm124, %v111, 0
    %149 = vmatpush.bf16.msra.mxu0 0
    %150 = vmatpush.bf16.msra.mxu0 0
    %151 = vmatpush.bf16.msra.mxu0 0
    %152 = vmatpush.bf16.msra.mxu0 0
    %153 = vmatpush.bf16.msra.mxu0 0
    %154 = vmatpush.bf16.msra.mxu0 0
    %155 = vmatpush.bf16.msra.mxu0 %v121
    %156 = vmatpush.bf16.msra.mxu0 %v120
    %157 = vmatmul.bf16.gmra.mxu0 %v126
    %v158 = vpop.f32.mrf.mxu0
    %v159 = vadd.f32 %v70, %v158
    %v160 = vpop.f32.mrf.mxu0
    %v161 = vadd.f32 %v70, %v160
    %162 = vmatmul.bf16.gmra.mxu0 %v129
    %v163 = vpop.f32.mrf.mxu0
    %v164 = vadd.f32 %v70, %v163
    %v165 = vpop.f32.mrf.mxu0
    %v166 = vadd.f32 %v70, %v165
    %167 = vmatmul.bf16.gmra.mxu0 %v132
    %v168 = vpop.f32.mrf.mxu0
    %v169 = vadd.f32 %v70, %v168
    %v170 = vpop.f32.mrf.mxu0
    %v171 = vadd.f32 %v70, %v170
    %172 = vmatmul.bf16.gmra.mxu0 %v135
    %v173 = vpop.f32.mrf.mxu0
    %v174 = vadd.f32 %v70, %v173
    %v175 = vpop.f32.mrf.mxu0
    %v176 = vadd.f32 %v70, %v175
    %177 = vmatmul.bf16.gmra.mxu0 %v138
    %v178 = vpop.f32.mrf.mxu0
    %v179 = vadd.f32 %v70, %v178
    %v180 = vpop.f32.mrf.mxu0
    %v181 = vadd.f32 %v70, %v180
    %182 = vmatmul.bf16.gmra.mxu0 %v141
    %v183 = vpop.f32.mrf.mxu0
    %v184 = vadd.f32 %v70, %v183
    %v185 = vpop.f32.mrf.mxu0
    %v186 = vadd.f32 %v70, %v185
    %187 = vmatmul.bf16.gmra.mxu0 %v144
    %v188 = vpop.f32.mrf.mxu0
    %v189 = vadd.f32 %v70, %v188
    %v190 = vpop.f32.mrf.mxu0
    %v191 = vadd.f32 %v70, %v190
    %192 = vmatmul.bf16.gmra.mxu0 %v147
    %v193 = vpop.f32.mrf.mxu0
    %v194 = vadd.f32 %v70, %v193
    %v195 = vpop.f32.mrf.mxu0
    %v196 = vadd.f32 %v70, %v195
    %197 = vdwg.mxu0
    %v198 = vmax.f32 %v159, 0.0
    %v199 = vmax.f32 %v161, 0.0
    %v200 = vmax.f32 %v164, 0.0
    %v201 = vmax.f32 %v166, 0.0
    %v202 = vmax.f32 %v169, 0.0
    %v203 = vmax.f32 %v171, 0.0
    %v204 = vmax.f32 %v174, 0.0
    %v205 = vmax.f32 %v176, 0.0
    %v206 = vmax.f32 %v179, 0.0
    %v207 = vmax.f32 %v181, 0.0
    %v208 = vmax.f32 %v184, 0.0
    %v209 = vmax.f32 %v186, 0.0
    %v210 = vmax.f32 %v189, 0.0
    %v211 = vmax.f32 %v191, 0.0
    %v212 = vmax.f32 %v194, 0.0
    %v213 = vmax.f32 %v196, 0.0
    %v214 = vpack.c.bf16 %v198, %v198
    %v215 = vpack.c.bf16 %v199, %v199
    %v216 = vpack.c.bf16 %v200, %v200
    %v217 = vpack.c.bf16 %v201, %v201
    %v218 = vpack.c.bf16 %v202, %v202
    %v219 = vpack.c.bf16 %v203, %v203
    %v220 = vpack.c.bf16 %v204, %v204
    %v221 = vpack.c.bf16 %v205, %v205
    %v222 = vpack.c.bf16 %v206, %v206
    %v223 = vpack.c.bf16 %v207, %v207
    %v224 = vpack.c.bf16 %v208, %v208
    %v225 = vpack.c.bf16 %v209, %v209
    %v226 = vpack.c.bf16 %v210, %v210
    %v227 = vpack.c.bf16 %v211, %v211
    %v228 = vpack.c.bf16 %v212, %v212
    %v229 = vpack.c.bf16 %v213, %v213
    %230 = vst [vmem:[%s3] sm:$0xf] %v214
    %231 = vst [vmem:[%s3 + $0x4] sm:$0xf] %v215
    %232 = vst [vmem:[%s3 + $0x8] sm:$0xf] %v216
    %233 = vst [vmem:[%s3 + $0xc] sm:$0xf] %v217
    %234 = vst [vmem:[%s3 + $0x10] sm:$0xf] %v218
    %235 = vst [vmem:[%s3 + $0x14] sm:$0xf] %v219
    %236 = vst [vmem:[%s3 + $0x18] sm:$0xf] %v220
    %237 = vst [vmem:[%s3 + $0x1c] sm:$0xf] %v221
    %238 = vst [vmem:[%s3 + $0x20] sm:$0xf] %v222
    %239 = vst [vmem:[%s3 + $0x24] sm:$0xf] %v223
    %240 = vst [vmem:[%s3 + $0x28] sm:$0xf] %v224
    %241 = vst [vmem:[%s3 + $0x2c] sm:$0xf] %v225
    %242 = vst [vmem:[%s3 + $0x30] sm:$0xf] %v226
    %243 = vst [vmem:[%s3 + $0x34] sm:$0xf] %v227
    %244 = vst [vmem:[%s3 + $0x38] sm:$0xf] %v228
    %245 = vst [vmem:[%s3 + $0x3c] sm:$0xf] %v229
    %v246 = vadd.f32 %v198, %v199
    %v247 = vadd.f32 %v246, %v200
    %v248 = vadd.f32 %v247, %v201
    %v249 = vadd.f32 %v248, %v202
    %v250 = vadd.f32 %v249, %v203
    %v251 = vadd.f32 %v250, %v204
    %v252 = vadd.f32 %v251, %v205
    %v253 = vadd.f32 %v252, %v206
    %v254 = vadd.f32 %v253, %v207
    %v255 = vadd.f32 %v254, %v208
    %v256 = vadd.f32 %v255, %v209
    %v257 = vadd.f32 %v256, %v210
    %v258 = vadd.f32 %v257, %v211
    %v259 = vadd.f32 %v258, %v212
    %v260 = vadd.f32 %v259, %v213
    %v261 = vrot.slane %v260, 4
    %v262 = vadd.f32 %v260, %v261
    %v263 = vrot.slane %v262, 2
    %v264 = vadd.f32 %v262, %v263
    %v265 = vrot.slane %v264, 1
    %v266 = vadd.f32 %v264, %v265
    %v267 = vmul.f32 %v198, %v198
    %v268 = vmul.f32 %v199, %v199
    %v269 = vmul.f32 %v200, %v200
    %v270 = vmul.f32 %v201, %v201
    %v271 = vmul.f32 %v202, %v202
    %v272 = vmul.f32 %v203, %v203
    %v273 = vmul.f32 %v204, %v204
    %v274 = vmul.f32 %v205, %v205
    %v275 = vmul.f32 %v206, %v206
    %v276 = vmul.f32 %v207, %v207
    %v277 = vmul.f32 %v208, %v208
    %v278 = vmul.f32 %v209, %v209
    %v279 = vmul.f32 %v210, %v210
    %v280 = vmul.f32 %v211, %v211
    %v281 = vmul.f32 %v212, %v212
    %v282 = vmul.f32 %v213, %v213
    %v283 = vadd.f32 %v267, %v268
    %v284 = vadd.f32 %v283, %v269
    %v285 = vadd.f32 %v284, %v270
    %v286 = vadd.f32 %v285, %v271
    %v287 = vadd.f32 %v286, %v272
    %v288 = vadd.f32 %v287, %v273
    %v289 = vadd.f32 %v288, %v274
    %v290 = vadd.f32 %v289, %v275
    %v291 = vadd.f32 %v290, %v276
    %v292 = vadd.f32 %v291, %v277
    %v293 = vadd.f32 %v292, %v278
    %v294 = vadd.f32 %v293, %v279
    %v295 = vadd.f32 %v294, %v280
    %v296 = vadd.f32 %v295, %v281
    %v297 = vadd.f32 %v296, %v282
    %v298 = vrot.slane %v297, 4
    %v299 = vadd.f32 %v297, %v298
    %v300 = vrot.slane %v299, 2
    %v301 = vadd.f32 %v299, %v300
    %v302 = vrot.slane %v301, 1
    %v303 = vadd.f32 %v301, %v302
    %304 = vst [vmem:[%s4] sm:$0xff] %v266
    %305 = vst [vmem:[%s5] sm:$0xff] %v303
    // Predicated region
    $region22: #{_lambda_.9} parent=1 // pred_check
      _
    $region23: #{_lambda_.9} parent=1 // pred_check_branch
      %307 = sbr.rel (0) target = $region25
    $region24: #{_lambda_.9} parent=1 // pred_region
      _
    $region25: #{_lambda_.9} parent=1 // pred_fallthru
      _
    // Predicated region
    $region26: #{_lambda_.9} parent=1 // pred_check
      _
    $region27: #{_lambda_.9} parent=1 // pred_check_branch
      %309 = sbr.rel (0) target = $region29
    $region28: #{_lambda_.9} parent=1 // pred_region
      _
    $region29: #{_lambda_.9} parent=1 // pred_fallthru
      _
    // Predicated region
    $region30: #{_lambda_.9} parent=1 // pred_check
      _
    $region31: #{_lambda_.9} parent=1 // pred_check_branch
      %311 = sbr.rel (0) target = $region33
    $region32: #{_lambda_.9} parent=1 // pred_region
      _
    $region33: #{_lambda_.9} parent=1 // pred_fallthru
      _
    // Predicated region
    $region34: #{_lambda_.9} parent=1 // pred_check
      _
    $region35: #{_lambda_.9} parent=1 // pred_check_branch
      %313 = sbr.rel (0) target = $region37
    $region36: #{_lambda_.9} parent=1 // pred_region
      _
    $region37: #{_lambda_.9} parent=1 // pred_fallthru
      _
    // Predicated region
    $region38: #{_lambda_.9} parent=1 // pred_check
      _
    $region39: #{_lambda_.9} parent=1 // pred_check_branch
      %315 = sbr.rel (0) target = $region41
    $region40: #{_lambda_.9} parent=1 // pred_region
      _
    $region41: #{_lambda_.9} parent=1 // pred_fallthru
      _
    // Predicated region
    $region42: #{_lambda_.9} parent=1 // pred_check
      _
    $region43: #{_lambda_.9} parent=1 // pred_check_branch
      %317 = sbr.rel (0) target = $region45
    $region44: #{_lambda_.9} parent=1 // pred_region
      _
    $region45: #{_lambda_.9} parent=1 // pred_fallthru
      _
    %318 = vsyncpa [#allocation3], 1
    %319 = vsyncpa [#allocation5], 1

// kernel: tile.44
$region0: #{tile.44}
  #allocation0 [shape = 's32[1]{0}', space=sflag, size = 0x4, scoped, tag = 'scoped memory for tile.44']
  %s0 = inlined_call_operand.vmem [shape: f32[64], index: 0, kind: input, shape index: {}]
  %s1 = inlined_call_operand.vmem [shape: f32[9,64], index: 1, kind: output, shape index: {}]
  // Predicated region
  $region2: #{tile.44} parent=0 // pred_check
    _
  $region3: #{tile.44} parent=0 // pred_check_branch
    %3 = sbr.rel (0) target = $region5
  $region4: #{tile.44} parent=0 // pred_region
    _
  $region5: #{tile.44} parent=0 // pred_fallthru
    _
  %v4 = vld [vmem:[%s0] ss:$0 sm:$0xff]
  %5 = vst [vmem:[%s1] sm:$0xff] %v4
  %s6 = scalar_lea.vmem %s1, 8
  %7 = vst [vmem:[%s6] sm:$0xff] %v4

// kernel: mul.47
$region0: #{mul.47}
  %s0 = inlined_call_operand.vmem [shape: f32[9,64], index: 0, kind: input, shape index: {}]
  %s1 = inlined_call_operand.vmem [shape: f32[576], index: 1, kind: output, shape index: {}]
  %v2 = vld [vmem:[%s0] ss:$2 sm:$0x1f]
  %vm3 = vcmask 523264
  %4 = vst.msk [vmem:[%s1] sm:$0x1f] %vm3, %v2
  %s5 = scalar_lea.vmem %s0, 1
  %v6 = vld [vmem:[%s5] ss:$2 sm:$0xf]
  %7 = vrot.lane.b32.xlu0 %v6, 64
  %v8 = vpop.permute.xlu0 %7
  %vm9 = vcmask 1048064
  %10 = vst.msk [vmem:[%s1] sm:$0xf] %vm9, %v8

// kernel: _lambda_.10
$region0: #{_lambda_.10}
  #allocation0 [shape = 'u32[]', space=smem, size = 0x4, offset = 0x4, fixed_abs, tag = 'smem constant byte address 0x4 - core index']
  #allocation1 [shape = 'u32[72,128]{1,0:T(1,128)}', space=vmem, size = 0x9000, scoped, tag = 'internal scratch']
  %s0 = inlined_call_operand.vmem [shape: bf16[32,288], index: 0, kind: input, shape index: {}]
  %s1 = inlined_call_operand.vmem [shape: bf16[288,128], index: 1, kind: input, shape index: {}]
  %s2 = inlined_call_operand.hbm [shape: f32[1,128], index: 2, kind: input, shape index: {}]
  %s3 = inlined_call_operand.vmem [shape: bf16[32,128], index: 3, kind: output, shape index: {0}]
  %s4 = inlined_call_operand.vmem [shape: f32[8,128], index: 4, kind: output, shape index: {1}]
  %s5 = inlined_call_operand.vmem [shape: f32[8,128], index: 5, kind: output, shape index: {2}]
  %6 = xla_tuple %s3, %s4, %s5
  %s7 = sld [smem:[#allocation0]]
  $region42: #{_lambda_.10} parent=0
    _
  %s9 = ssub.s32 1, %s7
  %s10 = scalar_select 0, %s9, %s7
  $region1: #{_lambda_.10} parent=0
    #allocation2 [shape = 'u8[512]{0}', space=vmem, size = 0x400, scoped, tag = 'input window, operand 2, single buffered']
    #allocation3 [shape = 's32[1]{0}', space=sflag, size = 0x4, scoped, tag = 'scoped memory for _lambda_.10']
    %11 = vsyncpa [#allocation3], 0
    // Predicated region
    $region2: #{_lambda_.10} parent=1 // pred_check
      _
    $region3: #{_lambda_.10} parent=1 // pred_check_branch
      %13 = sbr.rel (0) target = $region5
    $region4: #{_lambda_.10} parent=1 // pred_region
      _
    $region5: #{_lambda_.10} parent=1 // pred_fallthru
      _
    // Predicated region
    $region6: #{_lambda_.10} parent=1 // pred_check
      _
    $region7: #{_lambda_.10} parent=1 // pred_check_branch
      %15 = sbr.rel (0) target = $region9
    $region8: #{_lambda_.10} parent=1 // pred_region
      _
    $region9: #{_lambda_.10} parent=1 // pred_fallthru
      _
    // Predicated region
    $region10: #{_lambda_.10} parent=1 // pred_check
      _
    $region11: #{_lambda_.10} parent=1 // pred_check_branch
      %17 = sbr.rel (0) target = $region13
    $region12: #{_lambda_.10} parent=1 // pred_region
      %19 = vsyncadd [#allocation3], 0
      %s21 = sshll.u32 %s2, 4
      %s22 = int_to_ptr.hbm [resolvable:$true] %s21
      %s23 = sshll.u32 [#allocation2], 4
      %s24 = int_to_ptr.vmem [resolvable:$true] %s23
      %26 = dma.hbm_to_vmem [thread:$0]  %s22, 16, %s24, [#allocation3]
    $region13: #{_lambda_.10} parent=1 // pred_fallthru
      _
    // Predicated region
    $region14: #{_lambda_.10} parent=1 // pred_check
      _
    $region15: #{_lambda_.10} parent=1 // pred_check_branch
      %28 = sbr.rel (0) target = $region17
    $region16: #{_lambda_.10} parent=1 // pred_region
      %30 = dma.done [#allocation3], 16
    $region17: #{_lambda_.10} parent=1 // pred_fallthru
      _
    %v32 = vld [vmem:[%s0] sm:$0xff]
    %v33 = vld [vmem:[%s0 + $0x8] sm:$0xf]
    %v34 = vld [vmem:[%s0 + $0xc] sm:$0xff]
    %v35 = vld [vmem:[%s0 + $0x14] sm:$0xf]
    %v36 = vld [vmem:[%s0 + $0x18] sm:$0xff]
    %v37 = vld [vmem:[%s0 + $0x20] sm:$0xf]
    %v38 = vld [vmem:[%s0 + $0x24] sm:$0xff]
    %v39 = vld [vmem:[%s0 + $0x2c] sm:$0xf]
    %v40 = vld [vmem:[%s1] sm:$0xf]
    %v41 = vld [vmem:[%s1 + $0x4] sm:$0xf]
    %v42 = vld [vmem:[%s1 + $0x8] sm:$0xf]
    %v43 = vld [vmem:[%s1 + $0xc] sm:$0xf]
    %v44 = vld [vmem:[%s1 + $0x10] sm:$0xf]
    %v45 = vld [vmem:[%s1 + $0x14] sm:$0xf]
    %v46 = vld [vmem:[%s1 + $0x18] sm:$0xf]
    %v47 = vld [vmem:[%s1 + $0x1c] sm:$0xf]
    %v48 = vld [vmem:[%s1 + $0x20] sm:$0xf]
    %v49 = vld [vmem:[%s1 + $0x24] sm:$0xf]
    %v50 = vld [vmem:[%s1 + $0x28] sm:$0xf]
    %v51 = vld [vmem:[%s1 + $0x2c] sm:$0xf]
    %v52 = vld [vmem:[%s1 + $0x30] sm:$0xf]
    %v53 = vld [vmem:[%s1 + $0x34] sm:$0xf]
    %v54 = vld [vmem:[%s1 + $0x38] sm:$0xf]
    %v55 = vld [vmem:[%s1 + $0x3c] sm:$0xf]
    %v56 = vld [vmem:[%s1 + $0x40] sm:$0xf]
    %v57 = vld [vmem:[%s1 + $0x44] sm:$0xf]
    %v58 = vld [vmem:[%s1 + $0x48] sm:$0xf]
    %v59 = vld [vmem:[%s1 + $0x4c] sm:$0xf]
    %v60 = vld [vmem:[%s1 + $0x50] sm:$0xf]
    %v61 = vld [vmem:[%s1 + $0x54] sm:$0xf]
    %v62 = vld [vmem:[%s1 + $0x58] sm:$0xf]
    %v63 = vld [vmem:[%s1 + $0x5c] sm:$0xf]
    %v64 = vld [vmem:[%s1 + $0x60] sm:$0xf]
    %v65 = vld [vmem:[%s1 + $0x64] sm:$0xf]
    %v66 = vld [vmem:[%s1 + $0x68] sm:$0xf]
    %v67 = vld [vmem:[%s1 + $0x6c] sm:$0xf]
    %v68 = vld [vmem:[%s1 + $0x70] sm:$0xf]
    %v69 = vld [vmem:[%s1 + $0x74] sm:$0xf]
    %v70 = vld [vmem:[%s1 + $0x78] sm:$0xf]
    %v71 = vld [vmem:[%s1 + $0x7c] sm:$0xf]
    %v72 = vld [vmem:[%s1 + $0x80] sm:$0xf]
    %v73 = vld [vmem:[%s1 + $0x84] sm:$0xf]
    %v74 = vld [vmem:[%s1 + $0x88] sm:$0xf]
    %v75 = vld [vmem:[%s1 + $0x8c] sm:$0xf]
    %v76 = vld [vmem:[#allocation2] sm:$0x1]
    %v78 = vperm.slane %v76, 0
    %v88 = vunpack.c.l.b16 %v32
    %v89 = vunpack.c.h.b16 %v32
    %v90 = vunpack.c.l.b16 %v33
    %v91 = vunpack.c.l.b16 %v34
    %v92 = vunpack.c.h.b16 %v34
    %v93 = vunpack.c.l.b16 %v35
    %v94 = vunpack.c.l.b16 %v36
    %v95 = vunpack.c.h.b16 %v36
    %v96 = vunpack.c.l.b16 %v37
    %v97 = vunpack.c.l.b16 %v38
    %v98 = vunpack.c.h.b16 %v38
    %v99 = vunpack.c.l.b16 %v39
    %v100 = vpack.c.b16 %v91, %v88
    %v101 = vpack.c.b16 %v92, %v89
    %v102 = vpack.c.b16 %v93, %v90
    %v103 = vpack.c.b16 %v97, %v94
    %v104 = vpack.c.b16 %v98, %v95
    %v105 = vpack.c.b16 %v99, %v96
    %v146 = vunpack.c.l.b16 %v40
    %v147 = vunpack.c.l.b16 %v41
    %v148 = vunpack.c.l.b16 %v42
    %v149 = vunpack.c.l.b16 %v43
    %v150 = vunpack.c.l.b16 %v44
    %v151 = vunpack.c.l.b16 %v45
    %v152 = vunpack.c.l.b16 %v46
    %v153 = vunpack.c.l.b16 %v47
    %v154 = vunpack.c.l.b16 %v48
    %v155 = vunpack.c.l.b16 %v49
    %v156 = vunpack.c.l.b16 %v50
    %v157 = vunpack.c.l.b16 %v51
    %v158 = vunpack.c.l.b16 %v52
    %v159 = vunpack.c.l.b16 %v53
    %v160 = vunpack.c.l.b16 %v54
    %v161 = vunpack.c.l.b16 %v55
    %v162 = vunpack.c.l.b16 %v56
    %v163 = vunpack.c.l.b16 %v57
    %v164 = vunpack.c.l.b16 %v58
    %v165 = vunpack.c.l.b16 %v59
    %v166 = vunpack.c.l.b16 %v60
    %v167 = vunpack.c.l.b16 %v61
    %v168 = vunpack.c.l.b16 %v62
    %v169 = vunpack.c.l.b16 %v63
    %v170 = vunpack.c.l.b16 %v64
    %v171 = vunpack.c.l.b16 %v65
    %v172 = vunpack.c.l.b16 %v66
    %v173 = vunpack.c.l.b16 %v67
    %v174 = vunpack.c.l.b16 %v68
    %v175 = vunpack.c.l.b16 %v69
    %v176 = vunpack.c.l.b16 %v70
    %v177 = vunpack.c.l.b16 %v71
    %v178 = vunpack.c.l.b16 %v72
    %v179 = vunpack.c.l.b16 %v73
    %v180 = vunpack.c.l.b16 %v74
    %v181 = vunpack.c.l.b16 %v75
    %v182 = vpack.c.b16 %v147, %v146
    %v183 = vpack.c.b16 %v149, %v148
    %v184 = vpack.c.b16 %v151, %v150
    %v185 = vpack.c.b16 %v153, %v152
    %v186 = vpack.c.b16 %v155, %v154
    %v187 = vpack.c.b16 %v157, %v156
    %v188 = vpack.c.b16 %v159, %v158
    %v189 = vpack.c.b16 %v161, %v160
    %v190 = vpack.c.b16 %v163, %v162
    %v191 = vpack.c.b16 %v165, %v164
    %v192 = vpack.c.b16 %v167, %v166
    %v193 = vpack.c.b16 %v169, %v168
    %v194 = vpack.c.b16 %v171, %v170
    %v195 = vpack.c.b16 %v173, %v172
    %v196 = vpack.c.b16 %v175, %v174
    %v197 = vpack.c.b16 %v177, %v176
    %v198 = vpack.c.b16 %v179, %v178
    %v199 = vpack.c.b16 %v181, %v180
    %vm218 = vcmask 261120
    %v220 = vsel %vm218, %v102, 0
    %v223 = vsel %vm218, %v105, 0
    %225 = vmatpush.bf16.msra.mxu0 %v189
    %226 = vmatpush.bf16.msra.mxu0 %v188
    %227 = vmatpush.bf16.msra.mxu0 %v187
    %228 = vmatpush.bf16.msra.mxu0 %v186
    %229 = vmatpush.bf16.msra.mxu0 %v185
    %230 = vmatpush.bf16.msra.mxu0 %v184
    %231 = vmatpush.bf16.msra.mxu0 %v183
    %232 = vmatpush.bf16.msra.mxu0 %v182
    %233 = vmatmul.bf16.gmra.mxu0 %v100
    %v234 = vpop.f32.mrf.mxu0
    %v235 = vadd.f32 %v78, %v234
    %v236 = vpop.f32.mrf.mxu0
    %v237 = vadd.f32 %v78, %v236
    %238 = vmatmul.bf16.gmra.mxu0 %v103
    %v239 = vpop.f32.mrf.mxu0
    %v240 = vadd.f32 %v78, %v239
    %v241 = vpop.f32.mrf.mxu0
    %v242 = vadd.f32 %v78, %v241
    %243 = vdwg.mxu0
    %244 = vmatpush.bf16.msra.mxu0 %v197
    %245 = vmatpush.bf16.msra.mxu0 %v196
    %246 = vmatpush.bf16.msra.mxu0 %v195
    %247 = vmatpush.bf16.msra.mxu0 %v194
    %248 = vmatpush.bf16.msra.mxu0 %v193
    %249 = vmatpush.bf16.msra.mxu0 %v192
    %250 = vmatpush.bf16.msra.mxu0 %v191
    %251 = vmatpush.bf16.msra.mxu0 %v190
    %252 = vmatmul.bf16.gmra.mxu0 %v101
    %v253 = vpop.f32.mrf.mxu0
    %v254 = vadd.f32 %v235, %v253
    %v255 = vpop.f32.mrf.mxu0
    %v256 = vadd.f32 %v237, %v255
    %257 = vmatmul.bf16.gmra.mxu0 %v104
    %v258 = vpop.f32.mrf.mxu0
    %v259 = vadd.f32 %v240, %v258
    %v260 = vpop.f32.mrf.mxu0
    %v261 = vadd.f32 %v242, %v260
    %262 = vdwg.mxu0
    %263 = vmatpush.bf16.msra.mxu0 0
    %264 = vmatpush.bf16.msra.mxu0 0
    %265 = vmatpush.bf16.msra.mxu0 0
    %266 = vmatpush.bf16.msra.mxu0 0
    %267 = vmatpush.bf16.msra.mxu0 0
    %268 = vmatpush.bf16.msra.mxu0 0
    %269 = vmatpush.bf16.msra.mxu0 %v199
    %270 = vmatpush.bf16.msra.mxu0 %v198
    %271 = vmatmul.bf16.gmra.mxu0 %v220
    %v272 = vpop.f32.mrf.mxu0
    %v273 = vadd.f32 %v254, %v272
    %v274 = vpop.f32.mrf.mxu0
    %v275 = vadd.f32 %v256, %v274
    %276 = vmatmul.bf16.gmra.mxu0 %v223
    %v277 = vpop.f32.mrf.mxu0
    %v278 = vadd.f32 %v259, %v277
    %v279 = vpop.f32.mrf.mxu0
    %v280 = vadd.f32 %v261, %v279
    %281 = vdwg.mxu0
    %v282 = vmax.f32 %v273, 0.0
    %v283 = vmax.f32 %v275, 0.0
    %v284 = vmax.f32 %v278, 0.0
    %v285 = vmax.f32 %v280, 0.0
    %v286 = vpack.c.bf16 %v282, %v282
    %v287 = vpack.c.bf16 %v283, %v283
    %v288 = vpack.c.bf16 %v284, %v284
    %v289 = vpack.c.bf16 %v285, %v285
    %290 = vst [vmem:[%s3] sm:$0xf] %v286
    %291 = vst [vmem:[%s3 + $0x4] sm:$0xf] %v287
    %292 = vst [vmem:[%s3 + $0x8] sm:$0xf] %v288
    %293 = vst [vmem:[%s3 + $0xc] sm:$0xf] %v289
    %v294 = vadd.f32 %v282, %v283
    %v295 = vadd.f32 %v294, %v284
    %v296 = vadd.f32 %v295, %v285
    %v297 = vrot.slane %v296, 4
    %v298 = vadd.f32 %v296, %v297
    %v299 = vrot.slane %v298, 2
    %v300 = vadd.f32 %v298, %v299
    %v301 = vrot.slane %v300, 1
    %v302 = vadd.f32 %v300, %v301
    %v303 = vmul.f32 %v282, %v282
    %v304 = vmul.f32 %v283, %v283
    %v305 = vmul.f32 %v284, %v284
    %v306 = vmul.f32 %v285, %v285
    %v307 = vadd.f32 %v303, %v304
    %v308 = vadd.f32 %v307, %v305
    %v309 = vadd.f32 %v308, %v306
    %v310 = vrot.slane %v309, 4
    %v311 = vadd.f32 %v309, %v310
    %v312 = vrot.slane %v311, 2
    %v313 = vadd.f32 %v311, %v312
    %v314 = vrot.slane %v313, 1
    %v315 = vadd.f32 %v313, %v314
    %316 = vst [vmem:[%s4] sm:$0xff] %v302
    %317 = vst [vmem:[%s5] sm:$0xff] %v315
    // Predicated region
    $region18: #{_lambda_.10} parent=1 // pred_check
      _
    $region19: #{_lambda_.10} parent=1 // pred_check_branch
      %319 = sbr.rel (0) target = $region21
    $region20: #{_lambda_.10} parent=1 // pred_region
      _
    $region21: #{_lambda_.10} parent=1 // pred_fallthru
      _
    // Predicated region
    $region22: #{_lambda_.10} parent=1 // pred_check
      _
    $region23: #{_lambda_.10} parent=1 // pred_check_branch
      %321 = sbr.rel (0) target = $region25
    $region24: #{_lambda_.10} parent=1 // pred_region
      _
    $region25: #{_lambda_.10} parent=1 // pred_fallthru
      _
    // Predicated region
    $region26: #{_lambda_.10} parent=1 // pred_check
      _
    $region27: #{_lambda_.10} parent=1 // pred_check_branch
      %323 = sbr.rel (0) target = $region29
    $region28: #{_lambda_.10} parent=1 // pred_region
      _
    $region29: #{_lambda_.10} parent=1 // pred_fallthru
      _
    // Predicated region
    $region30: #{_lambda_.10} parent=1 // pred_check
      _
    $region31: #{_lambda_.10} parent=1 // pred_check_branch
      %325 = sbr.rel (0) target = $region33
    $region32: #{_lambda_.10} parent=1 // pred_region
      _
    $region33: #{_lambda_.10} parent=1 // pred_fallthru
      _
    // Predicated region
    $region34: #{_lambda_.10} parent=1 // pred_check
      _
    $region35: #{_lambda_.10} parent=1 // pred_check_branch
      %327 = sbr.rel (0) target = $region37
    $region36: #{_lambda_.10} parent=1 // pred_region
      _
    $region37: #{_lambda_.10} parent=1 // pred_fallthru
      _
    // Predicated region
    $region38: #{_lambda_.10} parent=1 // pred_check
      _
    $region39: #{_lambda_.10} parent=1 // pred_check_branch
      %329 = sbr.rel (0) target = $region41
    $region40: #{_lambda_.10} parent=1 // pred_region
      _
    $region41: #{_lambda_.10} parent=1 // pred_fallthru
      _
    %330 = vsyncpa [#allocation3], 1

// kernel: _lambda_.11
$region0: #{_lambda_.11}
  #allocation0 [shape = 'u32[]', space=smem, size = 0x4, offset = 0x4, fixed_abs, tag = 'smem constant byte address 0x4 - core index']
  #allocation1 [shape = 'u32[72,128]{1,0:T(1,128)}', space=vmem, size = 0x9000, scoped, tag = 'internal scratch']
  %s0 = inlined_call_operand.vmem [shape: bf16[16,576], index: 0, kind: input, shape index: {}]
  %s1 = inlined_call_operand.vmem [shape: bf16[576,128], index: 1, kind: input, shape index: {}]
  %s2 = inlined_call_operand.vmem [shape: f32[1,128], index: 2, kind: input, shape index: {}]
  %s3 = inlined_call_operand.vmem [shape: bf16[16,128], index: 3, kind: output, shape index: {0}]
  %s4 = inlined_call_operand.vmem [shape: f32[8,128], index: 4, kind: output, shape index: {1}]
  %s5 = inlined_call_operand.vmem [shape: f32[8,128], index: 5, kind: output, shape index: {2}]
  %6 = xla_tuple %s3, %s4, %s5
  %s7 = sld [smem:[#allocation0]]
  $region38: #{_lambda_.11} parent=0
    _
  %s9 = ssub.s32 1, %s7
  %s10 = scalar_select 0, %s9, %s7
  // Predicated region
  $region2: #{_lambda_.11} parent=0 // pred_check
    _
  $region3: #{_lambda_.11} parent=0 // pred_check_branch
    %12 = sbr.rel (0) target = $region5
  $region4: #{_lambda_.11} parent=0 // pred_region
    _
  $region5: #{_lambda_.11} parent=0 // pred_fallthru
    _
  // Predicated region
  $region6: #{_lambda_.11} parent=0 // pred_check
    _
  $region7: #{_lambda_.11} parent=0 // pred_check_branch
    %14 = sbr.rel (0) target = $region9
  $region8: #{_lambda_.11} parent=0 // pred_region
    _
  $region9: #{_lambda_.11} parent=0 // pred_fallthru
    _
  // Predicated region
  $region10: #{_lambda_.11} parent=0 // pred_check
    _
  $region11: #{_lambda_.11} parent=0 // pred_check_branch
    %16 = sbr.rel (0) target = $region13
  $region12: #{_lambda_.11} parent=0 // pred_region
    _
  $region13: #{_lambda_.11} parent=0 // pred_fallthru
    _
  %v18 = vld [vmem:[%s0] sm:$0xff]
  %v19 = vld [vmem:[%s0 + $0x8] sm:$0xff]
  %v20 = vld [vmem:[%s0 + $0x10] sm:$0xf]
  %v21 = vld [vmem:[%s0 + $0x14] sm:$0xff]
  %v22 = vld [vmem:[%s0 + $0x1c] sm:$0xff]
  %v23 = vld [vmem:[%s0 + $0x24] sm:$0xf]
  %v24 = vld [vmem:[%s1] sm:$0xf]
  %v25 = vld [vmem:[%s1 + $0x4] sm:$0xf]
  %v26 = vld [vmem:[%s1 + $0x8] sm:$0xf]
  %v27 = vld [vmem:[%s1 + $0xc] sm:$0xf]
  %v28 = vld [vmem:[%s1 + $0x10] sm:$0xf]
  %v29 = vld [vmem:[%s1 + $0x14] sm:$0xf]
  %v30 = vld [vmem:[%s1 + $0x18] sm:$0xf]
  %v31 = vld [vmem:[%s1 + $0x1c] sm:$0xf]
  %v32 = vld [vmem:[%s1 + $0x20] sm:$0xf]
  %v33 = vld [vmem:[%s1 + $0x24] sm:$0xf]
  %v34 = vld [vmem:[%s1 + $0x28] sm:$0xf]
  %v35 = vld [vmem:[%s1 + $0x2c] sm:$0xf]
  %v36 = vld [vmem:[%s1 + $0x30] sm:$0xf]
  %v37 = vld [vmem:[%s1 + $0x34] sm:$0xf]
  %v38 = vld [vmem:[%s1 + $0x38] sm:$0xf]
  %v39 = vld [vmem:[%s1 + $0x3c] sm:$0xf]
  %v40 = vld [vmem:[%s1 + $0x40] sm:$0xf]
  %v41 = vld [vmem:[%s1 + $0x44] sm:$0xf]
  %v42 = vld [vmem:[%s1 + $0x48] sm:$0xf]
  %v43 = vld [vmem:[%s1 + $0x4c] sm:$0xf]
  %v44 = vld [vmem:[%s1 + $0x50] sm:$0xf]
  %v45 = vld [vmem:[%s1 + $0x54] sm:$0xf]
  %v46 = vld [vmem:[%s1 + $0x58] sm:$0xf]
  %v47 = vld [vmem:[%s1 + $0x5c] sm:$0xf]
  %v48 = vld [vmem:[%s1 + $0x60] sm:$0xf]
  %v49 = vld [vmem:[%s1 + $0x64] sm:$0xf]
  %v50 = vld [vmem:[%s1 + $0x68] sm:$0xf]
  %v51 = vld [vmem:[%s1 + $0x6c] sm:$0xf]
  %v52 = vld [vmem:[%s1 + $0x70] sm:$0xf]
  %v53 = vld [vmem:[%s1 + $0x74] sm:$0xf]
  %v54 = vld [vmem:[%s1 + $0x78] sm:$0xf]
  %v55 = vld [vmem:[%s1 + $0x7c] sm:$0xf]
  %v56 = vld [vmem:[%s1 + $0x80] sm:$0xf]
  %v57 = vld [vmem:[%s1 + $0x84] sm:$0xf]
  %v58 = vld [vmem:[%s1 + $0x88] sm:$0xf]
  %v59 = vld [vmem:[%s1 + $0x8c] sm:$0xf]
  %v60 = vld [vmem:[%s1 + $0x90] sm:$0xf]
  %v61 = vld [vmem:[%s1 + $0x94] sm:$0xf]
  %v62 = vld [vmem:[%s1 + $0x98] sm:$0xf]
  %v63 = vld [vmem:[%s1 + $0x9c] sm:$0xf]
  %v64 = vld [vmem:[%s1 + $0xa0] sm:$0xf]
  %v65 = vld [vmem:[%s1 + $0xa4] sm:$0xf]
  %v66 = vld [vmem:[%s1 + $0xa8] sm:$0xf]
  %v67 = vld [vmem:[%s1 + $0xac] sm:$0xf]
  %v68 = vld [vmem:[%s1 + $0xb0] sm:$0xf]
  %v69 = vld [vmem:[%s1 + $0xb4] sm:$0xf]
  %v70 = vld [vmem:[%s1 + $0xb8] sm:$0xf]
  %v71 = vld [vmem:[%s1 + $0xbc] sm:$0xf]
  %v72 = vld [vmem:[%s1 + $0xc0] sm:$0xf]
  %v73 = vld [vmem:[%s1 + $0xc4] sm:$0xf]
  %v74 = vld [vmem:[%s1 + $0xc8] sm:$0xf]
  %v75 = vld [vmem:[%s1 + $0xcc] sm:$0xf]
  %v76 = vld [vmem:[%s1 + $0xd0] sm:$0xf]
  %v77 = vld [vmem:[%s1 + $0xd4] sm:$0xf]
  %v78 = vld [vmem:[%s1 + $0xd8] sm:$0xf]
  %v79 = vld [vmem:[%s1 + $0xdc] sm:$0xf]
  %v80 = vld [vmem:[%s1 + $0xe0] sm:$0xf]
  %v81 = vld [vmem:[%s1 + $0xe4] sm:$0xf]
  %v82 = vld [vmem:[%s1 + $0xe8] sm:$0xf]
  %v83 = vld [vmem:[%s1 + $0xec] sm:$0xf]
  %v84 = vld [vmem:[%s1 + $0xf0] sm:$0xf]
  %v85 = vld [vmem:[%s1 + $0xf4] sm:$0xf]
  %v86 = vld [vmem:[%s1 + $0xf8] sm:$0xf]
  %v87 = vld [vmem:[%s1 + $0xfc] sm:$0xf]
  %v88 = vld [vmem:[%s1 + $0x100] sm:$0xf]
  %v89 = vld [vmem:[%s1 + $0x104] sm:$0xf]
  %v90 = vld [vmem:[%s1 + $0x108] sm:$0xf]
  %v91 = vld [vmem:[%s1 + $0x10c] sm:$0xf]
  %v92 = vld [vmem:[%s1 + $0x110] sm:$0xf]
  %v93 = vld [vmem:[%s1 + $0x114] sm:$0xf]
  %v94 = vld [vmem:[%s1 + $0x118] sm:$0xf]
  %v95 = vld [vmem:[%s1 + $0x11c] sm:$0xf]
  %v96 = vld [vmem:[%s2] sm:$0x1]
  %v98 = vperm.slane %v96, 0
  %v106 = vunpack.c.l.b16 %v18
  %v107 = vunpack.c.h.b16 %v18
  %v108 = vunpack.c.l.b16 %v19
  %v109 = vunpack.c.h.b16 %v19
  %v110 = vunpack.c.l.b16 %v20
  %v111 = vunpack.c.l.b16 %v21
  %v112 = vunpack.c.h.b16 %v21
  %v113 = vunpack.c.l.b16 %v22
  %v114 = vunpack.c.h.b16 %v22
  %v115 = vunpack.c.l.b16 %v23
  %v116 = vpack.c.b16 %v111, %v106
  %v117 = vpack.c.b16 %v112, %v107
  %v118 = vpack.c.b16 %v113, %v108
  %v119 = vpack.c.b16 %v114, %v109
  %v120 = vpack.c.b16 %v115, %v110
  %v197 = vunpack.c.l.b16 %v24
  %v198 = vunpack.c.l.b16 %v25
  %v199 = vunpack.c.l.b16 %v26
  %v200 = vunpack.c.l.b16 %v27
  %v201 = vunpack.c.l.b16 %v28
  %v202 = vunpack.c.l.b16 %v29
  %v203 = vunpack.c.l.b16 %v30
  %v204 = vunpack.c.l.b16 %v31
  %v205 = vunpack.c.l.b16 %v32
  %v206 = vunpack.c.l.b16 %v33
  %v207 = vunpack.c.l.b16 %v34
  %v208 = vunpack.c.l.b16 %v35
  %v209 = vunpack.c.l.b16 %v36
  %v210 = vunpack.c.l.b16 %v37
  %v211 = vunpack.c.l.b16 %v38
  %v212 = vunpack.c.l.b16 %v39
  %v213 = vunpack.c.l.b16 %v40
  %v214 = vunpack.c.l.b16 %v41
  %v215 = vunpack.c.l.b16 %v42
  %v216 = vunpack.c.l.b16 %v43
  %v217 = vunpack.c.l.b16 %v44
  %v218 = vunpack.c.l.b16 %v45
  %v219 = vunpack.c.l.b16 %v46
  %v220 = vunpack.c.l.b16 %v47
  %v221 = vunpack.c.l.b16 %v48
  %v222 = vunpack.c.l.b16 %v49
  %v223 = vunpack.c.l.b16 %v50
  %v224 = vunpack.c.l.b16 %v51
  %v225 = vunpack.c.l.b16 %v52
  %v226 = vunpack.c.l.b16 %v53
  %v227 = vunpack.c.l.b16 %v54
  %v228 = vunpack.c.l.b16 %v55
  %v229 = vunpack.c.l.b16 %v56
  %v230 = vunpack.c.l.b16 %v57
  %v231 = vunpack.c.l.b16 %v58
  %v232 = vunpack.c.l.b16 %v59
  %v233 = vunpack.c.l.b16 %v60
  %v234 = vunpack.c.l.b16 %v61
  %v235 = vunpack.c.l.b16 %v62
  %v236 = vunpack.c.l.b16 %v63
  %v237 = vunpack.c.l.b16 %v64
  %v238 = vunpack.c.l.b16 %v65
  %v239 = vunpack.c.l.b16 %v66
  %v240 = vunpack.c.l.b16 %v67
  %v241 = vunpack.c.l.b16 %v68
  %v242 = vunpack.c.l.b16 %v69
  %v243 = vunpack.c.l.b16 %v70
  %v244 = vunpack.c.l.b16 %v71
  %v245 = vunpack.c.l.b16 %v72
  %v246 = vunpack.c.l.b16 %v73
  %v247 = vunpack.c.l.b16 %v74
  %v248 = vunpack.c.l.b16 %v75
  %v249 = vunpack.c.l.b16 %v76
  %v250 = vunpack.c.l.b16 %v77
  %v251 = vunpack.c.l.b16 %v78
  %v252 = vunpack.c.l.b16 %v79
  %v253 = vunpack.c.l.b16 %v80
  %v254 = vunpack.c.l.b16 %v81
  %v255 = vunpack.c.l.b16 %v82
  %v256 = vunpack.c.l.b16 %v83
  %v257 = vunpack.c.l.b16 %v84
  %v258 = vunpack.c.l.b16 %v85
  %v259 = vunpack.c.l.b16 %v86
  %v260 = vunpack.c.l.b16 %v87
  %v261 = vunpack.c.l.b16 %v88
  %v262 = vunpack.c.l.b16 %v89
  %v263 = vunpack.c.l.b16 %v90
  %v264 = vunpack.c.l.b16 %v91
  %v265 = vunpack.c.l.b16 %v92
  %v266 = vunpack.c.l.b16 %v93
  %v267 = vunpack.c.l.b16 %v94
  %v268 = vunpack.c.l.b16 %v95
  %v269 = vpack.c.b16 %v198, %v197
  %v270 = vpack.c.b16 %v200, %v199
  %v271 = vpack.c.b16 %v202, %v201
  %v272 = vpack.c.b16 %v204, %v203
  %v273 = vpack.c.b16 %v206, %v205
  %v274 = vpack.c.b16 %v208, %v207
  %v275 = vpack.c.b16 %v210, %v209
  %v276 = vpack.c.b16 %v212, %v211
  %v277 = vpack.c.b16 %v214, %v213
  %v278 = vpack.c.b16 %v216, %v215
  %v279 = vpack.c.b16 %v218, %v217
  %v280 = vpack.c.b16 %v220, %v219
  %v281 = vpack.c.b16 %v222, %v221
  %v282 = vpack.c.b16 %v224, %v223
  %v283 = vpack.c.b16 %v226, %v225
  %v284 = vpack.c.b16 %v228, %v227
  %v285 = vpack.c.b16 %v230, %v229
  %v286 = vpack.c.b16 %v232, %v231
  %v287 = vpack.c.b16 %v234, %v233
  %v288 = vpack.c.b16 %v236, %v235
  %v289 = vpack.c.b16 %v238, %v237
  %v290 = vpack.c.b16 %v240, %v239
  %v291 = vpack.c.b16 %v242, %v241
  %v292 = vpack.c.b16 %v244, %v243
  %v293 = vpack.c.b16 %v246, %v245
  %v294 = vpack.c.b16 %v248, %v247
  %v295 = vpack.c.b16 %v250, %v249
  %v296 = vpack.c.b16 %v252, %v251
  %v297 = vpack.c.b16 %v254, %v253
  %v298 = vpack.c.b16 %v256, %v255
  %v299 = vpack.c.b16 %v258, %v257
  %v300 = vpack.c.b16 %v260, %v259
  %v301 = vpack.c.b16 %v262, %v261
  %v302 = vpack.c.b16 %v264, %v263
  %v303 = vpack.c.b16 %v266, %v265
  %v304 = vpack.c.b16 %v268, %v267
  %vm341 = vcmask 523264
  %v343 = vsel %vm341, %v120, 0
  %345 = vmatpush.bf16.msra.mxu0 %v276
  %346 = vmatpush.bf16.msra.mxu0 %v275
  %347 = vmatpush.bf16.msra.mxu0 %v274
  %348 = vmatpush.bf16.msra.mxu0 %v273
  %349 = vmatpush.bf16.msra.mxu0 %v272
  %350 = vmatpush.bf16.msra.mxu0 %v271
  %351 = vmatpush.bf16.msra.mxu0 %v270
  %352 = vmatpush.bf16.msra.mxu0 %v269
  %353 = vmatmul.bf16.gmra.mxu0 %v116
  %v354 = vpop.f32.mrf.mxu0
  %v355 = vadd.f32 %v98, %v354
  %v356 = vpop.f32.mrf.mxu0
  %v357 = vadd.f32 %v98, %v356
  %358 = vdwg.mxu0
  %359 = vmatpush.bf16.msra.mxu0 %v284
  %360 = vmatpush.bf16.msra.mxu0 %v283
  %361 = vmatpush.bf16.msra.mxu0 %v282
  %362 = vmatpush.bf16.msra.mxu0 %v281
  %363 = vmatpush.bf16.msra.mxu0 %v280
  %364 = vmatpush.bf16.msra.mxu0 %v279
  %365 = vmatpush.bf16.msra.mxu0 %v278
  %366 = vmatpush.bf16.msra.mxu0 %v277
  %367 = vmatmul.bf16.gmra.mxu0 %v117
  %v368 = vpop.f32.mrf.mxu0
  %v369 = vadd.f32 %v355, %v368
  %v370 = vpop.f32.mrf.mxu0
  %v371 = vadd.f32 %v357, %v370
  %372 = vdwg.mxu0
  %373 = vmatpush.bf16.msra.mxu0 %v292
  %374 = vmatpush.bf16.msra.mxu0 %v291
  %375 = vmatpush.bf16.msra.mxu0 %v290
  %376 = vmatpush.bf16.msra.mxu0 %v289
  %377 = vmatpush.bf16.msra.mxu0 %v288
  %378 = vmatpush.bf16.msra.mxu0 %v287
  %379 = vmatpush.bf16.msra.mxu0 %v286
  %380 = vmatpush.bf16.msra.mxu0 %v285
  %381 = vmatmul.bf16.gmra.mxu0 %v118
  %v382 = vpop.f32.mrf.mxu0
  %v383 = vadd.f32 %v369, %v382
  %v384 = vpop.f32.mrf.mxu0
  %v385 = vadd.f32 %v371, %v384
  %386 = vdwg.mxu0
  %387 = vmatpush.bf16.msra.mxu0 %v300
  %388 = vmatpush.bf16.msra.mxu0 %v299
  %389 = vmatpush.bf16.msra.mxu0 %v298
  %390 = vmatpush.bf16.msra.mxu0 %v297
  %391 = vmatpush.bf16.msra.mxu0 %v296
  %392 = vmatpush.bf16.msra.mxu0 %v295
  %393 = vmatpush.bf16.msra.mxu0 %v294
  %394 = vmatpush.bf16.msra.mxu0 %v293
  %395 = vmatmul.bf16.gmra.mxu0 %v119
  %v396 = vpop.f32.mrf.mxu0
  %v397 = vadd.f32 %v383, %v396
  %v398 = vpop.f32.mrf.mxu0
  %v399 = vadd.f32 %v385, %v398
  %400 = vdwg.mxu0
  %401 = vmatpush.bf16.msra.mxu0 0
  %402 = vmatpush.bf16.msra.mxu0 0
  %403 = vmatpush.bf16.msra.mxu0 0
  %404 = vmatpush.bf16.msra.mxu0 0
  %405 = vmatpush.bf16.msra.mxu0 %v304
  %406 = vmatpush.bf16.msra.mxu0 %v303
  %407 = vmatpush.bf16.msra.mxu0 %v302
  %408 = vmatpush.bf16.msra.mxu0 %v301
  %409 = vmatmul.bf16.gmra.mxu0 %v343
  %v410 = vpop.f32.mrf.mxu0
  %v411 = vadd.f32 %v397, %v410
  %v412 = vpop.f32.mrf.mxu0
  %v413 = vadd.f32 %v399, %v412
  %414 = vdwg.mxu0
  %v415 = vmax.f32 %v411, 0.0
  %v416 = vmax.f32 %v413, 0.0
  %v417 = vpack.c.bf16 %v415, %v415
  %v418 = vpack.c.bf16 %v416, %v416
  %419 = vst [vmem:[%s3] sm:$0xf] %v417
  %420 = vst [vmem:[%s3 + $0x4] sm:$0xf] %v418
  %v421 = vadd.f32 %v415, %v416
  %v422 = vrot.slane %v421, 4
  %v423 = vadd.f32 %v421, %v422
  %v424 = vrot.slane %v423, 2
  %v425 = vadd.f32 %v423, %v424
  %v426 = vrot.slane %v425, 1
  %v427 = vadd.f32 %v425, %v426
  %v428 = vmul.f32 %v415, %v415
  %v429 = vmul.f32 %v416, %v416
  %v430 = vadd.f32 %v428, %v429
  %v431 = vrot.slane %v430, 4
  %v432 = vadd.f32 %v430, %v431
  %v433 = vrot.slane %v432, 2
  %v434 = vadd.f32 %v432, %v433
  %v435 = vrot.slane %v434, 1
  %v436 = vadd.f32 %v434, %v435
  %437 = vst [vmem:[%s4] sm:$0xff] %v427
  %438 = vst [vmem:[%s5] sm:$0xff] %v436
  // Predicated region
  $region14: #{_lambda_.11} parent=0 // pred_check
    _
  $region15: #{_lambda_.11} parent=0 // pred_check_branch
    %440 = sbr.rel (0) target = $region17
  $region16: #{_lambda_.11} parent=0 // pred_region
    _
  $region17: #{_lambda_.11} parent=0 // pred_fallthru
    _
  // Predicated region
  $region18: #{_lambda_.11} parent=0 // pred_check
    _
  $region19: #{_lambda_.11} parent=0 // pred_check_branch
    %442 = sbr.rel (0) target = $region21
  $region20: #{_lambda_.11} parent=0 // pred_region
    _
  $region21: #{_lambda_.11} parent=0 // pred_fallthru
    _
  // Predicated region
  $region22: #{_lambda_.11} parent=0 // pred_check
    _
  $region23: #{_lambda_.11} parent=0 // pred_check_branch
    %444 = sbr.rel (0) target = $region25
  $region24: #{_lambda_.11} parent=0 // pred_region
    _
  $region25: #{_lambda_.11} parent=0 // pred_fallthru
    _
  // Predicated region
  $region26: #{_lambda_.11} parent=0 // pred_check
    _
  $region27: #{_lambda_.11} parent=0 // pred_check_branch
    %446 = sbr.rel (0) target = $region29
  $region28: #{_lambda_.11} parent=0 // pred_region
    _
  $region29: #{_lambda_.11} parent=0 // pred_fallthru
    _
  // Predicated region
  $region30: #{_lambda_.11} parent=0 // pred_check
    _
  $region31: #{_lambda_.11} parent=0 // pred_check_branch
    %448 = sbr.rel (0) target = $region33
  $region32: #{_lambda_.11} parent=0 // pred_region
    _
  $region33: #{_lambda_.11} parent=0 // pred_fallthru
    _
  // Predicated region
  $region34: #{_lambda_.11} parent=0 // pred_check
    _
  $region35: #{_lambda_.11} parent=0 // pred_check_branch
    %450 = sbr.rel (0) target = $region37
  $region36: #{_lambda_.11} parent=0 // pred_region
    _
  $region37: #{_lambda_.11} parent=0 // pred_fallthru
    _

// kernel: _lambda_.12
$region0: #{_lambda_.12}
  #allocation0 [shape = 'u32[]', space=smem, size = 0x4, offset = 0x4, fixed_abs, tag = 'smem constant byte address 0x4 - core index']
  #allocation1 [shape = 'u32[72,128]{1,0:T(1,128)}', space=vmem, size = 0x9000, scoped, tag = 'internal scratch']
  %s0 = inlined_call_operand.vmem [shape: bf16[16,1152], index: 0, kind: input, shape index: {}]
  %s1 = inlined_call_operand.vmem [shape: bf16[1152,256], index: 1, kind: input, shape index: {}]
  %s2 = inlined_call_operand.vmem [shape: f32[1,256], index: 2, kind: input, shape index: {}]
  %s3 = inlined_call_operand.vmem [shape: bf16[16,256], index: 3, kind: output, shape index: {0}]
  %s4 = inlined_call_operand.vmem [shape: f32[8,256], index: 4, kind: output, shape index: {1}]
  %s5 = inlined_call_operand.vmem [shape: f32[8,256], index: 5, kind: output, shape index: {2}]
  %6 = xla_tuple %s3, %s4, %s5
  %s7 = sld [smem:[#allocation0]]
  $region38: #{_lambda_.12} parent=0
    _
  %s9 = ssub.s32 1, %s7
  %s10 = scalar_select 0, %s9, %s7
  // Predicated region
  $region2: #{_lambda_.12} parent=0 // pred_check
    _
  $region3: #{_lambda_.12} parent=0 // pred_check_branch
    %12 = sbr.rel (0) target = $region5
  $region4: #{_lambda_.12} parent=0 // pred_region
    _
  $region5: #{_lambda_.12} parent=0 // pred_fallthru
    _
  // Predicated region
  $region6: #{_lambda_.12} parent=0 // pred_check
    _
  $region7: #{_lambda_.12} parent=0 // pred_check_branch
    %14 = sbr.rel (0) target = $region9
  $region8: #{_lambda_.12} parent=0 // pred_region
    _
  $region9: #{_lambda_.12} parent=0 // pred_fallthru
    _
  // Predicated region
  $region10: #{_lambda_.12} parent=0 // pred_check
    _
  $region11: #{_lambda_.12} parent=0 // pred_check_branch
    %16 = sbr.rel (0) target = $region13
  $region12: #{_lambda_.12} parent=0 // pred_region
    _
  $region13: #{_lambda_.12} parent=0 // pred_fallthru
    _
  %v17 = vld [vmem:[%s0] sm:$0xff]
  %v18 = vld [vmem:[%s0 + $0x8] sm:$0xff]
  %v19 = vld [vmem:[%s0 + $0x10] sm:$0xff]
  %v20 = vld [vmem:[%s0 + $0x18] sm:$0xff]
  %v21 = vld [vmem:[%s0 + $0x20] sm:$0xf]
  %v22 = vld [vmem:[%s0 + $0x24] sm:$0xff]
  %v23 = vld [vmem:[%s0 + $0x2c] sm:$0xff]
  %v24 = vld [vmem:[%s0 + $0x34] sm:$0xff]
  %v25 = vld [vmem:[%s0 + $0x3c] sm:$0xff]
  %v26 = vld [vmem:[%s0 + $0x44] sm:$0xf]
  %v27 = vld [vmem:[%s1] sm:$0xff]
  %v28 = vld [vmem:[%s1 + $0x8] sm:$0xff]
  %v29 = vld [vmem:[%s1 + $0x10] sm:$0xff]
  %v30 = vld [vmem:[%s1 + $0x18] sm:$0xff]
  %v31 = vld [vmem:[%s1 + $0x20] sm:$0xff]
  %v32 = vld [vmem:[%s1 + $0x28] sm:$0xff]
  %v33 = vld [vmem:[%s1 + $0x30] sm:$0xff]
  %v34 = vld [vmem:[%s1 + $0x38] sm:$0xff]
  %v35 = vld [vmem:[%s1 + $0x40] sm:$0xff]
  %v36 = vld [vmem:[%s1 + $0x48] sm:$0xff]
  %v37 = vld [vmem:[%s1 + $0x50] sm:$0xff]
  %v38 = vld [vmem:[%s1 + $0x58] sm:$0xff]
  %v39 = vld [vmem:[%s1 + $0x60] sm:$0xff]
  %v40 = vld [vmem:[%s1 + $0x68] sm:$0xff]
  %v41 = vld [vmem:[%s1 + $0x70] sm:$0xff]
  %v42 = vld [vmem:[%s1 + $0x78] sm:$0xff]
  %v43 = vld [vmem:[%s1 + $0x80] sm:$0xff]
  %v44 = vld [vmem:[%s1 + $0x88] sm:$0xff]
  %v45 = vld [vmem:[%s1 + $0x90] sm:$0xff]
  %v46 = vld [vmem:[%s1 + $0x98] sm:$0xff]
  %v47 = vld [vmem:[%s1 + $0xa0] sm:$0xff]
  %v48 = vld [vmem:[%s1 + $0xa8] sm:$0xff]
  %v49 = vld [vmem:[%s1 + $0xb0] sm:$0xff]
  %v50 = vld [vmem:[%s1 + $0xb8] sm:$0xff]
  %v51 = vld [vmem:[%s1 + $0xc0] sm:$0xff]
  %v52 = vld [vmem:[%s1 + $0xc8] sm:$0xff]
  %v53 = vld [vmem:[%s1 + $0xd0] sm:$0xff]
  %v54 = vld [vmem:[%s1 + $0xd8] sm:$0xff]
  %v55 = vld [vmem:[%s1 + $0xe0] sm:$0xff]
  %v56 = vld [vmem:[%s1 + $0xe8] sm:$0xff]
  %v57 = vld [vmem:[%s1 + $0xf0] sm:$0xff]
  %v58 = vld [vmem:[%s1 + $0xf8] sm:$0xff]
  %v59 = vld [vmem:[%s1 + $0x100] sm:$0xff]
  %v60 = vld [vmem:[%s1 + $0x108] sm:$0xff]
  %v61 = vld [vmem:[%s1 + $0x110] sm:$0xff]
  %v62 = vld [vmem:[%s1 + $0x118] sm:$0xff]
  %v63 = vld [vmem:[%s1 + $0x120] sm:$0xff]
  %v64 = vld [vmem:[%s1 + $0x128] sm:$0xff]
  %v65 = vld [vmem:[%s1 + $0x130] sm:$0xff]
  %v66 = vld [vmem:[%s1 + $0x138] sm:$0xff]
  %v67 = vld [vmem:[%s1 + $0x140] sm:$0xff]
  %v68 = vld [vmem:[%s1 + $0x148] sm:$0xff]
  %v69 = vld [vmem:[%s1 + $0x150] sm:$0xff]
  %v70 = vld [vmem:[%s1 + $0x158] sm:$0xff]
  %v71 = vld [vmem:[%s1 + $0x160] sm:$0xff]
  %v72 = vld [vmem:[%s1 + $0x168] sm:$0xff]
  %v73 = vld [vmem:[%s1 + $0x170] sm:$0xff]
  %v74 = vld [vmem:[%s1 + $0x178] sm:$0xff]
  %v75 = vld [vmem:[%s1 + $0x180] sm:$0xff]
  %v76 = vld [vmem:[%s1 + $0x188] sm:$0xff]
  %v77 = vld [vmem:[%s1 + $0x190] sm:$0xff]
  %v78 = vld [vmem:[%s1 + $0x198] sm:$0xff]
  %v79 = vld [vmem:[%s1 + $0x1a0] sm:$0xff]
  %v80 = vld [vmem:[%s1 + $0x1a8] sm:$0xff]
  %v81 = vld [vmem:[%s1 + $0x1b0] sm:$0xff]
  %v82 = vld [vmem:[%s1 + $0x1b8] sm:$0xff]
  %v83 = vld [vmem:[%s1 + $0x1c0] sm:$0xff]
  %v84 = vld [vmem:[%s1 + $0x1c8] sm:$0xff]
  %v85 = vld [vmem:[%s1 + $0x1d0] sm:$0xff]
  %v86 = vld [vmem:[%s1 + $0x1d8] sm:$0xff]
  %v87 = vld [vmem:[%s1 + $0x1e0] sm:$0xff]
  %v88 = vld [vmem:[%s1 + $0x1e8] sm:$0xff]
  %v89 = vld [vmem:[%s1 + $0x1f0] sm:$0xff]
  %v90 = vld [vmem:[%s1 + $0x1f8] sm:$0xff]
  %v91 = vld [vmem:[%s1 + $0x200] sm:$0xff]
  %v92 = vld [vmem:[%s1 + $0x208] sm:$0xff]
  %v93 = vld [vmem:[%s1 + $0x210] sm:$0xff]
  %v94 = vld [vmem:[%s1 + $0x218] sm:$0xff]
  %v95 = vld [vmem:[%s1 + $0x220] sm:$0xff]
  %v96 = vld [vmem:[%s1 + $0x228] sm:$0xff]
  %v97 = vld [vmem:[%s1 + $0x230] sm:$0xff]
  %v98 = vld [vmem:[%s1 + $0x238] sm:$0xff]
  %v99 = vld [vmem:[%s1 + $0x240] sm:$0xff]
  %v100 = vld [vmem:[%s1 + $0x248] sm:$0xff]
  %v101 = vld [vmem:[%s1 + $0x250] sm:$0xff]
  %v102 = vld [vmem:[%s1 + $0x258] sm:$0xff]
  %v103 = vld [vmem:[%s1 + $0x260] sm:$0xff]
  %v104 = vld [vmem:[%s1 + $0x268] sm:$0xff]
  %v105 = vld [vmem:[%s1 + $0x270] sm:$0xff]
  %v106 = vld [vmem:[%s1 + $0x278] sm:$0xff]
  %v107 = vld [vmem:[%s1 + $0x280] sm:$0xff]
  %v108 = vld [vmem:[%s1 + $0x288] sm:$0xff]
  %v109 = vld [vmem:[%s1 + $0x290] sm:$0xff]
  %v110 = vld [vmem:[%s1 + $0x298] sm:$0xff]
  %v111 = vld [vmem:[%s1 + $0x2a0] sm:$0xff]
  %v112 = vld [vmem:[%s1 + $0x2a8] sm:$0xff]
  %v113 = vld [vmem:[%s1 + $0x2b0] sm:$0xff]
  %v114 = vld [vmem:[%s1 + $0x2b8] sm:$0xff]
  %v115 = vld [vmem:[%s1 + $0x2c0] sm:$0xff]
  %v116 = vld [vmem:[%s1 + $0x2c8] sm:$0xff]
  %v117 = vld [vmem:[%s1 + $0x2d0] sm:$0xff]
  %v118 = vld [vmem:[%s1 + $0x2d8] sm:$0xff]
  %v119 = vld [vmem:[%s1 + $0x2e0] sm:$0xff]
  %v120 = vld [vmem:[%s1 + $0x2e8] sm:$0xff]
  %v121 = vld [vmem:[%s1 + $0x2f0] sm:$0xff]
  %v122 = vld [vmem:[%s1 + $0x2f8] sm:$0xff]
  %v123 = vld [vmem:[%s1 + $0x300] sm:$0xff]
  %v124 = vld [vmem:[%s1 + $0x308] sm:$0xff]
  %v125 = vld [vmem:[%s1 + $0x310] sm:$0xff]
  %v126 = vld [vmem:[%s1 + $0x318] sm:$0xff]
  %v127 = vld [vmem:[%s1 + $0x320] sm:$0xff]
  %v128 = vld [vmem:[%s1 + $0x328] sm:$0xff]
  %v129 = vld [vmem:[%s1 + $0x330] sm:$0xff]
  %v130 = vld [vmem:[%s1 + $0x338] sm:$0xff]
  %v131 = vld [vmem:[%s1 + $0x340] sm:$0xff]
  %v132 = vld [vmem:[%s1 + $0x348] sm:$0xff]
  %v133 = vld [vmem:[%s1 + $0x350] sm:$0xff]
  %v134 = vld [vmem:[%s1 + $0x358] sm:$0xff]
  %v135 = vld [vmem:[%s1 + $0x360] sm:$0xff]
  %v136 = vld [vmem:[%s1 + $0x368] sm:$0xff]
  %v137 = vld [vmem:[%s1 + $0x370] sm:$0xff]
  %v138 = vld [vmem:[%s1 + $0x378] sm:$0xff]
  %v139 = vld [vmem:[%s1 + $0x380] sm:$0xff]
  %v140 = vld [vmem:[%s1 + $0x388] sm:$0xff]
  %v141 = vld [vmem:[%s1 + $0x390] sm:$0xff]
  %v142 = vld [vmem:[%s1 + $0x398] sm:$0xff]
  %v143 = vld [vmem:[%s1 + $0x3a0] sm:$0xff]
  %v144 = vld [vmem:[%s1 + $0x3a8] sm:$0xff]
  %v145 = vld [vmem:[%s1 + $0x3b0] sm:$0xff]
  %v146 = vld [vmem:[%s1 + $0x3b8] sm:$0xff]
  %v147 = vld [vmem:[%s1 + $0x3c0] sm:$0xff]
  %v148 = vld [vmem:[%s1 + $0x3c8] sm:$0xff]
  %v149 = vld [vmem:[%s1 + $0x3d0] sm:$0xff]
  %v150 = vld [vmem:[%s1 + $0x3d8] sm:$0xff]
  %v151 = vld [vmem:[%s1 + $0x3e0] sm:$0xff]
  %v152 = vld [vmem:[%s1 + $0x3e8] sm:$0xff]
  %v153 = vld [vmem:[%s1 + $0x3f0] sm:$0xff]
  %v154 = vld [vmem:[%s1 + $0x3f8] sm:$0xff]
  %v155 = vld [vmem:[%s1 + $0x400] sm:$0xff]
  %v156 = vld [vmem:[%s1 + $0x408] sm:$0xff]
  %v157 = vld [vmem:[%s1 + $0x410] sm:$0xff]
  %v158 = vld [vmem:[%s1 + $0x418] sm:$0xff]
  %v159 = vld [vmem:[%s1 + $0x420] sm:$0xff]
  %v160 = vld [vmem:[%s1 + $0x428] sm:$0xff]
  %v161 = vld [vmem:[%s1 + $0x430] sm:$0xff]
  %v162 = vld [vmem:[%s1 + $0x438] sm:$0xff]
  %v163 = vld [vmem:[%s1 + $0x440] sm:$0xff]
  %v164 = vld [vmem:[%s1 + $0x448] sm:$0xff]
  %v165 = vld [vmem:[%s1 + $0x450] sm:$0xff]
  %v166 = vld [vmem:[%s1 + $0x458] sm:$0xff]
  %v167 = vld [vmem:[%s1 + $0x460] sm:$0xff]
  %v168 = vld [vmem:[%s1 + $0x468] sm:$0xff]
  %v169 = vld [vmem:[%s1 + $0x470] sm:$0xff]
  %v170 = vld [vmem:[%s1 + $0x478] sm:$0xff]
  %v171 = vld [vmem:[%s2] sm:$0x3]
  %v173 = vperm.slane %v171, 0
  %v174 = vperm.slane %v171, 1
  %v187 = vunpack.c.l.b16 %v17
  %v188 = vunpack.c.h.b16 %v17
  %v189 = vunpack.c.l.b16 %v18
  %v190 = vunpack.c.h.b16 %v18
  %v191 = vunpack.c.l.b16 %v19
  %v192 = vunpack.c.h.b16 %v19
  %v193 = vunpack.c.l.b16 %v20
  %v194 = vunpack.c.h.b16 %v20
  %v195 = vunpack.c.l.b16 %v21
  %v196 = vunpack.c.l.b16 %v22
  %v197 = vunpack.c.h.b16 %v22
  %v198 = vunpack.c.l.b16 %v23
  %v199 = vunpack.c.h.b16 %v23
  %v200 = vunpack.c.l.b16 %v24
  %v201 = vunpack.c.h.b16 %v24
  %v202 = vunpack.c.l.b16 %v25
  %v203 = vunpack.c.h.b16 %v25
  %v204 = vunpack.c.l.b16 %v26
  %v205 = vpack.c.b16 %v196, %v187
  %v206 = vpack.c.b16 %v197, %v188
  %v207 = vpack.c.b16 %v198, %v189
  %v208 = vpack.c.b16 %v199, %v190
  %v209 = vpack.c.b16 %v200, %v191
  %v210 = vpack.c.b16 %v201, %v192
  %v211 = vpack.c.b16 %v202, %v193
  %v212 = vpack.c.b16 %v203, %v194
  %v213 = vpack.c.b16 %v204, %v195
  %v367 = vunpack.c.l.b16 %v27
  %v368 = vunpack.c.h.b16 %v27
  %v369 = vunpack.c.l.b16 %v28
  %v370 = vunpack.c.h.b16 %v28
  %v371 = vunpack.c.l.b16 %v29
  %v372 = vunpack.c.h.b16 %v29
  %v373 = vunpack.c.l.b16 %v30
  %v374 = vunpack.c.h.b16 %v30
  %v375 = vunpack.c.l.b16 %v31
  %v376 = vunpack.c.h.b16 %v31
  %v377 = vunpack.c.l.b16 %v32
  %v378 = vunpack.c.h.b16 %v32
  %v379 = vunpack.c.l.b16 %v33
  %v380 = vunpack.c.h.b16 %v33
  %v381 = vunpack.c.l.b16 %v34
  %v382 = vunpack.c.h.b16 %v34
  %v383 = vunpack.c.l.b16 %v35
  %v384 = vunpack.c.h.b16 %v35
  %v385 = vunpack.c.l.b16 %v36
  %v386 = vunpack.c.h.b16 %v36
  %v387 = vunpack.c.l.b16 %v37
  %v388 = vunpack.c.h.b16 %v37
  %v389 = vunpack.c.l.b16 %v38
  %v390 = vunpack.c.h.b16 %v38
  %v391 = vunpack.c.l.b16 %v39
  %v392 = vunpack.c.h.b16 %v39
  %v393 = vunpack.c.l.b16 %v40
  %v394 = vunpack.c.h.b16 %v40
  %v395 = vunpack.c.l.b16 %v41
  %v396 = vunpack.c.h.b16 %v41
  %v397 = vunpack.c.l.b16 %v42
  %v398 = vunpack.c.h.b16 %v42
  %v399 = vunpack.c.l.b16 %v43
  %v400 = vunpack.c.h.b16 %v43
  %v401 = vunpack.c.l.b16 %v44
  %v402 = vunpack.c.h.b16 %v44
  %v403 = vunpack.c.l.b16 %v45
  %v404 = vunpack.c.h.b16 %v45
  %v405 = vunpack.c.l.b16 %v46
  %v406 = vunpack.c.h.b16 %v46
  %v407 = vunpack.c.l.b16 %v47
  %v408 = vunpack.c.h.b16 %v47
  %v409 = vunpack.c.l.b16 %v48
  %v410 = vunpack.c.h.b16 %v48
  %v411 = vunpack.c.l.b16 %v49
  %v412 = vunpack.c.h.b16 %v49
  %v413 = vunpack.c.l.b16 %v50
  %v414 = vunpack.c.h.b16 %v50
  %v415 = vunpack.c.l.b16 %v51
  %v416 = vunpack.c.h.b16 %v51
  %v417 = vunpack.c.l.b16 %v52
  %v418 = vunpack.c.h.b16 %v52
  %v419 = vunpack.c.l.b16 %v53
  %v420 = vunpack.c.h.b16 %v53
  %v421 = vunpack.c.l.b16 %v54
  %v422 = vunpack.c.h.b16 %v54
  %v423 = vunpack.c.l.b16 %v55
  %v424 = vunpack.c.h.b16 %v55
  %v425 = vunpack.c.l.b16 %v56
  %v426 = vunpack.c.h.b16 %v56
  %v427 = vunpack.c.l.b16 %v57
  %v428 = vunpack.c.h.b16 %v57
  %v429 = vunpack.c.l.b16 %v58
  %v430 = vunpack.c.h.b16 %v58
  %v431 = vunpack.c.l.b16 %v59
  %v432 = vunpack.c.h.b16 %v59
  %v433 = vunpack.c.l.b16 %v60
  %v434 = vunpack.c.h.b16 %v60
  %v435 = vunpack.c.l.b16 %v61
  %v436 = vunpack.c.h.b16 %v61
  %v437 = vunpack.c.l.b16 %v62
  %v438 = vunpack.c.h.b16 %v62
  %v439 = vunpack.c.l.b16 %v63
  %v440 = vunpack.c.h.b16 %v63
  %v441 = vunpack.c.l.b16 %v64
  %v442 = vunpack.c.h.b16 %v64
  %v443 = vunpack.c.l.b16 %v65
  %v444 = vunpack.c.h.b16 %v65
  %v445 = vunpack.c.l.b16 %v66
  %v446 = vunpack.c.h.b16 %v66
  %v447 = vunpack.c.l.b16 %v67
  %v448 = vunpack.c.h.b16 %v67
  %v449 = vunpack.c.l.b16 %v68
  %v450 = vunpack.c.h.b16 %v68
  %v451 = vunpack.c.l.b16 %v69
  %v452 = vunpack.c.h.b16 %v69
  %v453 = vunpack.c.l.b16 %v70
  %v454 = vunpack.c.h.b16 %v70
  %v455 = vunpack.c.l.b16 %v71
  %v456 = vunpack.c.h.b16 %v71
  %v457 = vunpack.c.l.b16 %v72
  %v458 = vunpack.c.h.b16 %v72
  %v459 = vunpack.c.l.b16 %v73
  %v460 = vunpack.c.h.b16 %v73
  %v461 = vunpack.c.l.b16 %v74
  %v462 = vunpack.c.h.b16 %v74
  %v463 = vunpack.c.l.b16 %v75
  %v464 = vunpack.c.h.b16 %v75
  %v465 = vunpack.c.l.b16 %v76
  %v466 = vunpack.c.h.b16 %v76
  %v467 = vunpack.c.l.b16 %v77
  %v468 = vunpack.c.h.b16 %v77
  %v469 = vunpack.c.l.b16 %v78
  %v470 = vunpack.c.h.b16 %v78
  %v471 = vunpack.c.l.b16 %v79
  %v472 = vunpack.c.h.b16 %v79
  %v473 = vunpack.c.l.b16 %v80
  %v474 = vunpack.c.h.b16 %v80
  %v475 = vunpack.c.l.b16 %v81
  %v476 = vunpack.c.h.b16 %v81
  %v477 = vunpack.c.l.b16 %v82
  %v478 = vunpack.c.h.b16 %v82
  %v479 = vunpack.c.l.b16 %v83
  %v480 = vunpack.c.h.b16 %v83
  %v481 = vunpack.c.l.b16 %v84
  %v482 = vunpack.c.h.b16 %v84
  %v483 = vunpack.c.l.b16 %v85
  %v484 = vunpack.c.h.b16 %v85
  %v485 = vunpack.c.l.b16 %v86
  %v486 = vunpack.c.h.b16 %v86
  %v487 = vunpack.c.l.b16 %v87
  %v488 = vunpack.c.h.b16 %v87
  %v489 = vunpack.c.l.b16 %v88
  %v490 = vunpack.c.h.b16 %v88
  %v491 = vunpack.c.l.b16 %v89
  %v492 = vunpack.c.h.b16 %v89
  %v493 = vunpack.c.l.b16 %v90
  %v494 = vunpack.c.h.b16 %v90
  %v495 = vunpack.c.l.b16 %v91
  %v496 = vunpack.c.h.b16 %v91
  %v497 = vunpack.c.l.b16 %v92
  %v498 = vunpack.c.h.b16 %v92
  %v499 = vunpack.c.l.b16 %v93
  %v500 = vunpack.c.h.b16 %v93
  %v501 = vunpack.c.l.b16 %v94
  %v502 = vunpack.c.h.b16 %v94
  %v503 = vunpack.c.l.b16 %v95
  %v504 = vunpack.c.h.b16 %v95
  %v505 = vunpack.c.l.b16 %v96
  %v506 = vunpack.c.h.b16 %v96
  %v507 = vunpack.c.l.b16 %v97
  %v508 = vunpack.c.h.b16 %v97
  %v509 = vunpack.c.l.b16 %v98
  %v510 = vunpack.c.h.b16 %v98
  %v511 = vunpack.c.l.b16 %v99
  %v512 = vunpack.c.h.b16 %v99
  %v513 = vunpack.c.l.b16 %v100
  %v514 = vunpack.c.h.b16 %v100
  %v515 = vunpack.c.l.b16 %v101
  %v516 = vunpack.c.h.b16 %v101
  %v517 = vunpack.c.l.b16 %v102
  %v518 = vunpack.c.h.b16 %v102
  %v519 = vunpack.c.l.b16 %v103
  %v520 = vunpack.c.h.b16 %v103
  %v521 = vunpack.c.l.b16 %v104
  %v522 = vunpack.c.h.b16 %v104
  %v523 = vunpack.c.l.b16 %v105
  %v524 = vunpack.c.h.b16 %v105
  %v525 = vunpack.c.l.b16 %v106
  %v526 = vunpack.c.h.b16 %v106
  %v527 = vunpack.c.l.b16 %v107
  %v528 = vunpack.c.h.b16 %v107
  %v529 = vunpack.c.l.b16 %v108
  %v530 = vunpack.c.h.b16 %v108
  %v531 = vunpack.c.l.b16 %v109
  %v532 = vunpack.c.h.b16 %v109
  %v533 = vunpack.c.l.b16 %v110
  %v534 = vunpack.c.h.b16 %v110
  %v535 = vunpack.c.l.b16 %v111
  %v536 = vunpack.c.h.b16 %v111
  %v537 = vunpack.c.l.b16 %v112
  %v538 = vunpack.c.h.b16 %v112
  %v539 = vunpack.c.l.b16 %v113
  %v540 = vunpack.c.h.b16 %v113
  %v541 = vunpack.c.l.b16 %v114
  %v542 = vunpack.c.h.b16 %v114
  %v543 = vunpack.c.l.b16 %v115
  %v544 = vunpack.c.h.b16 %v115
  %v545 = vunpack.c.l.b16 %v116
  %v546 = vunpack.c.h.b16 %v116
  %v547 = vunpack.c.l.b16 %v117
  %v548 = vunpack.c.h.b16 %v117
  %v549 = vunpack.c.l.b16 %v118
  %v550 = vunpack.c.h.b16 %v118
  %v551 = vunpack.c.l.b16 %v119
  %v552 = vunpack.c.h.b16 %v119
  %v553 = vunpack.c.l.b16 %v120
  %v554 = vunpack.c.h.b16 %v120
  %v555 = vunpack.c.l.b16 %v121
  %v556 = vunpack.c.h.b16 %v121
  %v557 = vunpack.c.l.b16 %v122
  %v558 = vunpack.c.h.b16 %v122
  %v559 = vunpack.c.l.b16 %v123
  %v560 = vunpack.c.h.b16 %v123
  %v561 = vunpack.c.l.b16 %v124
  %v562 = vunpack.c.h.b16 %v124
  %v563 = vunpack.c.l.b16 %v125
  %v564 = vunpack.c.h.b16 %v125
  %v565 = vunpack.c.l.b16 %v126
  %v566 = vunpack.c.h.b16 %v126
  %v567 = vunpack.c.l.b16 %v127
  %v568 = vunpack.c.h.b16 %v127
  %v569 = vunpack.c.l.b16 %v128
  %v570 = vunpack.c.h.b16 %v128
  %v571 = vunpack.c.l.b16 %v129
  %v572 = vunpack.c.h.b16 %v129
  %v573 = vunpack.c.l.b16 %v130
  %v574 = vunpack.c.h.b16 %v130
  %v575 = vunpack.c.l.b16 %v131
  %v576 = vunpack.c.h.b16 %v131
  %v577 = vunpack.c.l.b16 %v132
  %v578 = vunpack.c.h.b16 %v132
  %v579 = vunpack.c.l.b16 %v133
  %v580 = vunpack.c.h.b16 %v133
  %v581 = vunpack.c.l.b16 %v134
  %v582 = vunpack.c.h.b16 %v134
  %v583 = vunpack.c.l.b16 %v135
  %v584 = vunpack.c.h.b16 %v135
  %v585 = vunpack.c.l.b16 %v136
  %v586 = vunpack.c.h.b16 %v136
  %v587 = vunpack.c.l.b16 %v137
  %v588 = vunpack.c.h.b16 %v137
  %v589 = vunpack.c.l.b16 %v138
  %v590 = vunpack.c.h.b16 %v138
  %v591 = vunpack.c.l.b16 %v139
  %v592 = vunpack.c.h.b16 %v139
  %v593 = vunpack.c.l.b16 %v140
  %v594 = vunpack.c.h.b16 %v140
  %v595 = vunpack.c.l.b16 %v141
  %v596 = vunpack.c.h.b16 %v141
  %v597 = vunpack.c.l.b16 %v142
  %v598 = vunpack.c.h.b16 %v142
  %v599 = vunpack.c.l.b16 %v143
  %v600 = vunpack.c.h.b16 %v143
  %v601 = vunpack.c.l.b16 %v144
  %v602 = vunpack.c.h.b16 %v144
  %v603 = vunpack.c.l.b16 %v145
  %v604 = vunpack.c.h.b16 %v145
  %v605 = vunpack.c.l.b16 %v146
  %v606 = vunpack.c.h.b16 %v146
  %v607 = vunpack.c.l.b16 %v147
  %v608 = vunpack.c.h.b16 %v147
  %v609 = vunpack.c.l.b16 %v148
  %v610 = vunpack.c.h.b16 %v148
  %v611 = vunpack.c.l.b16 %v149
  %v612 = vunpack.c.h.b16 %v149
  %v613 = vunpack.c.l.b16 %v150
  %v614 = vunpack.c.h.b16 %v150
  %v615 = vunpack.c.l.b16 %v151
  %v616 = vunpack.c.h.b16 %v151
  %v617 = vunpack.c.l.b16 %v152
  %v618 = vunpack.c.h.b16 %v152
  %v619 = vunpack.c.l.b16 %v153
  %v620 = vunpack.c.h.b16 %v153
  %v621 = vunpack.c.l.b16 %v154
  %v622 = vunpack.c.h.b16 %v154
  %v623 = vunpack.c.l.b16 %v155
  %v624 = vunpack.c.h.b16 %v155
  %v625 = vunpack.c.l.b16 %v156
  %v626 = vunpack.c.h.b16 %v156
  %v627 = vunpack.c.l.b16 %v157
  %v628 = vunpack.c.h.b16 %v157
  %v629 = vunpack.c.l.b16 %v158
  %v630 = vunpack.c.h.b16 %v158
  %v631 = vunpack.c.l.b16 %v159
  %v632 = vunpack.c.h.b16 %v159
  %v633 = vunpack.c.l.b16 %v160
  %v634 = vunpack.c.h.b16 %v160
  %v635 = vunpack.c.l.b16 %v161
  %v636 = vunpack.c.h.b16 %v161
  %v637 = vunpack.c.l.b16 %v162
  %v638 = vunpack.c.h.b16 %v162
  %v639 = vunpack.c.l.b16 %v163
  %v640 = vunpack.c.h.b16 %v163
  %v641 = vunpack.c.l.b16 %v164
  %v642 = vunpack.c.h.b16 %v164
  %v643 = vunpack.c.l.b16 %v165
  %v644 = vunpack.c.h.b16 %v165
  %v645 = vunpack.c.l.b16 %v166
  %v646 = vunpack.c.h.b16 %v166
  %v647 = vunpack.c.l.b16 %v167
  %v648 = vunpack.c.h.b16 %v167
  %v649 = vunpack.c.l.b16 %v168
  %v650 = vunpack.c.h.b16 %v168
  %v651 = vunpack.c.l.b16 %v169
  %v652 = vunpack.c.h.b16 %v169
  %v653 = vunpack.c.l.b16 %v170
  %v654 = vunpack.c.h.b16 %v170
  %v655 = vpack.c.b16 %v369, %v367
  %v656 = vpack.c.b16 %v370, %v368
  %v657 = vpack.c.b16 %v373, %v371
  %v658 = vpack.c.b16 %v374, %v372
  %v659 = vpack.c.b16 %v377, %v375
  %v660 = vpack.c.b16 %v378, %v376
  %v661 = vpack.c.b16 %v381, %v379
  %v662 = vpack.c.b16 %v382, %v380
  %v663 = vpack.c.b16 %v385, %v383
  %v664 = vpack.c.b16 %v386, %v384
  %v665 = vpack.c.b16 %v389, %v387
  %v666 = vpack.c.b16 %v390, %v388
  %v667 = vpack.c.b16 %v393, %v391
  %v668 = vpack.c.b16 %v394, %v392
  %v669 = vpack.c.b16 %v397, %v395
  %v670 = vpack.c.b16 %v398, %v396
  %v671 = vpack.c.b16 %v401, %v399
  %v672 = vpack.c.b16 %v402, %v400
  %v673 = vpack.c.b16 %v405, %v403
  %v674 = vpack.c.b16 %v406, %v404
  %v675 = vpack.c.b16 %v409, %v407
  %v676 = vpack.c.b16 %v410, %v408
  %v677 = vpack.c.b16 %v413, %v411
  %v678 = vpack.c.b16 %v414, %v412
  %v679 = vpack.c.b16 %v417, %v415
  %v680 = vpack.c.b16 %v418, %v416
  %v681 = vpack.c.b16 %v421, %v419
  %v682 = vpack.c.b16 %v422, %v420
  %v683 = vpack.c.b16 %v425, %v423
  %v684 = vpack.c.b16 %v426, %v424
  %v685 = vpack.c.b16 %v429, %v427
  %v686 = vpack.c.b16 %v430, %v428
  %v687 = vpack.c.b16 %v433, %v431
  %v688 = vpack.c.b16 %v434, %v432
  %v689 = vpack.c.b16 %v437, %v435
  %v690 = vpack.c.b16 %v438, %v436
  %v691 = vpack.c.b16 %v441, %v439
  %v692 = vpack.c.b16 %v442, %v440
  %v693 = vpack.c.b16 %v445, %v443
  %v694 = vpack.c.b16 %v446, %v444
  %v695 = vpack.c.b16 %v449, %v447
  %v696 = vpack.c.b16 %v450, %v448
  %v697 = vpack.c.b16 %v453, %v451
  %v698 = vpack.c.b16 %v454, %v452
  %v699 = vpack.c.b16 %v457, %v455
  %v700 = vpack.c.b16 %v458, %v456
  %v701 = vpack.c.b16 %v461, %v459
  %v702 = vpack.c.b16 %v462, %v460
  %v703 = vpack.c.b16 %v465, %v463
  %v704 = vpack.c.b16 %v466, %v464
  %v705 = vpack.c.b16 %v469, %v467
  %v706 = vpack.c.b16 %v470, %v468
  %v707 = vpack.c.b16 %v473, %v471
  %v708 = vpack.c.b16 %v474, %v472
  %v709 = vpack.c.b16 %v477, %v475
  %v710 = vpack.c.b16 %v478, %v476
  %v711 = vpack.c.b16 %v481, %v479
  %v712 = vpack.c.b16 %v482, %v480
  %v713 = vpack.c.b16 %v485, %v483
  %v714 = vpack.c.b16 %v486, %v484
  %v715 = vpack.c.b16 %v489, %v487
  %v716 = vpack.c.b16 %v490, %v488
  %v717 = vpack.c.b16 %v493, %v491
  %v718 = vpack.c.b16 %v494, %v492
  %v719 = vpack.c.b16 %v497, %v495
  %v720 = vpack.c.b16 %v498, %v496
  %v721 = vpack.c.b16 %v501, %v499
  %v722 = vpack.c.b16 %v502, %v500
  %v723 = vpack.c.b16 %v505, %v503
  %v724 = vpack.c.b16 %v506, %v504
  %v725 = vpack.c.b16 %v509, %v507
  %v726 = vpack.c.b16 %v510, %v508
  %v727 = vpack.c.b16 %v513, %v511
  %v728 = vpack.c.b16 %v514, %v512
  %v729 = vpack.c.b16 %v517, %v515
  %v730 = vpack.c.b16 %v518, %v516
  %v731 = vpack.c.b16 %v521, %v519
  %v732 = vpack.c.b16 %v522, %v520
  %v733 = vpack.c.b16 %v525, %v523
  %v734 = vpack.c.b16 %v526, %v524
  %v735 = vpack.c.b16 %v529, %v527
  %v736 = vpack.c.b16 %v530, %v528
  %v737 = vpack.c.b16 %v533, %v531
  %v738 = vpack.c.b16 %v534, %v532
  %v739 = vpack.c.b16 %v537, %v535
  %v740 = vpack.c.b16 %v538, %v536
  %v741 = vpack.c.b16 %v541, %v539
  %v742 = vpack.c.b16 %v542, %v540
  %v743 = vpack.c.b16 %v545, %v543
  %v744 = vpack.c.b16 %v546, %v544
  %v745 = vpack.c.b16 %v549, %v547
  %v746 = vpack.c.b16 %v550, %v548
  %v747 = vpack.c.b16 %v553, %v551
  %v748 = vpack.c.b16 %v554, %v552
  %v749 = vpack.c.b16 %v557, %v555
  %v750 = vpack.c.b16 %v558, %v556
  %v751 = vpack.c.b16 %v561, %v559
  %v752 = vpack.c.b16 %v562, %v560
  %v753 = vpack.c.b16 %v565, %v563
  %v754 = vpack.c.b16 %v566, %v564
  %v755 = vpack.c.b16 %v569, %v567
  %v756 = vpack.c.b16 %v570, %v568
  %v757 = vpack.c.b16 %v573, %v571
  %v758 = vpack.c.b16 %v574, %v572
  %v759 = vpack.c.b16 %v577, %v575
  %v760 = vpack.c.b16 %v578, %v576
  %v761 = vpack.c.b16 %v581, %v579
  %v762 = vpack.c.b16 %v582, %v580
  %v763 = vpack.c.b16 %v585, %v583
  %v764 = vpack.c.b16 %v586, %v584
  %v765 = vpack.c.b16 %v589, %v587
  %v766 = vpack.c.b16 %v590, %v588
  %v767 = vpack.c.b16 %v593, %v591
  %v768 = vpack.c.b16 %v594, %v592
  %v769 = vpack.c.b16 %v597, %v595
  %v770 = vpack.c.b16 %v598, %v596
  %v771 = vpack.c.b16 %v601, %v599
  %v772 = vpack.c.b16 %v602, %v600
  %v773 = vpack.c.b16 %v605, %v603
  %v774 = vpack.c.b16 %v606, %v604
  %v775 = vpack.c.b16 %v609, %v607
  %v776 = vpack.c.b16 %v610, %v608
  %v777 = vpack.c.b16 %v613, %v611
  %v778 = vpack.c.b16 %v614, %v612
  %v779 = vpack.c.b16 %v617, %v615
  %v780 = vpack.c.b16 %v618, %v616
  %v781 = vpack.c.b16 %v621, %v619
  %v782 = vpack.c.b16 %v622, %v620
  %v783 = vpack.c.b16 %v625, %v623
  %v784 = vpack.c.b16 %v626, %v624
  %v785 = vpack.c.b16 %v629, %v627
  %v786 = vpack.c.b16 %v630, %v628
  %v787 = vpack.c.b16 %v633, %v631
  %v788 = vpack.c.b16 %v634, %v632
  %v789 = vpack.c.b16 %v637, %v635
  %v790 = vpack.c.b16 %v638, %v636
  %v791 = vpack.c.b16 %v641, %v639
  %v792 = vpack.c.b16 %v642, %v640
  %v793 = vpack.c.b16 %v645, %v643
  %v794 = vpack.c.b16 %v646, %v644
  %v795 = vpack.c.b16 %v649, %v647
  %v796 = vpack.c.b16 %v650, %v648
  %v797 = vpack.c.b16 %v653, %v651
  %v798 = vpack.c.b16 %v654, %v652
  %943 = vmatpush.bf16.msra.mxu0 %v669
  %944 = vmatpush.bf16.msra.mxu0 %v667
  %945 = vmatpush.bf16.msra.mxu0 %v665
  %946 = vmatpush.bf16.msra.mxu0 %v663
  %947 = vmatpush.bf16.msra.mxu0 %v661
  %948 = vmatpush.bf16.msra.mxu0 %v659
  %949 = vmatpush.bf16.msra.mxu0 %v657
  %950 = vmatpush.bf16.msra.mxu0 %v655
  %951 = vmatmul.bf16.gmra.mxu0 %v205
  %v952 = vpop.f32.mrf.mxu0
  %v953 = vadd.f32 %v173, %v952
  %v954 = vpop.f32.mrf.mxu0
  %v955 = vadd.f32 %v173, %v954
  %956 = vdwg.mxu0
  %957 = vmatpush.bf16.msra.mxu0 %v685
  %958 = vmatpush.bf16.msra.mxu0 %v683
  %959 = vmatpush.bf16.msra.mxu0 %v681
  %960 = vmatpush.bf16.msra.mxu0 %v679
  %961 = vmatpush.bf16.msra.mxu0 %v677
  %962 = vmatpush.bf16.msra.mxu0 %v675
  %963 = vmatpush.bf16.msra.mxu0 %v673
  %964 = vmatpush.bf16.msra.mxu0 %v671
  %965 = vmatmul.bf16.gmra.mxu0 %v206
  %v966 = vpop.f32.mrf.mxu0
  %v967 = vadd.f32 %v953, %v966
  %v968 = vpop.f32.mrf.mxu0
  %v969 = vadd.f32 %v955, %v968
  %970 = vdwg.mxu0
  %971 = vmatpush.bf16.msra.mxu0 %v701
  %972 = vmatpush.bf16.msra.mxu0 %v699
  %973 = vmatpush.bf16.msra.mxu0 %v697
  %974 = vmatpush.bf16.msra.mxu0 %v695
  %975 = vmatpush.bf16.msra.mxu0 %v693
  %976 = vmatpush.bf16.msra.mxu0 %v691
  %977 = vmatpush.bf16.msra.mxu0 %v689
  %978 = vmatpush.bf16.msra.mxu0 %v687
  %979 = vmatmul.bf16.gmra.mxu0 %v207
  %v980 = vpop.f32.mrf.mxu0
  %v981 = vadd.f32 %v967, %v980
  %v982 = vpop.f32.mrf.mxu0
  %v983 = vadd.f32 %v969, %v982
  %984 = vdwg.mxu0
  %985 = vmatpush.bf16.msra.mxu0 %v717
  %986 = vmatpush.bf16.msra.mxu0 %v715
  %987 = vmatpush.bf16.msra.mxu0 %v713
  %988 = vmatpush.bf16.msra.mxu0 %v711
  %989 = vmatpush.bf16.msra.mxu0 %v709
  %990 = vmatpush.bf16.msra.mxu0 %v707
  %991 = vmatpush.bf16.msra.mxu0 %v705
  %992 = vmatpush.bf16.msra.mxu0 %v703
  %993 = vmatmul.bf16.gmra.mxu0 %v208
  %v994 = vpop.f32.mrf.mxu0
  %v995 = vadd.f32 %v981, %v994
  %v996 = vpop.f32.mrf.mxu0
  %v997 = vadd.f32 %v983, %v996
  %998 = vdwg.mxu0
  %999 = vmatpush.bf16.msra.mxu0 %v733
  %1000 = vmatpush.bf16.msra.mxu0 %v731
  %1001 = vmatpush.bf16.msra.mxu0 %v729
  %1002 = vmatpush.bf16.msra.mxu0 %v727
  %1003 = vmatpush.bf16.msra.mxu0 %v725
  %1004 = vmatpush.bf16.msra.mxu0 %v723
  %1005 = vmatpush.bf16.msra.mxu0 %v721
  %1006 = vmatpush.bf16.msra.mxu0 %v719
  %1007 = vmatmul.bf16.gmra.mxu0 %v209
  %v1008 = vpop.f32.mrf.mxu0
  %v1009 = vadd.f32 %v995, %v1008
  %v1010 = vpop.f32.mrf.mxu0
  %v1011 = vadd.f32 %v997, %v1010
  %1012 = vdwg.mxu0
  %1013 = vmatpush.bf16.msra.mxu0 %v749
  %1014 = vmatpush.bf16.msra.mxu0 %v747
  %1015 = vmatpush.bf16.msra.mxu0 %v745
  %1016 = vmatpush.bf16.msra.mxu0 %v743
  %1017 = vmatpush.bf16.msra.mxu0 %v741
  %1018 = vmatpush.bf16.msra.mxu0 %v739
  %1019 = vmatpush.bf16.msra.mxu0 %v737
  %1020 = vmatpush.bf16.msra.mxu0 %v735
  %1021 = vmatmul.bf16.gmra.mxu0 %v210
  %v1022 = vpop.f32.mrf.mxu0
  %v1023 = vadd.f32 %v1009, %v1022
  %v1024 = vpop.f32.mrf.mxu0
  %v1025 = vadd.f32 %v1011, %v1024
  %1026 = vdwg.mxu0
  %1027 = vmatpush.bf16.msra.mxu0 %v765
  %1028 = vmatpush.bf16.msra.mxu0 %v763
  %1029 = vmatpush.bf16.msra.mxu0 %v761
  %1030 = vmatpush.bf16.msra.mxu0 %v759
  %1031 = vmatpush.bf16.msra.mxu0 %v757
  %1032 = vmatpush.bf16.msra.mxu0 %v755
  %1033 = vmatpush.bf16.msra.mxu0 %v753
  %1034 = vmatpush.bf16.msra.mxu0 %v751
  %1035 = vmatmul.bf16.gmra.mxu0 %v211
  %v1036 = vpop.f32.mrf.mxu0
  %v1037 = vadd.f32 %v1023, %v1036
  %v1038 = vpop.f32.mrf.mxu0
  %v1039 = vadd.f32 %v1025, %v1038
  %1040 = vdwg.mxu0
  %1041 = vmatpush.bf16.msra.mxu0 %v781
  %1042 = vmatpush.bf16.msra.mxu0 %v779
  %1043 = vmatpush.bf16.msra.mxu0 %v777
  %1044 = vmatpush.bf16.msra.mxu0 %v775
  %1045 = vmatpush.bf16.msra.mxu0 %v773
  %1046 = vmatpush.bf16.msra.mxu0 %v771
  %1047 = vmatpush.bf16.msra.mxu0 %v769
  %1048 = vmatpush.bf16.msra.mxu0 %v767
  %1049 = vmatmul.bf16.gmra.mxu0 %v212
  %v1050 = vpop.f32.mrf.mxu0
  %v1051 = vadd.f32 %v1037, %v1050
  %v1052 = vpop.f32.mrf.mxu0
  %v1053 = vadd.f32 %v1039, %v1052
  %1054 = vdwg.mxu0
  %1055 = vmatpush.bf16.msra.mxu0 %v797
  %1056 = vmatpush.bf16.msra.mxu0 %v795
  %1057 = vmatpush.bf16.msra.mxu0 %v793
  %1058 = vmatpush.bf16.msra.mxu0 %v791
  %1059 = vmatpush.bf16.msra.mxu0 %v789
  %1060 = vmatpush.bf16.msra.mxu0 %v787
  %1061 = vmatpush.bf16.msra.mxu0 %v785
  %1062 = vmatpush.bf16.msra.mxu0 %v783
  %1063 = vmatmul.bf16.gmra.mxu0 %v213
  %v1064 = vpop.f32.mrf.mxu0
  %v1065 = vadd.f32 %v1051, %v1064
  %v1066 = vpop.f32.mrf.mxu0
  %v1067 = vadd.f32 %v1053, %v1066
  %1068 = vdwg.mxu0
  %1069 = vmatpush.bf16.msra.mxu0 %v670
  %1070 = vmatpush.bf16.msra.mxu0 %v668
  %1071 = vmatpush.bf16.msra.mxu0 %v666
  %1072 = vmatpush.bf16.msra.mxu0 %v664
  %1073 = vmatpush.bf16.msra.mxu0 %v662
  %1074 = vmatpush.bf16.msra.mxu0 %v660
  %1075 = vmatpush.bf16.msra.mxu0 %v658
  %1076 = vmatpush.bf16.msra.mxu0 %v656
  %1077 = vmatmul.bf16.gmra.mxu0 %v205
  %v1078 = vpop.f32.mrf.mxu0
  %v1079 = vadd.f32 %v174, %v1078
  %v1080 = vpop.f32.mrf.mxu0
  %v1081 = vadd.f32 %v174, %v1080
  %1082 = vdwg.mxu0
  %1083 = vmatpush.bf16.msra.mxu0 %v686
  %1084 = vmatpush.bf16.msra.mxu0 %v684
  %1085 = vmatpush.bf16.msra.mxu0 %v682
  %1086 = vmatpush.bf16.msra.mxu0 %v680
  %1087 = vmatpush.bf16.msra.mxu0 %v678
  %1088 = vmatpush.bf16.msra.mxu0 %v676
  %1089 = vmatpush.bf16.msra.mxu0 %v674
  %1090 = vmatpush.bf16.msra.mxu0 %v672
  %1091 = vmatmul.bf16.gmra.mxu0 %v206
  %v1092 = vpop.f32.mrf.mxu0
  %v1093 = vadd.f32 %v1079, %v1092
  %v1094 = vpop.f32.mrf.mxu0
  %v1095 = vadd.f32 %v1081, %v1094
  %1096 = vdwg.mxu0
  %1097 = vmatpush.bf16.msra.mxu0 %v702
  %1098 = vmatpush.bf16.msra.mxu0 %v700
  %1099 = vmatpush.bf16.msra.mxu0 %v698
  %1100 = vmatpush.bf16.msra.mxu0 %v696
  %1101 = vmatpush.bf16.msra.mxu0 %v694
  %1102 = vmatpush.bf16.msra.mxu0 %v692
  %1103 = vmatpush.bf16.msra.mxu0 %v690
  %1104 = vmatpush.bf16.msra.mxu0 %v688
  %1105 = vmatmul.bf16.gmra.mxu0 %v207
  %v1106 = vpop.f32.mrf.mxu0
  %v1107 = vadd.f32 %v1093, %v1106
  %v1108 = vpop.f32.mrf.mxu0
  %v1109 = vadd.f32 %v1095, %v1108
  %1110 = vdwg.mxu0
  %1111 = vmatpush.bf16.msra.mxu0 %v718
  %1112 = vmatpush.bf16.msra.mxu0 %v716
  %1113 = vmatpush.bf16.msra.mxu0 %v714
  %1114 = vmatpush.bf16.msra.mxu0 %v712
  %1115 = vmatpush.bf16.msra.mxu0 %v710
  %1116 = vmatpush.bf16.msra.mxu0 %v708
  %1117 = vmatpush.bf16.msra.mxu0 %v706
  %1118 = vmatpush.bf16.msra.mxu0 %v704
  %1119 = vmatmul.bf16.gmra.mxu0 %v208
  %v1120 = vpop.f32.mrf.mxu0
  %v1121 = vadd.f32 %v1107, %v1120
  %v1122 = vpop.f32.mrf.mxu0
  %v1123 = vadd.f32 %v1109, %v1122
  %1124 = vdwg.mxu0
  %1125 = vmatpush.bf16.msra.mxu0 %v734
  %1126 = vmatpush.bf16.msra.mxu0 %v732
  %1127 = vmatpush.bf16.msra.mxu0 %v730
  %1128 = vmatpush.bf16.msra.mxu0 %v728
  %1129 = vmatpush.bf16.msra.mxu0 %v726
  %1130 = vmatpush.bf16.msra.mxu0 %v724
  %1131 = vmatpush.bf16.msra.mxu0 %v722
  %1132 = vmatpush.bf16.msra.mxu0 %v720
  %1133 = vmatmul.bf16.gmra.mxu0 %v209
  %v1134 = vpop.f32.mrf.mxu0
  %v1135 = vadd.f32 %v1121, %v1134
  %v1136 = vpop.f32.mrf.mxu0
  %v1137 = vadd.f32 %v1123, %v1136
  %1138 = vdwg.mxu0
  %1139 = vmatpush.bf16.msra.mxu0 %v750
  %1140 = vmatpush.bf16.msra.mxu0 %v748
  %1141 = vmatpush.bf16.msra.mxu0 %v746
  %1142 = vmatpush.bf16.msra.mxu0 %v744
  %1143 = vmatpush.bf16.msra.mxu0 %v742
  %1144 = vmatpush.bf16.msra.mxu0 %v740
  %1145 = vmatpush.bf16.msra.mxu0 %v738
  %1146 = vmatpush.bf16.msra.mxu0 %v736
  %1147 = vmatmul.bf16.gmra.mxu0 %v210
  %v1148 = vpop.f32.mrf.mxu0
  %v1149 = vadd.f32 %v1135, %v1148
  %v1150 = vpop.f32.mrf.mxu0
  %v1151 = vadd.f32 %v1137, %v1150
  %1152 = vdwg.mxu0
  %1153 = vmatpush.bf16.msra.mxu0 %v766
  %1154 = vmatpush.bf16.msra.mxu0 %v764
  %1155 = vmatpush.bf16.msra.mxu0 %v762
  %1156 = vmatpush.bf16.msra.mxu0 %v760
  %1157 = vmatpush.bf16.msra.mxu0 %v758
  %1158 = vmatpush.bf16.msra.mxu0 %v756
  %1159 = vmatpush.bf16.msra.mxu0 %v754
  %1160 = vmatpush.bf16.msra.mxu0 %v752
  %1161 = vmatmul.bf16.gmra.mxu0 %v211
  %v1162 = vpop.f32.mrf.mxu0
  %v1163 = vadd.f32 %v1149, %v1162
  %v1164 = vpop.f32.mrf.mxu0
  %v1165 = vadd.f32 %v1151, %v1164
  %1166 = vdwg.mxu0
  %1167 = vmatpush.bf16.msra.mxu0 %v782
  %1168 = vmatpush.bf16.msra.mxu0 %v780
  %1169 = vmatpush.bf16.msra.mxu0 %v778
  %1170 = vmatpush.bf16.msra.mxu0 %v776
  %1171 = vmatpush.bf16.msra.mxu0 %v774
  %1172 = vmatpush.bf16.msra.mxu0 %v772
  %1173 = vmatpush.bf16.msra.mxu0 %v770
  %1174 = vmatpush.bf16.msra.mxu0 %v768
  %1175 = vmatmul.bf16.gmra.mxu0 %v212
  %v1176 = vpop.f32.mrf.mxu0
  %v1177 = vadd.f32 %v1163, %v1176
  %v1178 = vpop.f32.mrf.mxu0
  %v1179 = vadd.f32 %v1165, %v1178
  %1180 = vdwg.mxu0
  %1181 = vmatpush.bf16.msra.mxu0 %v798
  %1182 = vmatpush.bf16.msra.mxu0 %v796
  %1183 = vmatpush.bf16.msra.mxu0 %v794
  %1184 = vmatpush.bf16.msra.mxu0 %v792
  %1185 = vmatpush.bf16.msra.mxu0 %v790
  %1186 = vmatpush.bf16.msra.mxu0 %v788
  %1187 = vmatpush.bf16.msra.mxu0 %v786
  %1188 = vmatpush.bf16.msra.mxu0 %v784
  %1189 = vmatmul.bf16.gmra.mxu0 %v213
  %v1190 = vpop.f32.mrf.mxu0
  %v1191 = vadd.f32 %v1177, %v1190
  %v1192 = vpop.f32.mrf.mxu0
  %v1193 = vadd.f32 %v1179, %v1192
  %1194 = vdwg.mxu0
  %v1195 = vmax.f32 %v1065, 0.0
  %v1196 = vmax.f32 %v1191, 0.0
  %v1197 = vmax.f32 %v1067, 0.0
  %v1198 = vmax.f32 %v1193, 0.0
  %v1199 = vpack.c.bf16 %v1196, %v1195
  %v1200 = vpack.c.bf16 %v1198, %v1197
  %1201 = vst [vmem:[%s3] sm:$0xff] %v1199
  %1202 = vst [vmem:[%s3 + $0x8] sm:$0xff] %v1200
  %v1203 = vadd.f32 %v1195, %v1197
  %v1204 = vrot.slane %v1203, 4
  %v1205 = vadd.f32 %v1203, %v1204
  %v1206 = vrot.slane %v1205, 2
  %v1207 = vadd.f32 %v1205, %v1206
  %v1208 = vrot.slane %v1207, 1
  %v1209 = vadd.f32 %v1207, %v1208
  %v1210 = vadd.f32 %v1196, %v1198
  %v1211 = vrot.slane %v1210, 4
  %v1212 = vadd.f32 %v1210, %v1211
  %v1213 = vrot.slane %v1212, 2
  %v1214 = vadd.f32 %v1212, %v1213
  %v1215 = vrot.slane %v1214, 1
  %v1216 = vadd.f32 %v1214, %v1215
  %v1217 = vmul.f32 %v1195, %v1195
  %v1218 = vmul.f32 %v1196, %v1196
  %v1219 = vmul.f32 %v1197, %v1197
  %v1220 = vmul.f32 %v1198, %v1198
  %v1221 = vadd.f32 %v1217, %v1219
  %v1222 = vrot.slane %v1221, 4
  %v1223 = vadd.f32 %v1221, %v1222
  %v1224 = vrot.slane %v1223, 2
  %v1225 = vadd.f32 %v1223, %v1224
  %v1226 = vrot.slane %v1225, 1
  %v1227 = vadd.f32 %v1225, %v1226
  %v1228 = vadd.f32 %v1218, %v1220
  %v1229 = vrot.slane %v1228, 4
  %v1230 = vadd.f32 %v1228, %v1229
  %v1231 = vrot.slane %v1230, 2
  %v1232 = vadd.f32 %v1230, %v1231
  %v1233 = vrot.slane %v1232, 1
  %v1234 = vadd.f32 %v1232, %v1233
  %1235 = vst [vmem:[%s4] sm:$0xff] %v1209
  %1236 = vst [vmem:[%s4 + $0x8] sm:$0xff] %v1216
  %1237 = vst [vmem:[%s5] sm:$0xff] %v1227
  %1238 = vst [vmem:[%s5 + $0x8] sm:$0xff] %v1234
  // Predicated region
  $region14: #{_lambda_.12} parent=0 // pred_check
    _
  $region15: #{_lambda_.12} parent=0 // pred_check_branch
    %1240 = sbr.rel (0) target = $region17
  $region16: #{_lambda_.12} parent=0 // pred_region
    _
  $region17: #{_lambda_.12} parent=0 // pred_fallthru
    _
  // Predicated region
  $region18: #{_lambda_.12} parent=0 // pred_check
    _
  $region19: #{_lambda_.12} parent=0 // pred_check_branch
    %1242 = sbr.rel (0) target = $region21
  $region20: #{_lambda_.12} parent=0 // pred_region
    _
  $region21: #{_lambda_.12} parent=0 // pred_fallthru
    _
  // Predicated region
  $region22: #{_lambda_.12} parent=0 // pred_check
    _
  $region23: #{_lambda_.12} parent=0 // pred_check_branch
    %1244 = sbr.rel (0) target = $region25
  $region24: #{_lambda_.12} parent=0 // pred_region
    _
  $region25: #{_lambda_.12} parent=0 // pred_fallthru
    _
  // Predicated region
  $region26: #{_lambda_.12} parent=0 // pred_check
    _
  $region27: #{_lambda_.12} parent=0 // pred_check_branch
    %1246 = sbr.rel (0) target = $region29
  $region28: #{_lambda_.12} parent=0 // pred_region
    _
  $region29: #{_lambda_.12} parent=0 // pred_fallthru
    _
  // Predicated region
  $region30: #{_lambda_.12} parent=0 // pred_check
    _
  $region31: #{_lambda_.12} parent=0 // pred_check_branch
    %1248 = sbr.rel (0) target = $region33
  $region32: #{_lambda_.12} parent=0 // pred_region
    _
  $region33: #{_lambda_.12} parent=0 // pred_fallthru
    _
  // Predicated region
  $region34: #{_lambda_.12} parent=0 // pred_check
    _
  $region35: #{_lambda_.12} parent=0 // pred_check_branch
    %1250 = sbr.rel (0) target = $region37
  $region36: #{_lambda_.12} parent=0 // pred_region
    _
  $region37: #{_lambda_.12} parent=0 // pred_fallthru
    _

// kernel: tile.64
$region0: #{tile.64}
  #allocation0 [shape = 's32[1]{0}', space=sflag, size = 0x4, scoped, tag = 'scoped memory for tile.64']
  %s0 = inlined_call_operand.vmem [shape: f32[64], index: 0, kind: input, shape index: {}]
  %s1 = inlined_call_operand.vmem [shape: f32[4,64], index: 1, kind: output, shape index: {}]
  // Predicated region
  $region2: #{tile.64} parent=0 // pred_check
    _
  $region3: #{tile.64} parent=0 // pred_check_branch
    %3 = sbr.rel (0) target = $region5
  $region4: #{tile.64} parent=0 // pred_region
    _
  $region5: #{tile.64} parent=0 // pred_fallthru
    _
  %v4 = vld [vmem:[%s0] ss:$0 sm:$0xff]
  %5 = vst [vmem:[%s1] sm:$0xf] %v4

// kernel: mul.67
$region0: #{mul.67}
  %s0 = inlined_call_operand.vmem [shape: f32[4,64], index: 0, kind: input, shape index: {}]
  %s1 = inlined_call_operand.vmem [shape: f32[256], index: 1, kind: output, shape index: {}]
  $region1: #{mul.67} parent=0
    #allocation0 [shape = 'u8[4096]{0}', space=vmem, size = 0x1000, scoped, tag = 'scoped mem for output reshape']
    #allocation1 [shape = 'u8[4096]{0}', space=vmem, size = 0x1000, scoped, tag = 'scoped mem for input reshape']
    %s3 = ssub.s32 16, 1
    %v4 = vld [vmem:[%s0] sm:%s3]
    %5 = vst [vmem:[#allocation1] sm:%s3] %v4
    %s6 = smov 3
    %v7 = vld [vmem:[#allocation1] ss:$2 sm:%s6]
    %vm8 = vcmask 523264
    %9 = vst.msk [vmem:[#allocation0] sm:$0x3] %vm8, %v7
    %s10 = scalar_lea.vmem [#allocation1], 1
    %s11 = smov 3
    %v12 = vld [vmem:[%s10] ss:$2 sm:%s11]
    %13 = vrot.lane.b32.xlu0 %v12, 64
    %v14 = vpop.permute.xlu0 %13
    %vm15 = vcmask 1048064
    %16 = vst.msk [vmem:[#allocation0] sm:$0x3] %vm15, %v14
    %s18 = ssub.s32 4, 1
    %v19 = vld [vmem:[#allocation0] sm:%s18]
    %s21 = ssub.s32 4, 1
    %22 = vst [vmem:[%s1] sm:%s21] %v19

// kernel: _lambda_.13
$region0: #{_lambda_.13}
  #allocation0 [shape = 'u32[]', space=smem, size = 0x4, offset = 0x4, fixed_abs, tag = 'smem constant byte address 0x4 - core index']
  #allocation1 [shape = 'u32[72,128]{1,0:T(1,128)}', space=vmem, size = 0x9000, scoped, tag = 'internal scratch']
  %s0 = inlined_call_operand.vmem [shape: bf16[16,1024], index: 0, kind: input, shape index: {}]
  %s1 = inlined_call_operand.vmem [shape: bf16[1024,512], index: 1, kind: input, shape index: {}]
  %s2 = inlined_call_operand.vmem [shape: f32[1,512], index: 2, kind: input, shape index: {}]
  %s3 = inlined_call_operand.vmem [shape: bf16[16,512], index: 3, kind: output, shape index: {0}]
  %s4 = inlined_call_operand.vmem [shape: f32[8,512], index: 4, kind: output, shape index: {1}]
  %s5 = inlined_call_operand.vmem [shape: f32[8,512], index: 5, kind: output, shape index: {2}]
  %6 = xla_tuple %s3, %s4, %s5
  %s7 = sld [smem:[#allocation0]]
  $region38: #{_lambda_.13} parent=0
    _
  %s9 = ssub.s32 1, %s7
  %s10 = scalar_select 0, %s9, %s7
  // Predicated region
  $region2: #{_lambda_.13} parent=0 // pred_check
    _
  $region3: #{_lambda_.13} parent=0 // pred_check_branch
    %12 = sbr.rel (0) target = $region5
  $region4: #{_lambda_.13} parent=0 // pred_region
    _
  $region5: #{_lambda_.13} parent=0 // pred_fallthru
    _
  // Predicated region
  $region6: #{_lambda_.13} parent=0 // pred_check
    _
  $region7: #{_lambda_.13} parent=0 // pred_check_branch
    %14 = sbr.rel (0) target = $region9
  $region8: #{_lambda_.13} parent=0 // pred_region
    _
  $region9: #{_lambda_.13} parent=0 // pred_fallthru
    _
  // Predicated region
  $region10: #{_lambda_.13} parent=0 // pred_check
    _
  $region11: #{_lambda_.13} parent=0 // pred_check_branch
    %16 = sbr.rel (0) target = $region13
  $region12: #{_lambda_.13} parent=0 // pred_region
    _
  $region13: #{_lambda_.13} parent=0 // pred_fallthru
    _
  %v17 = vld [vmem:[%s0] sm:$0xff]
  %v18 = vld [vmem:[%s0 + $0x8] sm:$0xff]
  %v19 = vld [vmem:[%s0 + $0x10] sm:$0xff]
  %v20 = vld [vmem:[%s0 + $0x18] sm:$0xff]
  %v21 = vld [vmem:[%s0 + $0x20] sm:$0xff]
  %v22 = vld [vmem:[%s0 + $0x28] sm:$0xff]
  %v23 = vld [vmem:[%s0 + $0x30] sm:$0xff]
  %v24 = vld [vmem:[%s0 + $0x38] sm:$0xff]
  %v25 = vld [vmem:[%s1] sm:$0xff]
  %v26 = vld [vmem:[%s1 + $0x8] sm:$0xff]
  %v27 = vld [vmem:[%s1 + $0x10] sm:$0xff]
  %v28 = vld [vmem:[%s1 + $0x18] sm:$0xff]
  %v29 = vld [vmem:[%s1 + $0x20] sm:$0xff]
  %v30 = vld [vmem:[%s1 + $0x28] sm:$0xff]
  %v31 = vld [vmem:[%s1 + $0x30] sm:$0xff]
  %v32 = vld [vmem:[%s1 + $0x38] sm:$0xff]
  %v33 = vld [vmem:[%s1 + $0x40] sm:$0xff]
  %v34 = vld [vmem:[%s1 + $0x48] sm:$0xff]
  %v35 = vld [vmem:[%s1 + $0x50] sm:$0xff]
  %v36 = vld [vmem:[%s1 + $0x58] sm:$0xff]
  %v37 = vld [vmem:[%s1 + $0x60] sm:$0xff]
  %v38 = vld [vmem:[%s1 + $0x68] sm:$0xff]
  %v39 = vld [vmem:[%s1 + $0x70] sm:$0xff]
  %v40 = vld [vmem:[%s1 + $0x78] sm:$0xff]
  %v41 = vld [vmem:[%s1 + $0x80] sm:$0xff]
  %v42 = vld [vmem:[%s1 + $0x88] sm:$0xff]
  %v43 = vld [vmem:[%s1 + $0x90] sm:$0xff]
  %v44 = vld [vmem:[%s1 + $0x98] sm:$0xff]
  %v45 = vld [vmem:[%s1 + $0xa0] sm:$0xff]
  %v46 = vld [vmem:[%s1 + $0xa8] sm:$0xff]
  %v47 = vld [vmem:[%s1 + $0xb0] sm:$0xff]
  %v48 = vld [vmem:[%s1 + $0xb8] sm:$0xff]
  %v49 = vld [vmem:[%s1 + $0xc0] sm:$0xff]
  %v50 = vld [vmem:[%s1 + $0xc8] sm:$0xff]
  %v51 = vld [vmem:[%s1 + $0xd0] sm:$0xff]
  %v52 = vld [vmem:[%s1 + $0xd8] sm:$0xff]
  %v53 = vld [vmem:[%s1 + $0xe0] sm:$0xff]
  %v54 = vld [vmem:[%s1 + $0xe8] sm:$0xff]
  %v55 = vld [vmem:[%s1 + $0xf0] sm:$0xff]
  %v56 = vld [vmem:[%s1 + $0xf8] sm:$0xff]
  %v57 = vld [vmem:[%s1 + $0x100] sm:$0xff]
  %v58 = vld [vmem:[%s1 + $0x108] sm:$0xff]
  %v59 = vld [vmem:[%s1 + $0x110] sm:$0xff]
  %v60 = vld [vmem:[%s1 + $0x118] sm:$0xff]
  %v61 = vld [vmem:[%s1 + $0x120] sm:$0xff]
  %v62 = vld [vmem:[%s1 + $0x128] sm:$0xff]
  %v63 = vld [vmem:[%s1 + $0x130] sm:$0xff]
  %v64 = vld [vmem:[%s1 + $0x138] sm:$0xff]
  %v65 = vld [vmem:[%s1 + $0x140] sm:$0xff]
  %v66 = vld [vmem:[%s1 + $0x148] sm:$0xff]
  %v67 = vld [vmem:[%s1 + $0x150] sm:$0xff]
  %v68 = vld [vmem:[%s1 + $0x158] sm:$0xff]
  %v69 = vld [vmem:[%s1 + $0x160] sm:$0xff]
  %v70 = vld [vmem:[%s1 + $0x168] sm:$0xff]
  %v71 = vld [vmem:[%s1 + $0x170] sm:$0xff]
  %v72 = vld [vmem:[%s1 + $0x178] sm:$0xff]
  %v73 = vld [vmem:[%s1 + $0x180] sm:$0xff]
  %v74 = vld [vmem:[%s1 + $0x188] sm:$0xff]
  %v75 = vld [vmem:[%s1 + $0x190] sm:$0xff]
  %v76 = vld [vmem:[%s1 + $0x198] sm:$0xff]
  %v77 = vld [vmem:[%s1 + $0x1a0] sm:$0xff]
  %v78 = vld [vmem:[%s1 + $0x1a8] sm:$0xff]
  %v79 = vld [vmem:[%s1 + $0x1b0] sm:$0xff]
  %v80 = vld [vmem:[%s1 + $0x1b8] sm:$0xff]
  %v81 = vld [vmem:[%s1 + $0x1c0] sm:$0xff]
  %v82 = vld [vmem:[%s1 + $0x1c8] sm:$0xff]
  %v83 = vld [vmem:[%s1 + $0x1d0] sm:$0xff]
  %v84 = vld [vmem:[%s1 + $0x1d8] sm:$0xff]
  %v85 = vld [vmem:[%s1 + $0x1e0] sm:$0xff]
  %v86 = vld [vmem:[%s1 + $0x1e8] sm:$0xff]
  %v87 = vld [vmem:[%s1 + $0x1f0] sm:$0xff]
  %v88 = vld [vmem:[%s1 + $0x1f8] sm:$0xff]
  %v89 = vld [vmem:[%s1 + $0x200] sm:$0xff]
  %v90 = vld [vmem:[%s1 + $0x208] sm:$0xff]
  %v91 = vld [vmem:[%s1 + $0x210] sm:$0xff]
  %v92 = vld [vmem:[%s1 + $0x218] sm:$0xff]
  %v93 = vld [vmem:[%s1 + $0x220] sm:$0xff]
  %v94 = vld [vmem:[%s1 + $0x228] sm:$0xff]
  %v95 = vld [vmem:[%s1 + $0x230] sm:$0xff]
  %v96 = vld [vmem:[%s1 + $0x238] sm:$0xff]
  %v97 = vld [vmem:[%s1 + $0x240] sm:$0xff]
  %v98 = vld [vmem:[%s1 + $0x248] sm:$0xff]
  %v99 = vld [vmem:[%s1 + $0x250] sm:$0xff]
  %v100 = vld [vmem:[%s1 + $0x258] sm:$0xff]
  %v101 = vld [vmem:[%s1 + $0x260] sm:$0xff]
  %v102 = vld [vmem:[%s1 + $0x268] sm:$0xff]
  %v103 = vld [vmem:[%s1 + $0x270] sm:$0xff]
  %v104 = vld [vmem:[%s1 + $0x278] sm:$0xff]
  %v105 = vld [vmem:[%s1 + $0x280] sm:$0xff]
  %v106 = vld [vmem:[%s1 + $0x288] sm:$0xff]
  %v107 = vld [vmem:[%s1 + $0x290] sm:$0xff]
  %v108 = vld [vmem:[%s1 + $0x298] sm:$0xff]
  %v109 = vld [vmem:[%s1 + $0x2a0] sm:$0xff]
  %v110 = vld [vmem:[%s1 + $0x2a8] sm:$0xff]
  %v111 = vld [vmem:[%s1 + $0x2b0] sm:$0xff]
  %v112 = vld [vmem:[%s1 + $0x2b8] sm:$0xff]
  %v113 = vld [vmem:[%s1 + $0x2c0] sm:$0xff]
  %v114 = vld [vmem:[%s1 + $0x2c8] sm:$0xff]
  %v115 = vld [vmem:[%s1 + $0x2d0] sm:$0xff]
  %v116 = vld [vmem:[%s1 + $0x2d8] sm:$0xff]
  %v117 = vld [vmem:[%s1 + $0x2e0] sm:$0xff]
  %v118 = vld [vmem:[%s1 + $0x2e8] sm:$0xff]
  %v119 = vld [vmem:[%s1 + $0x2f0] sm:$0xff]
  %v120 = vld [vmem:[%s1 + $0x2f8] sm:$0xff]
  %v121 = vld [vmem:[%s1 + $0x300] sm:$0xff]
  %v122 = vld [vmem:[%s1 + $0x308] sm:$0xff]
  %v123 = vld [vmem:[%s1 + $0x310] sm:$0xff]
  %v124 = vld [vmem:[%s1 + $0x318] sm:$0xff]
  %v125 = vld [vmem:[%s1 + $0x320] sm:$0xff]
  %v126 = vld [vmem:[%s1 + $0x328] sm:$0xff]
  %v127 = vld [vmem:[%s1 + $0x330] sm:$0xff]
  %v128 = vld [vmem:[%s1 + $0x338] sm:$0xff]
  %v129 = vld [vmem:[%s1 + $0x340] sm:$0xff]
  %v130 = vld [vmem:[%s1 + $0x348] sm:$0xff]
  %v131 = vld [vmem:[%s1 + $0x350] sm:$0xff]
  %v132 = vld [vmem:[%s1 + $0x358] sm:$0xff]
  %v133 = vld [vmem:[%s1 + $0x360] sm:$0xff]
  %v134 = vld [vmem:[%s1 + $0x368] sm:$0xff]
  %v135 = vld [vmem:[%s1 + $0x370] sm:$0xff]
  %v136 = vld [vmem:[%s1 + $0x378] sm:$0xff]
  %v137 = vld [vmem:[%s1 + $0x380] sm:$0xff]
  %v138 = vld [vmem:[%s1 + $0x388] sm:$0xff]
  %v139 = vld [vmem:[%s1 + $0x390] sm:$0xff]
  %v140 = vld [vmem:[%s1 + $0x398] sm:$0xff]
  %v141 = vld [vmem:[%s1 + $0x3a0] sm:$0xff]
  %v142 = vld [vmem:[%s1 + $0x3a8] sm:$0xff]
  %v143 = vld [vmem:[%s1 + $0x3b0] sm:$0xff]
  %v144 = vld [vmem:[%s1 + $0x3b8] sm:$0xff]
  %v145 = vld [vmem:[%s1 + $0x3c0] sm:$0xff]
  %v146 = vld [vmem:[%s1 + $0x3c8] sm:$0xff]
  %v147 = vld [vmem:[%s1 + $0x3d0] sm:$0xff]
  %v148 = vld [vmem:[%s1 + $0x3d8] sm:$0xff]
  %v149 = vld [vmem:[%s1 + $0x3e0] sm:$0xff]
  %v150 = vld [vmem:[%s1 + $0x3e8] sm:$0xff]
  %v151 = vld [vmem:[%s1 + $0x3f0] sm:$0xff]
  %v152 = vld [vmem:[%s1 + $0x3f8] sm:$0xff]
  %v153 = vld [vmem:[%s1 + $0x400] sm:$0xff]
  %v154 = vld [vmem:[%s1 + $0x408] sm:$0xff]
  %v155 = vld [vmem:[%s1 + $0x410] sm:$0xff]
  %v156 = vld [vmem:[%s1 + $0x418] sm:$0xff]
  %v157 = vld [vmem:[%s1 + $0x420] sm:$0xff]
  %v158 = vld [vmem:[%s1 + $0x428] sm:$0xff]
  %v159 = vld [vmem:[%s1 + $0x430] sm:$0xff]
  %v160 = vld [vmem:[%s1 + $0x438] sm:$0xff]
  %v161 = vld [vmem:[%s1 + $0x440] sm:$0xff]
  %v162 = vld [vmem:[%s1 + $0x448] sm:$0xff]
  %v163 = vld [vmem:[%s1 + $0x450] sm:$0xff]
  %v164 = vld [vmem:[%s1 + $0x458] sm:$0xff]
  %v165 = vld [vmem:[%s1 + $0x460] sm:$0xff]
  %v166 = vld [vmem:[%s1 + $0x468] sm:$0xff]
  %v167 = vld [vmem:[%s1 + $0x470] sm:$0xff]
  %v168 = vld [vmem:[%s1 + $0x478] sm:$0xff]
  %v169 = vld [vmem:[%s1 + $0x480] sm:$0xff]
  %v170 = vld [vmem:[%s1 + $0x488] sm:$0xff]
  %v171 = vld [vmem:[%s1 + $0x490] sm:$0xff]
  %v172 = vld [vmem:[%s1 + $0x498] sm:$0xff]
  %v173 = vld [vmem:[%s1 + $0x4a0] sm:$0xff]
  %v174 = vld [vmem:[%s1 + $0x4a8] sm:$0xff]
  %v175 = vld [vmem:[%s1 + $0x4b0] sm:$0xff]
  %v176 = vld [vmem:[%s1 + $0x4b8] sm:$0xff]
  %v177 = vld [vmem:[%s1 + $0x4c0] sm:$0xff]
  %v178 = vld [vmem:[%s1 + $0x4c8] sm:$0xff]
  %v179 = vld [vmem:[%s1 + $0x4d0] sm:$0xff]
  %v180 = vld [vmem:[%s1 + $0x4d8] sm:$0xff]
  %v181 = vld [vmem:[%s1 + $0x4e0] sm:$0xff]
  %v182 = vld [vmem:[%s1 + $0x4e8] sm:$0xff]
  %v183 = vld [vmem:[%s1 + $0x4f0] sm:$0xff]
  %v184 = vld [vmem:[%s1 + $0x4f8] sm:$0xff]
  %v185 = vld [vmem:[%s1 + $0x500] sm:$0xff]
  %v186 = vld [vmem:[%s1 + $0x508] sm:$0xff]
  %v187 = vld [vmem:[%s1 + $0x510] sm:$0xff]
  %v188 = vld [vmem:[%s1 + $0x518] sm:$0xff]
  %v189 = vld [vmem:[%s1 + $0x520] sm:$0xff]
  %v190 = vld [vmem:[%s1 + $0x528] sm:$0xff]
  %v191 = vld [vmem:[%s1 + $0x530] sm:$0xff]
  %v192 = vld [vmem:[%s1 + $0x538] sm:$0xff]
  %v193 = vld [vmem:[%s1 + $0x540] sm:$0xff]
  %v194 = vld [vmem:[%s1 + $0x548] sm:$0xff]
  %v195 = vld [vmem:[%s1 + $0x550] sm:$0xff]
  %v196 = vld [vmem:[%s1 + $0x558] sm:$0xff]
  %v197 = vld [vmem:[%s1 + $0x560] sm:$0xff]
  %v198 = vld [vmem:[%s1 + $0x568] sm:$0xff]
  %v199 = vld [vmem:[%s1 + $0x570] sm:$0xff]
  %v200 = vld [vmem:[%s1 + $0x578] sm:$0xff]
  %v201 = vld [vmem:[%s1 + $0x580] sm:$0xff]
  %v202 = vld [vmem:[%s1 + $0x588] sm:$0xff]
  %v203 = vld [vmem:[%s1 + $0x590] sm:$0xff]
  %v204 = vld [vmem:[%s1 + $0x598] sm:$0xff]
  %v205 = vld [vmem:[%s1 + $0x5a0] sm:$0xff]
  %v206 = vld [vmem:[%s1 + $0x5a8] sm:$0xff]
  %v207 = vld [vmem:[%s1 + $0x5b0] sm:$0xff]
  %v208 = vld [vmem:[%s1 + $0x5b8] sm:$0xff]
  %v209 = vld [vmem:[%s1 + $0x5c0] sm:$0xff]
  %v210 = vld [vmem:[%s1 + $0x5c8] sm:$0xff]
  %v211 = vld [vmem:[%s1 + $0x5d0] sm:$0xff]
  %v212 = vld [vmem:[%s1 + $0x5d8] sm:$0xff]
  %v213 = vld [vmem:[%s1 + $0x5e0] sm:$0xff]
  %v214 = vld [vmem:[%s1 + $0x5e8] sm:$0xff]
  %v215 = vld [vmem:[%s1 + $0x5f0] sm:$0xff]
  %v216 = vld [vmem:[%s1 + $0x5f8] sm:$0xff]
  %v217 = vld [vmem:[%s1 + $0x600] sm:$0xff]
  %v218 = vld [vmem:[%s1 + $0x608] sm:$0xff]
  %v219 = vld [vmem:[%s1 + $0x610] sm:$0xff]
  %v220 = vld [vmem:[%s1 + $0x618] sm:$0xff]
  %v221 = vld [vmem:[%s1 + $0x620] sm:$0xff]
  %v222 = vld [vmem:[%s1 + $0x628] sm:$0xff]
  %v223 = vld [vmem:[%s1 + $0x630] sm:$0xff]
  %v224 = vld [vmem:[%s1 + $0x638] sm:$0xff]
  %v225 = vld [vmem:[%s1 + $0x640] sm:$0xff]
  %v226 = vld [vmem:[%s1 + $0x648] sm:$0xff]
  %v227 = vld [vmem:[%s1 + $0x650] sm:$0xff]
  %v228 = vld [vmem:[%s1 + $0x658] sm:$0xff]
  %v229 = vld [vmem:[%s1 + $0x660] sm:$0xff]
  %v230 = vld [vmem:[%s1 + $0x668] sm:$0xff]
  %v231 = vld [vmem:[%s1 + $0x670] sm:$0xff]
  %v232 = vld [vmem:[%s1 + $0x678] sm:$0xff]
  %v233 = vld [vmem:[%s1 + $0x680] sm:$0xff]
  %v234 = vld [vmem:[%s1 + $0x688] sm:$0xff]
  %v235 = vld [vmem:[%s1 + $0x690] sm:$0xff]
  %v236 = vld [vmem:[%s1 + $0x698] sm:$0xff]
  %v237 = vld [vmem:[%s1 + $0x6a0] sm:$0xff]
  %v238 = vld [vmem:[%s1 + $0x6a8] sm:$0xff]
  %v239 = vld [vmem:[%s1 + $0x6b0] sm:$0xff]
  %v240 = vld [vmem:[%s1 + $0x6b8] sm:$0xff]
  %v241 = vld [vmem:[%s1 + $0x6c0] sm:$0xff]
  %v242 = vld [vmem:[%s1 + $0x6c8] sm:$0xff]
  %v243 = vld [vmem:[%s1 + $0x6d0] sm:$0xff]
  %v244 = vld [vmem:[%s1 + $0x6d8] sm:$0xff]
  %v245 = vld [vmem:[%s1 + $0x6e0] sm:$0xff]
  %v246 = vld [vmem:[%s1 + $0x6e8] sm:$0xff]
  %v247 = vld [vmem:[%s1 + $0x6f0] sm:$0xff]
  %v248 = vld [vmem:[%s1 + $0x6f8] sm:$0xff]
  %v249 = vld [vmem:[%s1 + $0x700] sm:$0xff]
  %v250 = vld [vmem:[%s1 + $0x708] sm:$0xff]
  %v251 = vld [vmem:[%s1 + $0x710] sm:$0xff]
  %v252 = vld [vmem:[%s1 + $0x718] sm:$0xff]
  %v253 = vld [vmem:[%s1 + $0x720] sm:$0xff]
  %v254 = vld [vmem:[%s1 + $0x728] sm:$0xff]
  %v255 = vld [vmem:[%s1 + $0x730] sm:$0xff]
  %v256 = vld [vmem:[%s1 + $0x738] sm:$0xff]
  %v257 = vld [vmem:[%s1 + $0x740] sm:$0xff]
  %v258 = vld [vmem:[%s1 + $0x748] sm:$0xff]
  %v259 = vld [vmem:[%s1 + $0x750] sm:$0xff]
  %v260 = vld [vmem:[%s1 + $0x758] sm:$0xff]
  %v261 = vld [vmem:[%s1 + $0x760] sm:$0xff]
  %v262 = vld [vmem:[%s1 + $0x768] sm:$0xff]
  %v263 = vld [vmem:[%s1 + $0x770] sm:$0xff]
  %v264 = vld [vmem:[%s1 + $0x778] sm:$0xff]
  %v265 = vld [vmem:[%s1 + $0x780] sm:$0xff]
  %v266 = vld [vmem:[%s1 + $0x788] sm:$0xff]
  %v267 = vld [vmem:[%s1 + $0x790] sm:$0xff]
  %v268 = vld [vmem:[%s1 + $0x798] sm:$0xff]
  %v269 = vld [vmem:[%s1 + $0x7a0] sm:$0xff]
  %v270 = vld [vmem:[%s1 + $0x7a8] sm:$0xff]
  %v271 = vld [vmem:[%s1 + $0x7b0] sm:$0xff]
  %v272 = vld [vmem:[%s1 + $0x7b8] sm:$0xff]
  %v273 = vld [vmem:[%s1 + $0x7c0] sm:$0xff]
  %v274 = vld [vmem:[%s1 + $0x7c8] sm:$0xff]
  %v275 = vld [vmem:[%s1 + $0x7d0] sm:$0xff]
  %v276 = vld [vmem:[%s1 + $0x7d8] sm:$0xff]
  %v277 = vld [vmem:[%s1 + $0x7e0] sm:$0xff]
  %v278 = vld [vmem:[%s1 + $0x7e8] sm:$0xff]
  %v279 = vld [vmem:[%s1 + $0x7f0] sm:$0xff]
  %v280 = vld [vmem:[%s1 + $0x7f8] sm:$0xff]
  %v281 = vld [vmem:[%s2] sm:$0xf]
  %v283 = vperm.slane %v281, 0
  %v284 = vperm.slane %v281, 1
  %v285 = vperm.slane %v281, 2
  %v286 = vperm.slane %v281, 3
  %v299 = vunpack.c.l.b16 %v17
  %v300 = vunpack.c.h.b16 %v17
  %v301 = vunpack.c.l.b16 %v18
  %v302 = vunpack.c.h.b16 %v18
  %v303 = vunpack.c.l.b16 %v19
  %v304 = vunpack.c.h.b16 %v19
  %v305 = vunpack.c.l.b16 %v20
  %v306 = vunpack.c.h.b16 %v20
  %v307 = vunpack.c.l.b16 %v21
  %v308 = vunpack.c.h.b16 %v21
  %v309 = vunpack.c.l.b16 %v22
  %v310 = vunpack.c.h.b16 %v22
  %v311 = vunpack.c.l.b16 %v23
  %v312 = vunpack.c.h.b16 %v23
  %v313 = vunpack.c.l.b16 %v24
  %v314 = vunpack.c.h.b16 %v24
  %v315 = vpack.c.b16 %v307, %v299
  %v316 = vpack.c.b16 %v308, %v300
  %v317 = vpack.c.b16 %v309, %v301
  %v318 = vpack.c.b16 %v310, %v302
  %v319 = vpack.c.b16 %v311, %v303
  %v320 = vpack.c.b16 %v312, %v304
  %v321 = vpack.c.b16 %v313, %v305
  %v322 = vpack.c.b16 %v314, %v306
  %v587 = vunpack.c.l.b16 %v25
  %v588 = vunpack.c.h.b16 %v25
  %v589 = vunpack.c.l.b16 %v26
  %v590 = vunpack.c.h.b16 %v26
  %v591 = vunpack.c.l.b16 %v27
  %v592 = vunpack.c.h.b16 %v27
  %v593 = vunpack.c.l.b16 %v28
  %v594 = vunpack.c.h.b16 %v28
  %v595 = vunpack.c.l.b16 %v29
  %v596 = vunpack.c.h.b16 %v29
  %v597 = vunpack.c.l.b16 %v30
  %v598 = vunpack.c.h.b16 %v30
  %v599 = vunpack.c.l.b16 %v31
  %v600 = vunpack.c.h.b16 %v31
  %v601 = vunpack.c.l.b16 %v32
  %v602 = vunpack.c.h.b16 %v32
  %v603 = vunpack.c.l.b16 %v33
  %v604 = vunpack.c.h.b16 %v33
  %v605 = vunpack.c.l.b16 %v34
  %v606 = vunpack.c.h.b16 %v34
  %v607 = vunpack.c.l.b16 %v35
  %v608 = vunpack.c.h.b16 %v35
  %v609 = vunpack.c.l.b16 %v36
  %v610 = vunpack.c.h.b16 %v36
  %v611 = vunpack.c.l.b16 %v37
  %v612 = vunpack.c.h.b16 %v37
  %v613 = vunpack.c.l.b16 %v38
  %v614 = vunpack.c.h.b16 %v38
  %v615 = vunpack.c.l.b16 %v39
  %v616 = vunpack.c.h.b16 %v39
  %v617 = vunpack.c.l.b16 %v40
  %v618 = vunpack.c.h.b16 %v40
  %v619 = vunpack.c.l.b16 %v41
  %v620 = vunpack.c.h.b16 %v41
  %v621 = vunpack.c.l.b16 %v42
  %v622 = vunpack.c.h.b16 %v42
  %v623 = vunpack.c.l.b16 %v43
  %v624 = vunpack.c.h.b16 %v43
  %v625 = vunpack.c.l.b16 %v44
  %v626 = vunpack.c.h.b16 %v44
  %v627 = vunpack.c.l.b16 %v45
  %v628 = vunpack.c.h.b16 %v45
  %v629 = vunpack.c.l.b16 %v46
  %v630 = vunpack.c.h.b16 %v46
  %v631 = vunpack.c.l.b16 %v47
  %v632 = vunpack.c.h.b16 %v47
  %v633 = vunpack.c.l.b16 %v48
  %v634 = vunpack.c.h.b16 %v48
  %v635 = vunpack.c.l.b16 %v49
  %v636 = vunpack.c.h.b16 %v49
  %v637 = vunpack.c.l.b16 %v50
  %v638 = vunpack.c.h.b16 %v50
  %v639 = vunpack.c.l.b16 %v51
  %v640 = vunpack.c.h.b16 %v51
  %v641 = vunpack.c.l.b16 %v52
  %v642 = vunpack.c.h.b16 %v52
  %v643 = vunpack.c.l.b16 %v53
  %v644 = vunpack.c.h.b16 %v53
  %v645 = vunpack.c.l.b16 %v54
  %v646 = vunpack.c.h.b16 %v54
  %v647 = vunpack.c.l.b16 %v55
  %v648 = vunpack.c.h.b16 %v55
  %v649 = vunpack.c.l.b16 %v56
  %v650 = vunpack.c.h.b16 %v56
  %v651 = vunpack.c.l.b16 %v57
  %v652 = vunpack.c.h.b16 %v57
  %v653 = vunpack.c.l.b16 %v58
  %v654 = vunpack.c.h.b16 %v58
  %v655 = vunpack.c.l.b16 %v59
  %v656 = vunpack.c.h.b16 %v59
  %v657 = vunpack.c.l.b16 %v60
  %v658 = vunpack.c.h.b16 %v60
  %v659 = vunpack.c.l.b16 %v61
  %v660 = vunpack.c.h.b16 %v61
  %v661 = vunpack.c.l.b16 %v62
  %v662 = vunpack.c.h.b16 %v62
  %v663 = vunpack.c.l.b16 %v63
  %v664 = vunpack.c.h.b16 %v63
  %v665 = vunpack.c.l.b16 %v64
  %v666 = vunpack.c.h.b16 %v64
  %v667 = vunpack.c.l.b16 %v65
  %v668 = vunpack.c.h.b16 %v65
  %v669 = vunpack.c.l.b16 %v66
  %v670 = vunpack.c.h.b16 %v66
  %v671 = vunpack.c.l.b16 %v67
  %v672 = vunpack.c.h.b16 %v67
  %v673 = vunpack.c.l.b16 %v68
  %v674 = vunpack.c.h.b16 %v68
  %v675 = vunpack.c.l.b16 %v69
  %v676 = vunpack.c.h.b16 %v69
  %v677 = vunpack.c.l.b16 %v70
  %v678 = vunpack.c.h.b16 %v70
  %v679 = vunpack.c.l.b16 %v71
  %v680 = vunpack.c.h.b16 %v71
  %v681 = vunpack.c.l.b16 %v72
  %v682 = vunpack.c.h.b16 %v72
  %v683 = vunpack.c.l.b16 %v73
  %v684 = vunpack.c.h.b16 %v73
  %v685 = vunpack.c.l.b16 %v74
  %v686 = vunpack.c.h.b16 %v74
  %v687 = vunpack.c.l.b16 %v75
  %v688 = vunpack.c.h.b16 %v75
  %v689 = vunpack.c.l.b16 %v76
  %v690 = vunpack.c.h.b16 %v76
  %v691 = vunpack.c.l.b16 %v77
  %v692 = vunpack.c.h.b16 %v77
  %v693 = vunpack.c.l.b16 %v78
  %v694 = vunpack.c.h.b16 %v78
  %v695 = vunpack.c.l.b16 %v79
  %v696 = vunpack.c.h.b16 %v79
  %v697 = vunpack.c.l.b16 %v80
  %v698 = vunpack.c.h.b16 %v80
  %v699 = vunpack.c.l.b16 %v81
  %v700 = vunpack.c.h.b16 %v81
  %v701 = vunpack.c.l.b16 %v82
  %v702 = vunpack.c.h.b16 %v82
  %v703 = vunpack.c.l.b16 %v83
  %v704 = vunpack.c.h.b16 %v83
  %v705 = vunpack.c.l.b16 %v84
  %v706 = vunpack.c.h.b16 %v84
  %v707 = vunpack.c.l.b16 %v85
  %v708 = vunpack.c.h.b16 %v85
  %v709 = vunpack.c.l.b16 %v86
  %v710 = vunpack.c.h.b16 %v86
  %v711 = vunpack.c.l.b16 %v87
  %v712 = vunpack.c.h.b16 %v87
  %v713 = vunpack.c.l.b16 %v88
  %v714 = vunpack.c.h.b16 %v88
  %v715 = vunpack.c.l.b16 %v89
  %v716 = vunpack.c.h.b16 %v89
  %v717 = vunpack.c.l.b16 %v90
  %v718 = vunpack.c.h.b16 %v90
  %v719 = vunpack.c.l.b16 %v91
  %v720 = vunpack.c.h.b16 %v91
  %v721 = vunpack.c.l.b16 %v92
  %v722 = vunpack.c.h.b16 %v92
  %v723 = vunpack.c.l.b16 %v93
  %v724 = vunpack.c.h.b16 %v93
  %v725 = vunpack.c.l.b16 %v94
  %v726 = vunpack.c.h.b16 %v94
  %v727 = vunpack.c.l.b16 %v95
  %v728 = vunpack.c.h.b16 %v95
  %v729 = vunpack.c.l.b16 %v96
  %v730 = vunpack.c.h.b16 %v96
  %v731 = vunpack.c.l.b16 %v97
  %v732 = vunpack.c.h.b16 %v97
  %v733 = vunpack.c.l.b16 %v98
  %v734 = vunpack.c.h.b16 %v98
  %v735 = vunpack.c.l.b16 %v99
  %v736 = vunpack.c.h.b16 %v99
  %v737 = vunpack.c.l.b16 %v100
  %v738 = vunpack.c.h.b16 %v100
  %v739 = vunpack.c.l.b16 %v101
  %v740 = vunpack.c.h.b16 %v101
  %v741 = vunpack.c.l.b16 %v102
  %v742 = vunpack.c.h.b16 %v102
  %v743 = vunpack.c.l.b16 %v103
  %v744 = vunpack.c.h.b16 %v103
  %v745 = vunpack.c.l.b16 %v104
  %v746 = vunpack.c.h.b16 %v104
  %v747 = vunpack.c.l.b16 %v105
  %v748 = vunpack.c.h.b16 %v105
  %v749 = vunpack.c.l.b16 %v106
  %v750 = vunpack.c.h.b16 %v106
  %v751 = vunpack.c.l.b16 %v107
  %v752 = vunpack.c.h.b16 %v107
  %v753 = vunpack.c.l.b16 %v108
  %v754 = vunpack.c.h.b16 %v108
  %v755 = vunpack.c.l.b16 %v109
  %v756 = vunpack.c.h.b16 %v109
  %v757 = vunpack.c.l.b16 %v110
  %v758 = vunpack.c.h.b16 %v110
  %v759 = vunpack.c.l.b16 %v111
  %v760 = vunpack.c.h.b16 %v111
  %v761 = vunpack.c.l.b16 %v112
  %v762 = vunpack.c.h.b16 %v112
  %v763 = vunpack.c.l.b16 %v113
  %v764 = vunpack.c.h.b16 %v113
  %v765 = vunpack.c.l.b16 %v114
  %v766 = vunpack.c.h.b16 %v114
  %v767 = vunpack.c.l.b16 %v115
  %v768 = vunpack.c.h.b16 %v115
  %v769 = vunpack.c.l.b16 %v116
  %v770 = vunpack.c.h.b16 %v116
  %v771 = vunpack.c.l.b16 %v117
  %v772 = vunpack.c.h.b16 %v117
  %v773 = vunpack.c.l.b16 %v118
  %v774 = vunpack.c.h.b16 %v118
  %v775 = vunpack.c.l.b16 %v119
  %v776 = vunpack.c.h.b16 %v119
  %v777 = vunpack.c.l.b16 %v120
  %v778 = vunpack.c.h.b16 %v120
  %v779 = vunpack.c.l.b16 %v121
  %v780 = vunpack.c.h.b16 %v121
  %v781 = vunpack.c.l.b16 %v122
  %v782 = vunpack.c.h.b16 %v122
  %v783 = vunpack.c.l.b16 %v123
  %v784 = vunpack.c.h.b16 %v123
  %v785 = vunpack.c.l.b16 %v124
  %v786 = vunpack.c.h.b16 %v124
  %v787 = vunpack.c.l.b16 %v125
  %v788 = vunpack.c.h.b16 %v125
  %v789 = vunpack.c.l.b16 %v126
  %v790 = vunpack.c.h.b16 %v126
  %v791 = vunpack.c.l.b16 %v127
  %v792 = vunpack.c.h.b16 %v127
  %v793 = vunpack.c.l.b16 %v128
  %v794 = vunpack.c.h.b16 %v128
  %v795 = vunpack.c.l.b16 %v129
  %v796 = vunpack.c.h.b16 %v129
  %v797 = vunpack.c.l.b16 %v130
  %v798 = vunpack.c.h.b16 %v130
  %v799 = vunpack.c.l.b16 %v131
  %v800 = vunpack.c.h.b16 %v131
  %v801 = vunpack.c.l.b16 %v132
  %v802 = vunpack.c.h.b16 %v132
  %v803 = vunpack.c.l.b16 %v133
  %v804 = vunpack.c.h.b16 %v133
  %v805 = vunpack.c.l.b16 %v134
  %v806 = vunpack.c.h.b16 %v134
  %v807 = vunpack.c.l.b16 %v135
  %v808 = vunpack.c.h.b16 %v135
  %v809 = vunpack.c.l.b16 %v136
  %v810 = vunpack.c.h.b16 %v136
  %v811 = vunpack.c.l.b16 %v137
  %v812 = vunpack.c.h.b16 %v137
  %v813 = vunpack.c.l.b16 %v138
  %v814 = vunpack.c.h.b16 %v138
  %v815 = vunpack.c.l.b16 %v139
  %v816 = vunpack.c.h.b16 %v139
  %v817 = vunpack.c.l.b16 %v140
  %v818 = vunpack.c.h.b16 %v140
  %v819 = vunpack.c.l.b16 %v141
  %v820 = vunpack.c.h.b16 %v141
  %v821 = vunpack.c.l.b16 %v142
  %v822 = vunpack.c.h.b16 %v142
  %v823 = vunpack.c.l.b16 %v143
  %v824 = vunpack.c.h.b16 %v143
  %v825 = vunpack.c.l.b16 %v144
  %v826 = vunpack.c.h.b16 %v144
  %v827 = vunpack.c.l.b16 %v145
  %v828 = vunpack.c.h.b16 %v145
  %v829 = vunpack.c.l.b16 %v146
  %v830 = vunpack.c.h.b16 %v146
  %v831 = vunpack.c.l.b16 %v147
  %v832 = vunpack.c.h.b16 %v147
  %v833 = vunpack.c.l.b16 %v148
  %v834 = vunpack.c.h.b16 %v148
  %v835 = vunpack.c.l.b16 %v149
  %v836 = vunpack.c.h.b16 %v149
  %v837 = vunpack.c.l.b16 %v150
  %v838 = vunpack.c.h.b16 %v150
  %v839 = vunpack.c.l.b16 %v151
  %v840 = vunpack.c.h.b16 %v151
  %v841 = vunpack.c.l.b16 %v152
  %v842 = vunpack.c.h.b16 %v152
  %v843 = vunpack.c.l.b16 %v153
  %v844 = vunpack.c.h.b16 %v153
  %v845 = vunpack.c.l.b16 %v154
  %v846 = vunpack.c.h.b16 %v154
  %v847 = vunpack.c.l.b16 %v155
  %v848 = vunpack.c.h.b16 %v155
  %v849 = vunpack.c.l.b16 %v156
  %v850 = vunpack.c.h.b16 %v156
  %v851 = vunpack.c.l.b16 %v157
  %v852 = vunpack.c.h.b16 %v157
  %v853 = vunpack.c.l.b16 %v158
  %v854 = vunpack.c.h.b16 %v158
  %v855 = vunpack.c.l.b16 %v159
  %v856 = vunpack.c.h.b16 %v159
  %v857 = vunpack.c.l.b16 %v160
  %v858 = vunpack.c.h.b16 %v160
  %v859 = vunpack.c.l.b16 %v161
  %v860 = vunpack.c.h.b16 %v161
  %v861 = vunpack.c.l.b16 %v162
  %v862 = vunpack.c.h.b16 %v162
  %v863 = vunpack.c.l.b16 %v163
  %v864 = vunpack.c.h.b16 %v163
  %v865 = vunpack.c.l.b16 %v164
  %v866 = vunpack.c.h.b16 %v164
  %v867 = vunpack.c.l.b16 %v165
  %v868 = vunpack.c.h.b16 %v165
  %v869 = vunpack.c.l.b16 %v166
  %v870 = vunpack.c.h.b16 %v166
  %v871 = vunpack.c.l.b16 %v167
  %v872 = vunpack.c.h.b16 %v167
  %v873 = vunpack.c.l.b16 %v168
  %v874 = vunpack.c.h.b16 %v168
  %v875 = vunpack.c.l.b16 %v169
  %v876 = vunpack.c.h.b16 %v169
  %v877 = vunpack.c.l.b16 %v170
  %v878 = vunpack.c.h.b16 %v170
  %v879 = vunpack.c.l.b16 %v171
  %v880 = vunpack.c.h.b16 %v171
  %v881 = vunpack.c.l.b16 %v172
  %v882 = vunpack.c.h.b16 %v172
  %v883 = vunpack.c.l.b16 %v173
  %v884 = vunpack.c.h.b16 %v173
  %v885 = vunpack.c.l.b16 %v174
  %v886 = vunpack.c.h.b16 %v174
  %v887 = vunpack.c.l.b16 %v175
  %v888 = vunpack.c.h.b16 %v175
  %v889 = vunpack.c.l.b16 %v176
  %v890 = vunpack.c.h.b16 %v176
  %v891 = vunpack.c.l.b16 %v177
  %v892 = vunpack.c.h.b16 %v177
  %v893 = vunpack.c.l.b16 %v178
  %v894 = vunpack.c.h.b16 %v178
  %v895 = vunpack.c.l.b16 %v179
  %v896 = vunpack.c.h.b16 %v179
  %v897 = vunpack.c.l.b16 %v180
  %v898 = vunpack.c.h.b16 %v180
  %v899 = vunpack.c.l.b16 %v181
  %v900 = vunpack.c.h.b16 %v181
  %v901 = vunpack.c.l.b16 %v182
  %v902 = vunpack.c.h.b16 %v182
  %v903 = vunpack.c.l.b16 %v183
  %v904 = vunpack.c.h.b16 %v183
  %v905 = vunpack.c.l.b16 %v184
  %v906 = vunpack.c.h.b16 %v184
  %v907 = vunpack.c.l.b16 %v185
  %v908 = vunpack.c.h.b16 %v185
  %v909 = vunpack.c.l.b16 %v186
  %v910 = vunpack.c.h.b16 %v186
  %v911 = vunpack.c.l.b16 %v187
  %v912 = vunpack.c.h.b16 %v187
  %v913 = vunpack.c.l.b16 %v188
  %v914 = vunpack.c.h.b16 %v188
  %v915 = vunpack.c.l.b16 %v189
  %v916 = vunpack.c.h.b16 %v189
  %v917 = vunpack.c.l.b16 %v190
  %v918 = vunpack.c.h.b16 %v190
  %v919 = vunpack.c.l.b16 %v191
  %v920 = vunpack.c.h.b16 %v191
  %v921 = vunpack.c.l.b16 %v192
  %v922 = vunpack.c.h.b16 %v192
  %v923 = vunpack.c.l.b16 %v193
  %v924 = vunpack.c.h.b16 %v193
  %v925 = vunpack.c.l.b16 %v194
  %v926 = vunpack.c.h.b16 %v194
  %v927 = vunpack.c.l.b16 %v195
  %v928 = vunpack.c.h.b16 %v195
  %v929 = vunpack.c.l.b16 %v196
  %v930 = vunpack.c.h.b16 %v196
  %v931 = vunpack.c.l.b16 %v197
  %v932 = vunpack.c.h.b16 %v197
  %v933 = vunpack.c.l.b16 %v198
  %v934 = vunpack.c.h.b16 %v198
  %v935 = vunpack.c.l.b16 %v199
  %v936 = vunpack.c.h.b16 %v199
  %v937 = vunpack.c.l.b16 %v200
  %v938 = vunpack.c.h.b16 %v200
  %v939 = vunpack.c.l.b16 %v201
  %v940 = vunpack.c.h.b16 %v201
  %v941 = vunpack.c.l.b16 %v202
  %v942 = vunpack.c.h.b16 %v202
  %v943 = vunpack.c.l.b16 %v203
  %v944 = vunpack.c.h.b16 %v203
  %v945 = vunpack.c.l.b16 %v204
  %v946 = vunpack.c.h.b16 %v204
  %v947 = vunpack.c.l.b16 %v205
  %v948 = vunpack.c.h.b16 %v205
  %v949 = vunpack.c.l.b16 %v206
  %v950 = vunpack.c.h.b16 %v206
  %v951 = vunpack.c.l.b16 %v207
  %v952 = vunpack.c.h.b16 %v207
  %v953 = vunpack.c.l.b16 %v208
  %v954 = vunpack.c.h.b16 %v208
  %v955 = vunpack.c.l.b16 %v209
  %v956 = vunpack.c.h.b16 %v209
  %v957 = vunpack.c.l.b16 %v210
  %v958 = vunpack.c.h.b16 %v210
  %v959 = vunpack.c.l.b16 %v211
  %v960 = vunpack.c.h.b16 %v211
  %v961 = vunpack.c.l.b16 %v212
  %v962 = vunpack.c.h.b16 %v212
  %v963 = vunpack.c.l.b16 %v213
  %v964 = vunpack.c.h.b16 %v213
  %v965 = vunpack.c.l.b16 %v214
  %v966 = vunpack.c.h.b16 %v214
  %v967 = vunpack.c.l.b16 %v215
  %v968 = vunpack.c.h.b16 %v215
  %v969 = vunpack.c.l.b16 %v216
  %v970 = vunpack.c.h.b16 %v216
  %v971 = vunpack.c.l.b16 %v217
  %v972 = vunpack.c.h.b16 %v217
  %v973 = vunpack.c.l.b16 %v218
  %v974 = vunpack.c.h.b16 %v218
  %v975 = vunpack.c.l.b16 %v219
  %v976 = vunpack.c.h.b16 %v219
  %v977 = vunpack.c.l.b16 %v220
  %v978 = vunpack.c.h.b16 %v220
  %v979 = vunpack.c.l.b16 %v221
  %v980 = vunpack.c.h.b16 %v221
  %v981 = vunpack.c.l.b16 %v222
  %v982 = vunpack.c.h.b16 %v222
  %v983 = vunpack.c.l.b16 %v223
  %v984 = vunpack.c.h.b16 %v223
  %v985 = vunpack.c.l.b16 %v224
  %v986 = vunpack.c.h.b16 %v224
  %v987 = vunpack.c.l.b16 %v225
  %v988 = vunpack.c.h.b16 %v225
  %v989 = vunpack.c.l.b16 %v226
  %v990 = vunpack.c.h.b16 %v226
  %v991 = vunpack.c.l.b16 %v227
  %v992 = vunpack.c.h.b16 %v227
  %v993 = vunpack.c.l.b16 %v228
  %v994 = vunpack.c.h.b16 %v228
  %v995 = vunpack.c.l.b16 %v229
  %v996 = vunpack.c.h.b16 %v229
  %v997 = vunpack.c.l.b16 %v230
  %v998 = vunpack.c.h.b16 %v230
  %v999 = vunpack.c.l.b16 %v231
  %v1000 = vunpack.c.h.b16 %v231
  %v1001 = vunpack.c.l.b16 %v232
  %v1002 = vunpack.c.h.b16 %v232
  %v1003 = vunpack.c.l.b16 %v233
  %v1004 = vunpack.c.h.b16 %v233
  %v1005 = vunpack.c.l.b16 %v234
  %v1006 = vunpack.c.h.b16 %v234
  %v1007 = vunpack.c.l.b16 %v235
  %v1008 = vunpack.c.h.b16 %v235
  %v1009 = vunpack.c.l.b16 %v236
  %v1010 = vunpack.c.h.b16 %v236
  %v1011 = vunpack.c.l.b16 %v237
  %v1012 = vunpack.c.h.b16 %v237
  %v1013 = vunpack.c.l.b16 %v238
  %v1014 = vunpack.c.h.b16 %v238
  %v1015 = vunpack.c.l.b16 %v239
  %v1016 = vunpack.c.h.b16 %v239
  %v1017 = vunpack.c.l.b16 %v240
  %v1018 = vunpack.c.h.b16 %v240
  %v1019 = vunpack.c.l.b16 %v241
  %v1020 = vunpack.c.h.b16 %v241
  %v1021 = vunpack.c.l.b16 %v242
  %v1022 = vunpack.c.h.b16 %v242
  %v1023 = vunpack.c.l.b16 %v243
  %v1024 = vunpack.c.h.b16 %v243
  %v1025 = vunpack.c.l.b16 %v244
  %v1026 = vunpack.c.h.b16 %v244
  %v1027 = vunpack.c.l.b16 %v245
  %v1028 = vunpack.c.h.b16 %v245
  %v1029 = vunpack.c.l.b16 %v246
  %v1030 = vunpack.c.h.b16 %v246
  %v1031 = vunpack.c.l.b16 %v247
  %v1032 = vunpack.c.h.b16 %v247
  %v1033 = vunpack.c.l.b16 %v248
  %v1034 = vunpack.c.h.b16 %v248
  %v1035 = vunpack.c.l.b16 %v249
  %v1036 = vunpack.c.h.b16 %v249
  %v1037 = vunpack.c.l.b16 %v250
  %v1038 = vunpack.c.h.b16 %v250
  %v1039 = vunpack.c.l.b16 %v251
  %v1040 = vunpack.c.h.b16 %v251
  %v1041 = vunpack.c.l.b16 %v252
  %v1042 = vunpack.c.h.b16 %v252
  %v1043 = vunpack.c.l.b16 %v253
  %v1044 = vunpack.c.h.b16 %v253
  %v1045 = vunpack.c.l.b16 %v254
  %v1046 = vunpack.c.h.b16 %v254
  %v1047 = vunpack.c.l.b16 %v255
  %v1048 = vunpack.c.h.b16 %v255
  %v1049 = vunpack.c.l.b16 %v256
  %v1050 = vunpack.c.h.b16 %v256
  %v1051 = vunpack.c.l.b16 %v257
  %v1052 = vunpack.c.h.b16 %v257
  %v1053 = vunpack.c.l.b16 %v258
  %v1054 = vunpack.c.h.b16 %v258
  %v1055 = vunpack.c.l.b16 %v259
  %v1056 = vunpack.c.h.b16 %v259
  %v1057 = vunpack.c.l.b16 %v260
  %v1058 = vunpack.c.h.b16 %v260
  %v1059 = vunpack.c.l.b16 %v261
  %v1060 = vunpack.c.h.b16 %v261
  %v1061 = vunpack.c.l.b16 %v262
  %v1062 = vunpack.c.h.b16 %v262
  %v1063 = vunpack.c.l.b16 %v263
  %v1064 = vunpack.c.h.b16 %v263
  %v1065 = vunpack.c.l.b16 %v264
  %v1066 = vunpack.c.h.b16 %v264
  %v1067 = vunpack.c.l.b16 %v265
  %v1068 = vunpack.c.h.b16 %v265
  %v1069 = vunpack.c.l.b16 %v266
  %v1070 = vunpack.c.h.b16 %v266
  %v1071 = vunpack.c.l.b16 %v267
  %v1072 = vunpack.c.h.b16 %v267
  %v1073 = vunpack.c.l.b16 %v268
  %v1074 = vunpack.c.h.b16 %v268
  %v1075 = vunpack.c.l.b16 %v269
  %v1076 = vunpack.c.h.b16 %v269
  %v1077 = vunpack.c.l.b16 %v270
  %v1078 = vunpack.c.h.b16 %v270
  %v1079 = vunpack.c.l.b16 %v271
  %v1080 = vunpack.c.h.b16 %v271
  %v1081 = vunpack.c.l.b16 %v272
  %v1082 = vunpack.c.h.b16 %v272
  %v1083 = vunpack.c.l.b16 %v273
  %v1084 = vunpack.c.h.b16 %v273
  %v1085 = vunpack.c.l.b16 %v274
  %v1086 = vunpack.c.h.b16 %v274
  %v1087 = vunpack.c.l.b16 %v275
  %v1088 = vunpack.c.h.b16 %v275
  %v1089 = vunpack.c.l.b16 %v276
  %v1090 = vunpack.c.h.b16 %v276
  %v1091 = vunpack.c.l.b16 %v277
  %v1092 = vunpack.c.h.b16 %v277
  %v1093 = vunpack.c.l.b16 %v278
  %v1094 = vunpack.c.h.b16 %v278
  %v1095 = vunpack.c.l.b16 %v279
  %v1096 = vunpack.c.h.b16 %v279
  %v1097 = vunpack.c.l.b16 %v280
  %v1098 = vunpack.c.h.b16 %v280
  %v1099 = vpack.c.b16 %v591, %v587
  %v1100 = vpack.c.b16 %v592, %v588
  %v1101 = vpack.c.b16 %v593, %v589
  %v1102 = vpack.c.b16 %v594, %v590
  %v1103 = vpack.c.b16 %v599, %v595
  %v1104 = vpack.c.b16 %v600, %v596
  %v1105 = vpack.c.b16 %v601, %v597
  %v1106 = vpack.c.b16 %v602, %v598
  %v1107 = vpack.c.b16 %v607, %v603
  %v1108 = vpack.c.b16 %v608, %v604
  %v1109 = vpack.c.b16 %v609, %v605
  %v1110 = vpack.c.b16 %v610, %v606
  %v1111 = vpack.c.b16 %v615, %v611
  %v1112 = vpack.c.b16 %v616, %v612
  %v1113 = vpack.c.b16 %v617, %v613
  %v1114 = vpack.c.b16 %v618, %v614
  %v1115 = vpack.c.b16 %v623, %v619
  %v1116 = vpack.c.b16 %v624, %v620
  %v1117 = vpack.c.b16 %v625, %v621
  %v1118 = vpack.c.b16 %v626, %v622
  %v1119 = vpack.c.b16 %v631, %v627
  %v1120 = vpack.c.b16 %v632, %v628
  %v1121 = vpack.c.b16 %v633, %v629
  %v1122 = vpack.c.b16 %v634, %v630
  %v1123 = vpack.c.b16 %v639, %v635
  %v1124 = vpack.c.b16 %v640, %v636
  %v1125 = vpack.c.b16 %v641, %v637
  %v1126 = vpack.c.b16 %v642, %v638
  %v1127 = vpack.c.b16 %v647, %v643
  %v1128 = vpack.c.b16 %v648, %v644
  %v1129 = vpack.c.b16 %v649, %v645
  %v1130 = vpack.c.b16 %v650, %v646
  %v1131 = vpack.c.b16 %v655, %v651
  %v1132 = vpack.c.b16 %v656, %v652
  %v1133 = vpack.c.b16 %v657, %v653
  %v1134 = vpack.c.b16 %v658, %v654
  %v1135 = vpack.c.b16 %v663, %v659
  %v1136 = vpack.c.b16 %v664, %v660
  %v1137 = vpack.c.b16 %v665, %v661
  %v1138 = vpack.c.b16 %v666, %v662
  %v1139 = vpack.c.b16 %v671, %v667
  %v1140 = vpack.c.b16 %v672, %v668
  %v1141 = vpack.c.b16 %v673, %v669
  %v1142 = vpack.c.b16 %v674, %v670
  %v1143 = vpack.c.b16 %v679, %v675
  %v1144 = vpack.c.b16 %v680, %v676
  %v1145 = vpack.c.b16 %v681, %v677
  %v1146 = vpack.c.b16 %v682, %v678
  %v1147 = vpack.c.b16 %v687, %v683
  %v1148 = vpack.c.b16 %v688, %v684
  %v1149 = vpack.c.b16 %v689, %v685
  %v1150 = vpack.c.b16 %v690, %v686
  %v1151 = vpack.c.b16 %v695, %v691
  %v1152 = vpack.c.b16 %v696, %v692
  %v1153 = vpack.c.b16 %v697, %v693
  %v1154 = vpack.c.b16 %v698, %v694
  %v1155 = vpack.c.b16 %v703, %v699
  %v1156 = vpack.c.b16 %v704, %v700
  %v1157 = vpack.c.b16 %v705, %v701
  %v1158 = vpack.c.b16 %v706, %v702
  %v1159 = vpack.c.b16 %v711, %v707
  %v1160 = vpack.c.b16 %v712, %v708
  %v1161 = vpack.c.b16 %v713, %v709
  %v1162 = vpack.c.b16 %v714, %v710
  %v1163 = vpack.c.b16 %v719, %v715
  %v1164 = vpack.c.b16 %v720, %v716
  %v1165 = vpack.c.b16 %v721, %v717
  %v1166 = vpack.c.b16 %v722, %v718
  %v1167 = vpack.c.b16 %v727, %v723
  %v1168 = vpack.c.b16 %v728, %v724
  %v1169 = vpack.c.b16 %v729, %v725
  %v1170 = vpack.c.b16 %v730, %v726
  %v1171 = vpack.c.b16 %v735, %v731
  %v1172 = vpack.c.b16 %v736, %v732
  %v1173 = vpack.c.b16 %v737, %v733
  %v1174 = vpack.c.b16 %v738, %v734
  %v1175 = vpack.c.b16 %v743, %v739
  %v1176 = vpack.c.b16 %v744, %v740
  %v1177 = vpack.c.b16 %v745, %v741
  %v1178 = vpack.c.b16 %v746, %v742
  %v1179 = vpack.c.b16 %v751, %v747
  %v1180 = vpack.c.b16 %v752, %v748
  %v1181 = vpack.c.b16 %v753, %v749
  %v1182 = vpack.c.b16 %v754, %v750
  %v1183 = vpack.c.b16 %v759, %v755
  %v1184 = vpack.c.b16 %v760, %v756
  %v1185 = vpack.c.b16 %v761, %v757
  %v1186 = vpack.c.b16 %v762, %v758
  %v1187 = vpack.c.b16 %v767, %v763
  %v1188 = vpack.c.b16 %v768, %v764
  %v1189 = vpack.c.b16 %v769, %v765
  %v1190 = vpack.c.b16 %v770, %v766
  %v1191 = vpack.c.b16 %v775, %v771
  %v1192 = vpack.c.b16 %v776, %v772
  %v1193 = vpack.c.b16 %v777, %v773
  %v1194 = vpack.c.b16 %v778, %v774
  %v1195 = vpack.c.b16 %v783, %v779
  %v1196 = vpack.c.b16 %v784, %v780
  %v1197 = vpack.c.b16 %v785, %v781
  %v1198 = vpack.c.b16 %v786, %v782
  %v1199 = vpack.c.b16 %v791, %v787
  %v1200 = vpack.c.b16 %v792, %v788
  %v1201 = vpack.c.b16 %v793, %v789
  %v1202 = vpack.c.b16 %v794, %v790
  %v1203 = vpack.c.b16 %v799, %v795
  %v1204 = vpack.c.b16 %v800, %v796
  %v1205 = vpack.c.b16 %v801, %v797
  %v1206 = vpack.c.b16 %v802, %v798
  %v1207 = vpack.c.b16 %v807, %v803
  %v1208 = vpack.c.b16 %v808, %v804
  %v1209 = vpack.c.b16 %v809, %v805
  %v1210 = vpack.c.b16 %v810, %v806
  %v1211 = vpack.c.b16 %v815, %v811
  %v1212 = vpack.c.b16 %v816, %v812
  %v1213 = vpack.c.b16 %v817, %v813
  %v1214 = vpack.c.b16 %v818, %v814
  %v1215 = vpack.c.b16 %v823, %v819
  %v1216 = vpack.c.b16 %v824, %v820
  %v1217 = vpack.c.b16 %v825, %v821
  %v1218 = vpack.c.b16 %v826, %v822
  %v1219 = vpack.c.b16 %v831, %v827
  %v1220 = vpack.c.b16 %v832, %v828
  %v1221 = vpack.c.b16 %v833, %v829
  %v1222 = vpack.c.b16 %v834, %v830
  %v1223 = vpack.c.b16 %v839, %v835
  %v1224 = vpack.c.b16 %v840, %v836
  %v1225 = vpack.c.b16 %v841, %v837
  %v1226 = vpack.c.b16 %v842, %v838
  %v1227 = vpack.c.b16 %v847, %v843
  %v1228 = vpack.c.b16 %v848, %v844
  %v1229 = vpack.c.b16 %v849, %v845
  %v1230 = vpack.c.b16 %v850, %v846
  %v1231 = vpack.c.b16 %v855, %v851
  %v1232 = vpack.c.b16 %v856, %v852
  %v1233 = vpack.c.b16 %v857, %v853
  %v1234 = vpack.c.b16 %v858, %v854
  %v1235 = vpack.c.b16 %v863, %v859
  %v1236 = vpack.c.b16 %v864, %v860
  %v1237 = vpack.c.b16 %v865, %v861
  %v1238 = vpack.c.b16 %v866, %v862
  %v1239 = vpack.c.b16 %v871, %v867
  %v1240 = vpack.c.b16 %v872, %v868
  %v1241 = vpack.c.b16 %v873, %v869
  %v1242 = vpack.c.b16 %v874, %v870
  %v1243 = vpack.c.b16 %v879, %v875
  %v1244 = vpack.c.b16 %v880, %v876
  %v1245 = vpack.c.b16 %v881, %v877
  %v1246 = vpack.c.b16 %v882, %v878
  %v1247 = vpack.c.b16 %v887, %v883
  %v1248 = vpack.c.b16 %v888, %v884
  %v1249 = vpack.c.b16 %v889, %v885
  %v1250 = vpack.c.b16 %v890, %v886
  %v1251 = vpack.c.b16 %v895, %v891
  %v1252 = vpack.c.b16 %v896, %v892
  %v1253 = vpack.c.b16 %v897, %v893
  %v1254 = vpack.c.b16 %v898, %v894
  %v1255 = vpack.c.b16 %v903, %v899
  %v1256 = vpack.c.b16 %v904, %v900
  %v1257 = vpack.c.b16 %v905, %v901
  %v1258 = vpack.c.b16 %v906, %v902
  %v1259 = vpack.c.b16 %v911, %v907
  %v1260 = vpack.c.b16 %v912, %v908
  %v1261 = vpack.c.b16 %v913, %v909
  %v1262 = vpack.c.b16 %v914, %v910
  %v1263 = vpack.c.b16 %v919, %v915
  %v1264 = vpack.c.b16 %v920, %v916
  %v1265 = vpack.c.b16 %v921, %v917
  %v1266 = vpack.c.b16 %v922, %v918
  %v1267 = vpack.c.b16 %v927, %v923
  %v1268 = vpack.c.b16 %v928, %v924
  %v1269 = vpack.c.b16 %v929, %v925
  %v1270 = vpack.c.b16 %v930, %v926
  %v1271 = vpack.c.b16 %v935, %v931
  %v1272 = vpack.c.b16 %v936, %v932
  %v1273 = vpack.c.b16 %v937, %v933
  %v1274 = vpack.c.b16 %v938, %v934
  %v1275 = vpack.c.b16 %v943, %v939
  %v1276 = vpack.c.b16 %v944, %v940
  %v1277 = vpack.c.b16 %v945, %v941
  %v1278 = vpack.c.b16 %v946, %v942
  %v1279 = vpack.c.b16 %v951, %v947
  %v1280 = vpack.c.b16 %v952, %v948
  %v1281 = vpack.c.b16 %v953, %v949
  %v1282 = vpack.c.b16 %v954, %v950
  %v1283 = vpack.c.b16 %v959, %v955
  %v1284 = vpack.c.b16 %v960, %v956
  %v1285 = vpack.c.b16 %v961, %v957
  %v1286 = vpack.c.b16 %v962, %v958
  %v1287 = vpack.c.b16 %v967, %v963
  %v1288 = vpack.c.b16 %v968, %v964
  %v1289 = vpack.c.b16 %v969, %v965
  %v1290 = vpack.c.b16 %v970, %v966
  %v1291 = vpack.c.b16 %v975, %v971
  %v1292 = vpack.c.b16 %v976, %v972
  %v1293 = vpack.c.b16 %v977, %v973
  %v1294 = vpack.c.b16 %v978, %v974
  %v1295 = vpack.c.b16 %v983, %v979
  %v1296 = vpack.c.b16 %v984, %v980
  %v1297 = vpack.c.b16 %v985, %v981
  %v1298 = vpack.c.b16 %v986, %v982
  %v1299 = vpack.c.b16 %v991, %v987
  %v1300 = vpack.c.b16 %v992, %v988
  %v1301 = vpack.c.b16 %v993, %v989
  %v1302 = vpack.c.b16 %v994, %v990
  %v1303 = vpack.c.b16 %v999, %v995
  %v1304 = vpack.c.b16 %v1000, %v996
  %v1305 = vpack.c.b16 %v1001, %v997
  %v1306 = vpack.c.b16 %v1002, %v998
  %v1307 = vpack.c.b16 %v1007, %v1003
  %v1308 = vpack.c.b16 %v1008, %v1004
  %v1309 = vpack.c.b16 %v1009, %v1005
  %v1310 = vpack.c.b16 %v1010, %v1006
  %v1311 = vpack.c.b16 %v1015, %v1011
  %v1312 = vpack.c.b16 %v1016, %v1012
  %v1313 = vpack.c.b16 %v1017, %v1013
  %v1314 = vpack.c.b16 %v1018, %v1014
  %v1315 = vpack.c.b16 %v1023, %v1019
  %v1316 = vpack.c.b16 %v1024, %v1020
  %v1317 = vpack.c.b16 %v1025, %v1021
  %v1318 = vpack.c.b16 %v1026, %v1022
  %v1319 = vpack.c.b16 %v1031, %v1027
  %v1320 = vpack.c.b16 %v1032, %v1028
  %v1321 = vpack.c.b16 %v1033, %v1029
  %v1322 = vpack.c.b16 %v1034, %v1030
  %v1323 = vpack.c.b16 %v1039, %v1035
  %v1324 = vpack.c.b16 %v1040, %v1036
  %v1325 = vpack.c.b16 %v1041, %v1037
  %v1326 = vpack.c.b16 %v1042, %v1038
  %v1327 = vpack.c.b16 %v1047, %v1043
  %v1328 = vpack.c.b16 %v1048, %v1044
  %v1329 = vpack.c.b16 %v1049, %v1045
  %v1330 = vpack.c.b16 %v1050, %v1046
  %v1331 = vpack.c.b16 %v1055, %v1051
  %v1332 = vpack.c.b16 %v1056, %v1052
  %v1333 = vpack.c.b16 %v1057, %v1053
  %v1334 = vpack.c.b16 %v1058, %v1054
  %v1335 = vpack.c.b16 %v1063, %v1059
  %v1336 = vpack.c.b16 %v1064, %v1060
  %v1337 = vpack.c.b16 %v1065, %v1061
  %v1338 = vpack.c.b16 %v1066, %v1062
  %v1339 = vpack.c.b16 %v1071, %v1067
  %v1340 = vpack.c.b16 %v1072, %v1068
  %v1341 = vpack.c.b16 %v1073, %v1069
  %v1342 = vpack.c.b16 %v1074, %v1070
  %v1343 = vpack.c.b16 %v1079, %v1075
  %v1344 = vpack.c.b16 %v1080, %v1076
  %v1345 = vpack.c.b16 %v1081, %v1077
  %v1346 = vpack.c.b16 %v1082, %v1078
  %v1347 = vpack.c.b16 %v1087, %v1083
  %v1348 = vpack.c.b16 %v1088, %v1084
  %v1349 = vpack.c.b16 %v1089, %v1085
  %v1350 = vpack.c.b16 %v1090, %v1086
  %v1351 = vpack.c.b16 %v1095, %v1091
  %v1352 = vpack.c.b16 %v1096, %v1092
  %v1353 = vpack.c.b16 %v1097, %v1093
  %v1354 = vpack.c.b16 %v1098, %v1094
  %1611 = vmatpush.bf16.msra.mxu0 %v1127
  %1612 = vmatpush.bf16.msra.mxu0 %v1123
  %1613 = vmatpush.bf16.msra.mxu0 %v1119
  %1614 = vmatpush.bf16.msra.mxu0 %v1115
  %1615 = vmatpush.bf16.msra.mxu0 %v1111
  %1616 = vmatpush.bf16.msra.mxu0 %v1107
  %1617 = vmatpush.bf16.msra.mxu0 %v1103
  %1618 = vmatpush.bf16.msra.mxu0 %v1099
  %1619 = vmatmul.bf16.gmra.mxu0 %v315
  %v1620 = vpop.f32.mrf.mxu0
  %v1621 = vadd.f32 %v283, %v1620
  %v1622 = vpop.f32.mrf.mxu0
  %v1623 = vadd.f32 %v283, %v1622
  %1624 = vdwg.mxu0
  %1625 = vmatpush.bf16.msra.mxu0 %v1159
  %1626 = vmatpush.bf16.msra.mxu0 %v1155
  %1627 = vmatpush.bf16.msra.mxu0 %v1151
  %1628 = vmatpush.bf16.msra.mxu0 %v1147
  %1629 = vmatpush.bf16.msra.mxu0 %v1143
  %1630 = vmatpush.bf16.msra.mxu0 %v1139
  %1631 = vmatpush.bf16.msra.mxu0 %v1135
  %1632 = vmatpush.bf16.msra.mxu0 %v1131
  %1633 = vmatmul.bf16.gmra.mxu0 %v316
  %v1634 = vpop.f32.mrf.mxu0
  %v1635 = vadd.f32 %v1621, %v1634
  %v1636 = vpop.f32.mrf.mxu0
  %v1637 = vadd.f32 %v1623, %v1636
  %1638 = vdwg.mxu0
  %1639 = vmatpush.bf16.msra.mxu0 %v1191
  %1640 = vmatpush.bf16.msra.mxu0 %v1187
  %1641 = vmatpush.bf16.msra.mxu0 %v1183
  %1642 = vmatpush.bf16.msra.mxu0 %v1179
  %1643 = vmatpush.bf16.msra.mxu0 %v1175
  %1644 = vmatpush.bf16.msra.mxu0 %v1171
  %1645 = vmatpush.bf16.msra.mxu0 %v1167
  %1646 = vmatpush.bf16.msra.mxu0 %v1163
  %1647 = vmatmul.bf16.gmra.mxu0 %v317
  %v1648 = vpop.f32.mrf.mxu0
  %v1649 = vadd.f32 %v1635, %v1648
  %v1650 = vpop.f32.mrf.mxu0
  %v1651 = vadd.f32 %v1637, %v1650
  %1652 = vdwg.mxu0
  %1653 = vmatpush.bf16.msra.mxu0 %v1223
  %1654 = vmatpush.bf16.msra.mxu0 %v1219
  %1655 = vmatpush.bf16.msra.mxu0 %v1215
  %1656 = vmatpush.bf16.msra.mxu0 %v1211
  %1657 = vmatpush.bf16.msra.mxu0 %v1207
  %1658 = vmatpush.bf16.msra.mxu0 %v1203
  %1659 = vmatpush.bf16.msra.mxu0 %v1199
  %1660 = vmatpush.bf16.msra.mxu0 %v1195
  %1661 = vmatmul.bf16.gmra.mxu0 %v318
  %v1662 = vpop.f32.mrf.mxu0
  %v1663 = vadd.f32 %v1649, %v1662
  %v1664 = vpop.f32.mrf.mxu0
  %v1665 = vadd.f32 %v1651, %v1664
  %1666 = vdwg.mxu0
  %1667 = vmatpush.bf16.msra.mxu0 %v1255
  %1668 = vmatpush.bf16.msra.mxu0 %v1251
  %1669 = vmatpush.bf16.msra.mxu0 %v1247
  %1670 = vmatpush.bf16.msra.mxu0 %v1243
  %1671 = vmatpush.bf16.msra.mxu0 %v1239
  %1672 = vmatpush.bf16.msra.mxu0 %v1235
  %1673 = vmatpush.bf16.msra.mxu0 %v1231
  %1674 = vmatpush.bf16.msra.mxu0 %v1227
  %1675 = vmatmul.bf16.gmra.mxu0 %v319
  %v1676 = vpop.f32.mrf.mxu0
  %v1677 = vadd.f32 %v1663, %v1676
  %v1678 = vpop.f32.mrf.mxu0
  %v1679 = vadd.f32 %v1665, %v1678
  %1680 = vdwg.mxu0
  %1681 = vmatpush.bf16.msra.mxu0 %v1287
  %1682 = vmatpush.bf16.msra.mxu0 %v1283
  %1683 = vmatpush.bf16.msra.mxu0 %v1279
  %1684 = vmatpush.bf16.msra.mxu0 %v1275
  %1685 = vmatpush.bf16.msra.mxu0 %v1271
  %1686 = vmatpush.bf16.msra.mxu0 %v1267
  %1687 = vmatpush.bf16.msra.mxu0 %v1263
  %1688 = vmatpush.bf16.msra.mxu0 %v1259
  %1689 = vmatmul.bf16.gmra.mxu0 %v320
  %v1690 = vpop.f32.mrf.mxu0
  %v1691 = vadd.f32 %v1677, %v1690
  %v1692 = vpop.f32.mrf.mxu0
  %v1693 = vadd.f32 %v1679, %v1692
  %1694 = vdwg.mxu0
  %1695 = vmatpush.bf16.msra.mxu0 %v1319
  %1696 = vmatpush.bf16.msra.mxu0 %v1315
  %1697 = vmatpush.bf16.msra.mxu0 %v1311
  %1698 = vmatpush.bf16.msra.mxu0 %v1307
  %1699 = vmatpush.bf16.msra.mxu0 %v1303
  %1700 = vmatpush.bf16.msra.mxu0 %v1299
  %1701 = vmatpush.bf16.msra.mxu0 %v1295
  %1702 = vmatpush.bf16.msra.mxu0 %v1291
  %1703 = vmatmul.bf16.gmra.mxu0 %v321
  %v1704 = vpop.f32.mrf.mxu0
  %v1705 = vadd.f32 %v1691, %v1704
  %v1706 = vpop.f32.mrf.mxu0
  %v1707 = vadd.f32 %v1693, %v1706
  %1708 = vdwg.mxu0
  %1709 = vmatpush.bf16.msra.mxu0 %v1351
  %1710 = vmatpush.bf16.msra.mxu0 %v1347
  %1711 = vmatpush.bf16.msra.mxu0 %v1343
  %1712 = vmatpush.bf16.msra.mxu0 %v1339
  %1713 = vmatpush.bf16.msra.mxu0 %v1335
  %1714 = vmatpush.bf16.msra.mxu0 %v1331
  %1715 = vmatpush.bf16.msra.mxu0 %v1327
  %1716 = vmatpush.bf16.msra.mxu0 %v1323
  %1717 = vmatmul.bf16.gmra.mxu0 %v322
  %v1718 = vpop.f32.mrf.mxu0
  %v1719 = vadd.f32 %v1705, %v1718
  %v1720 = vpop.f32.mrf.mxu0
  %v1721 = vadd.f32 %v1707, %v1720
  %1722 = vdwg.mxu0
  %1723 = vmatpush.bf16.msra.mxu0 %v1128
  %1724 = vmatpush.bf16.msra.mxu0 %v1124
  %1725 = vmatpush.bf16.msra.mxu0 %v1120
  %1726 = vmatpush.bf16.msra.mxu0 %v1116
  %1727 = vmatpush.bf16.msra.mxu0 %v1112
  %1728 = vmatpush.bf16.msra.mxu0 %v1108
  %1729 = vmatpush.bf16.msra.mxu0 %v1104
  %1730 = vmatpush.bf16.msra.mxu0 %v1100
  %1731 = vmatmul.bf16.gmra.mxu0 %v315
  %v1732 = vpop.f32.mrf.mxu0
  %v1733 = vadd.f32 %v284, %v1732
  %v1734 = vpop.f32.mrf.mxu0
  %v1735 = vadd.f32 %v284, %v1734
  %1736 = vdwg.mxu0
  %1737 = vmatpush.bf16.msra.mxu0 %v1160
  %1738 = vmatpush.bf16.msra.mxu0 %v1156
  %1739 = vmatpush.bf16.msra.mxu0 %v1152
  %1740 = vmatpush.bf16.msra.mxu0 %v1148
  %1741 = vmatpush.bf16.msra.mxu0 %v1144
  %1742 = vmatpush.bf16.msra.mxu0 %v1140
  %1743 = vmatpush.bf16.msra.mxu0 %v1136
  %1744 = vmatpush.bf16.msra.mxu0 %v1132
  %1745 = vmatmul.bf16.gmra.mxu0 %v316
  %v1746 = vpop.f32.mrf.mxu0
  %v1747 = vadd.f32 %v1733, %v1746
  %v1748 = vpop.f32.mrf.mxu0
  %v1749 = vadd.f32 %v1735, %v1748
  %1750 = vdwg.mxu0
  %1751 = vmatpush.bf16.msra.mxu0 %v1192
  %1752 = vmatpush.bf16.msra.mxu0 %v1188
  %1753 = vmatpush.bf16.msra.mxu0 %v1184
  %1754 = vmatpush.bf16.msra.mxu0 %v1180
  %1755 = vmatpush.bf16.msra.mxu0 %v1176
  %1756 = vmatpush.bf16.msra.mxu0 %v1172
  %1757 = vmatpush.bf16.msra.mxu0 %v1168
  %1758 = vmatpush.bf16.msra.mxu0 %v1164
  %1759 = vmatmul.bf16.gmra.mxu0 %v317
  %v1760 = vpop.f32.mrf.mxu0
  %v1761 = vadd.f32 %v1747, %v1760
  %v1762 = vpop.f32.mrf.mxu0
  %v1763 = vadd.f32 %v1749, %v1762
  %1764 = vdwg.mxu0
  %1765 = vmatpush.bf16.msra.mxu0 %v1224
  %1766 = vmatpush.bf16.msra.mxu0 %v1220
  %1767 = vmatpush.bf16.msra.mxu0 %v1216
  %1768 = vmatpush.bf16.msra.mxu0 %v1212
  %1769 = vmatpush.bf16.msra.mxu0 %v1208
  %1770 = vmatpush.bf16.msra.mxu0 %v1204
  %1771 = vmatpush.bf16.msra.mxu0 %v1200
  %1772 = vmatpush.bf16.msra.mxu0 %v1196
  %1773 = vmatmul.bf16.gmra.mxu0 %v318
  %v1774 = vpop.f32.mrf.mxu0
  %v1775 = vadd.f32 %v1761, %v1774
  %v1776 = vpop.f32.mrf.mxu0
  %v1777 = vadd.f32 %v1763, %v1776
  %1778 = vdwg.mxu0
  %1779 = vmatpush.bf16.msra.mxu0 %v1256
  %1780 = vmatpush.bf16.msra.mxu0 %v1252
  %1781 = vmatpush.bf16.msra.mxu0 %v1248
  %1782 = vmatpush.bf16.msra.mxu0 %v1244
  %1783 = vmatpush.bf16.msra.mxu0 %v1240
  %1784 = vmatpush.bf16.msra.mxu0 %v1236
  %1785 = vmatpush.bf16.msra.mxu0 %v1232
  %1786 = vmatpush.bf16.msra.mxu0 %v1228
  %1787 = vmatmul.bf16.gmra.mxu0 %v319
  %v1788 = vpop.f32.mrf.mxu0
  %v1789 = vadd.f32 %v1775, %v1788
  %v1790 = vpop.f32.mrf.mxu0
  %v1791 = vadd.f32 %v1777, %v1790
  %1792 = vdwg.mxu0
  %1793 = vmatpush.bf16.msra.mxu0 %v1288
  %1794 = vmatpush.bf16.msra.mxu0 %v1284
  %1795 = vmatpush.bf16.msra.mxu0 %v1280
  %1796 = vmatpush.bf16.msra.mxu0 %v1276
  %1797 = vmatpush.bf16.msra.mxu0 %v1272
  %1798 = vmatpush.bf16.msra.mxu0 %v1268
  %1799 = vmatpush.bf16.msra.mxu0 %v1264
  %1800 = vmatpush.bf16.msra.mxu0 %v1260
  %1801 = vmatmul.bf16.gmra.mxu0 %v320
  %v1802 = vpop.f32.mrf.mxu0
  %v1803 = vadd.f32 %v1789, %v1802
  %v1804 = vpop.f32.mrf.mxu0
  %v1805 = vadd.f32 %v1791, %v1804
  %1806 = vdwg.mxu0
  %1807 = vmatpush.bf16.msra.mxu0 %v1320
  %1808 = vmatpush.bf16.msra.mxu0 %v1316
  %1809 = vmatpush.bf16.msra.mxu0 %v1312
  %1810 = vmatpush.bf16.msra.mxu0 %v1308
  %1811 = vmatpush.bf16.msra.mxu0 %v1304
  %1812 = vmatpush.bf16.msra.mxu0 %v1300
  %1813 = vmatpush.bf16.msra.mxu0 %v1296
  %1814 = vmatpush.bf16.msra.mxu0 %v1292
  %1815 = vmatmul.bf16.gmra.mxu0 %v321
  %v1816 = vpop.f32.mrf.mxu0
  %v1817 = vadd.f32 %v1803, %v1816
  %v1818 = vpop.f32.mrf.mxu0
  %v1819 = vadd.f32 %v1805, %v1818
  %1820 = vdwg.mxu0
  %1821 = vmatpush.bf16.msra.mxu0 %v1352
  %1822 = vmatpush.bf16.msra.mxu0 %v1348
  %1823 = vmatpush.bf16.msra.mxu0 %v1344
  %1824 = vmatpush.bf16.msra.mxu0 %v1340
  %1825 = vmatpush.bf16.msra.mxu0 %v1336
  %1826 = vmatpush.bf16.msra.mxu0 %v1332
  %1827 = vmatpush.bf16.msra.mxu0 %v1328
  %1828 = vmatpush.bf16.msra.mxu0 %v1324
  %1829 = vmatmul.bf16.gmra.mxu0 %v322
  %v1830 = vpop.f32.mrf.mxu0
  %v1831 = vadd.f32 %v1817, %v1830
  %v1832 = vpop.f32.mrf.mxu0
  %v1833 = vadd.f32 %v1819, %v1832
  %1834 = vdwg.mxu0
  %1835 = vmatpush.bf16.msra.mxu0 %v1129
  %1836 = vmatpush.bf16.msra.mxu0 %v1125
  %1837 = vmatpush.bf16.msra.mxu0 %v1121
  %1838 = vmatpush.bf16.msra.mxu0 %v1117
  %1839 = vmatpush.bf16.msra.mxu0 %v1113
  %1840 = vmatpush.bf16.msra.mxu0 %v1109
  %1841 = vmatpush.bf16.msra.mxu0 %v1105
  %1842 = vmatpush.bf16.msra.mxu0 %v1101
  %1843 = vmatmul.bf16.gmra.mxu0 %v315
  %v1844 = vpop.f32.mrf.mxu0
  %v1845 = vadd.f32 %v285, %v1844
  %v1846 = vpop.f32.mrf.mxu0
  %v1847 = vadd.f32 %v285, %v1846
  %1848 = vdwg.mxu0
  %1849 = vmatpush.bf16.msra.mxu0 %v1161
  %1850 = vmatpush.bf16.msra.mxu0 %v1157
  %1851 = vmatpush.bf16.msra.mxu0 %v1153
  %1852 = vmatpush.bf16.msra.mxu0 %v1149
  %1853 = vmatpush.bf16.msra.mxu0 %v1145
  %1854 = vmatpush.bf16.msra.mxu0 %v1141
  %1855 = vmatpush.bf16.msra.mxu0 %v1137
  %1856 = vmatpush.bf16.msra.mxu0 %v1133
  %1857 = vmatmul.bf16.gmra.mxu0 %v316
  %v1858 = vpop.f32.mrf.mxu0
  %v1859 = vadd.f32 %v1845, %v1858
  %v1860 = vpop.f32.mrf.mxu0
  %v1861 = vadd.f32 %v1847, %v1860
  %1862 = vdwg.mxu0
  %1863 = vmatpush.bf16.msra.mxu0 %v1193
  %1864 = vmatpush.bf16.msra.mxu0 %v1189
  %1865 = vmatpush.bf16.msra.mxu0 %v1185
  %1866 = vmatpush.bf16.msra.mxu0 %v1181
  %1867 = vmatpush.bf16.msra.mxu0 %v1177
  %1868 = vmatpush.bf16.msra.mxu0 %v1173
  %1869 = vmatpush.bf16.msra.mxu0 %v1169
  %1870 = vmatpush.bf16.msra.mxu0 %v1165
  %1871 = vmatmul.bf16.gmra.mxu0 %v317
  %v1872 = vpop.f32.mrf.mxu0
  %v1873 = vadd.f32 %v1859, %v1872
  %v1874 = vpop.f32.mrf.mxu0
  %v1875 = vadd.f32 %v1861, %v1874
  %1876 = vdwg.mxu0
  %1877 = vmatpush.bf16.msra.mxu0 %v1225
  %1878 = vmatpush.bf16.msra.mxu0 %v1221
  %1879 = vmatpush.bf16.msra.mxu0 %v1217
  %1880 = vmatpush.bf16.msra.mxu0 %v1213
  %1881 = vmatpush.bf16.msra.mxu0 %v1209
  %1882 = vmatpush.bf16.msra.mxu0 %v1205
  %1883 = vmatpush.bf16.msra.mxu0 %v1201
  %1884 = vmatpush.bf16.msra.mxu0 %v1197
  %1885 = vmatmul.bf16.gmra.mxu0 %v318
  %v1886 = vpop.f32.mrf.mxu0
  %v1887 = vadd.f32 %v1873, %v1886
  %v1888 = vpop.f32.mrf.mxu0
  %v1889 = vadd.f32 %v1875, %v1888
  %1890 = vdwg.mxu0
  %1891 = vmatpush.bf16.msra.mxu0 %v1257
  %1892 = vmatpush.bf16.msra.mxu0 %v1253
  %1893 = vmatpush.bf16.msra.mxu0 %v1249
  %1894 = vmatpush.bf16.msra.mxu0 %v1245
  %1895 = vmatpush.bf16.msra.mxu0 %v1241
  %1896 = vmatpush.bf16.msra.mxu0 %v1237
  %1897 = vmatpush.bf16.msra.mxu0 %v1233
  %1898 = vmatpush.bf16.msra.mxu0 %v1229
  %1899 = vmatmul.bf16.gmra.mxu0 %v319
  %v1900 = vpop.f32.mrf.mxu0
  %v1901 = vadd.f32 %v1887, %v1900
  %v1902 = vpop.f32.mrf.mxu0
  %v1903 = vadd.f32 %v1889, %v1902
  %1904 = vdwg.mxu0
  %1905 = vmatpush.bf16.msra.mxu0 %v1289
  %1906 = vmatpush.bf16.msra.mxu0 %v1285
  %1907 = vmatpush.bf16.msra.mxu0 %v1281
  %1908 = vmatpush.bf16.msra.mxu0 %v1277
  %1909 = vmatpush.bf16.msra.mxu0 %v1273
  %1910 = vmatpush.bf16.msra.mxu0 %v1269
  %1911 = vmatpush.bf16.msra.mxu0 %v1265
  %1912 = vmatpush.bf16.msra.mxu0 %v1261
  %1913 = vmatmul.bf16.gmra.mxu0 %v320
  %v1914 = vpop.f32.mrf.mxu0
  %v1915 = vadd.f32 %v1901, %v1914
  %v1916 = vpop.f32.mrf.mxu0
  %v1917 = vadd.f32 %v1903, %v1916
  %1918 = vdwg.mxu0
  %1919 = vmatpush.bf16.msra.mxu0 %v1321
  %1920 = vmatpush.bf16.msra.mxu0 %v1317
  %1921 = vmatpush.bf16.msra.mxu0 %v1313
  %1922 = vmatpush.bf16.msra.mxu0 %v1309
  %1923 = vmatpush.bf16.msra.mxu0 %v1305
  %1924 = vmatpush.bf16.msra.mxu0 %v1301
  %1925 = vmatpush.bf16.msra.mxu0 %v1297
  %1926 = vmatpush.bf16.msra.mxu0 %v1293
  %1927 = vmatmul.bf16.gmra.mxu0 %v321
  %v1928 = vpop.f32.mrf.mxu0
  %v1929 = vadd.f32 %v1915, %v1928
  %v1930 = vpop.f32.mrf.mxu0
  %v1931 = vadd.f32 %v1917, %v1930
  %1932 = vdwg.mxu0
  %1933 = vmatpush.bf16.msra.mxu0 %v1353
  %1934 = vmatpush.bf16.msra.mxu0 %v1349
  %1935 = vmatpush.bf16.msra.mxu0 %v1345
  %1936 = vmatpush.bf16.msra.mxu0 %v1341
  %1937 = vmatpush.bf16.msra.mxu0 %v1337
  %1938 = vmatpush.bf16.msra.mxu0 %v1333
  %1939 = vmatpush.bf16.msra.mxu0 %v1329
  %1940 = vmatpush.bf16.msra.mxu0 %v1325
  %1941 = vmatmul.bf16.gmra.mxu0 %v322
  %v1942 = vpop.f32.mrf.mxu0
  %v1943 = vadd.f32 %v1929, %v1942
  %v1944 = vpop.f32.mrf.mxu0
  %v1945 = vadd.f32 %v1931, %v1944
  %1946 = vdwg.mxu0
  %1947 = vmatpush.bf16.msra.mxu0 %v1130
  %1948 = vmatpush.bf16.msra.mxu0 %v1126
  %1949 = vmatpush.bf16.msra.mxu0 %v1122
  %1950 = vmatpush.bf16.msra.mxu0 %v1118
  %1951 = vmatpush.bf16.msra.mxu0 %v1114
  %1952 = vmatpush.bf16.msra.mxu0 %v1110
  %1953 = vmatpush.bf16.msra.mxu0 %v1106
  %1954 = vmatpush.bf16.msra.mxu0 %v1102
  %1955 = vmatmul.bf16.gmra.mxu0 %v315
  %v1956 = vpop.f32.mrf.mxu0
  %v1957 = vadd.f32 %v286, %v1956
  %v1958 = vpop.f32.mrf.mxu0
  %v1959 = vadd.f32 %v286, %v1958
  %1960 = vdwg.mxu0
  %1961 = vmatpush.bf16.msra.mxu0 %v1162
  %1962 = vmatpush.bf16.msra.mxu0 %v1158
  %1963 = vmatpush.bf16.msra.mxu0 %v1154
  %1964 = vmatpush.bf16.msra.mxu0 %v1150
  %1965 = vmatpush.bf16.msra.mxu0 %v1146
  %1966 = vmatpush.bf16.msra.mxu0 %v1142
  %1967 = vmatpush.bf16.msra.mxu0 %v1138
  %1968 = vmatpush.bf16.msra.mxu0 %v1134
  %1969 = vmatmul.bf16.gmra.mxu0 %v316
  %v1970 = vpop.f32.mrf.mxu0
  %v1971 = vadd.f32 %v1957, %v1970
  %v1972 = vpop.f32.mrf.mxu0
  %v1973 = vadd.f32 %v1959, %v1972
  %1974 = vdwg.mxu0
  %1975 = vmatpush.bf16.msra.mxu0 %v1194
  %1976 = vmatpush.bf16.msra.mxu0 %v1190
  %1977 = vmatpush.bf16.msra.mxu0 %v1186
  %1978 = vmatpush.bf16.msra.mxu0 %v1182
  %1979 = vmatpush.bf16.msra.mxu0 %v1178
  %1980 = vmatpush.bf16.msra.mxu0 %v1174
  %1981 = vmatpush.bf16.msra.mxu0 %v1170
  %1982 = vmatpush.bf16.msra.mxu0 %v1166
  %1983 = vmatmul.bf16.gmra.mxu0 %v317
  %v1984 = vpop.f32.mrf.mxu0
  %v1985 = vadd.f32 %v1971, %v1984
  %v1986 = vpop.f32.mrf.mxu0
  %v1987 = vadd.f32 %v1973, %v1986
  %1988 = vdwg.mxu0
  %1989 = vmatpush.bf16.msra.mxu0 %v1226
  %1990 = vmatpush.bf16.msra.mxu0 %v1222
  %1991 = vmatpush.bf16.msra.mxu0 %v1218
  %1992 = vmatpush.bf16.msra.mxu0 %v1214
  %1993 = vmatpush.bf16.msra.mxu0 %v1210
  %1994 = vmatpush.bf16.msra.mxu0 %v1206
  %1995 = vmatpush.bf16.msra.mxu0 %v1202
  %1996 = vmatpush.bf16.msra.mxu0 %v1198
  %1997 = vmatmul.bf16.gmra.mxu0 %v318
  %v1998 = vpop.f32.mrf.mxu0
  %v1999 = vadd.f32 %v1985, %v1998
  %v2000 = vpop.f32.mrf.mxu0
  %v2001 = vadd.f32 %v1987, %v2000
  %2002 = vdwg.mxu0
  %2003 = vmatpush.bf16.msra.mxu0 %v1258
  %2004 = vmatpush.bf16.msra.mxu0 %v1254
  %2005 = vmatpush.bf16.msra.mxu0 %v1250
  %2006 = vmatpush.bf16.msra.mxu0 %v1246
  %2007 = vmatpush.bf16.msra.mxu0 %v1242
  %2008 = vmatpush.bf16.msra.mxu0 %v1238
  %2009 = vmatpush.bf16.msra.mxu0 %v1234
  %2010 = vmatpush.bf16.msra.mxu0 %v1230
  %2011 = vmatmul.bf16.gmra.mxu0 %v319
  %v2012 = vpop.f32.mrf.mxu0
  %v2013 = vadd.f32 %v1999, %v2012
  %v2014 = vpop.f32.mrf.mxu0
  %v2015 = vadd.f32 %v2001, %v2014
  %2016 = vdwg.mxu0
  %2017 = vmatpush.bf16.msra.mxu0 %v1290
  %2018 = vmatpush.bf16.msra.mxu0 %v1286
  %2019 = vmatpush.bf16.msra.mxu0 %v1282
  %2020 = vmatpush.bf16.msra.mxu0 %v1278
  %2021 = vmatpush.bf16.msra.mxu0 %v1274
  %2022 = vmatpush.bf16.msra.mxu0 %v1270
  %2023 = vmatpush.bf16.msra.mxu0 %v1266
  %2024 = vmatpush.bf16.msra.mxu0 %v1262
  %2025 = vmatmul.bf16.gmra.mxu0 %v320
  %v2026 = vpop.f32.mrf.mxu0
  %v2027 = vadd.f32 %v2013, %v2026
  %v2028 = vpop.f32.mrf.mxu0
  %v2029 = vadd.f32 %v2015, %v2028
  %2030 = vdwg.mxu0
  %2031 = vmatpush.bf16.msra.mxu0 %v1322
  %2032 = vmatpush.bf16.msra.mxu0 %v1318
  %2033 = vmatpush.bf16.msra.mxu0 %v1314
  %2034 = vmatpush.bf16.msra.mxu0 %v1310
  %2035 = vmatpush.bf16.msra.mxu0 %v1306
  %2036 = vmatpush.bf16.msra.mxu0 %v1302
  %2037 = vmatpush.bf16.msra.mxu0 %v1298
  %2038 = vmatpush.bf16.msra.mxu0 %v1294
  %2039 = vmatmul.bf16.gmra.mxu0 %v321
  %v2040 = vpop.f32.mrf.mxu0
  %v2041 = vadd.f32 %v2027, %v2040
  %v2042 = vpop.f32.mrf.mxu0
  %v2043 = vadd.f32 %v2029, %v2042
  %2044 = vdwg.mxu0
  %2045 = vmatpush.bf16.msra.mxu0 %v1354
  %2046 = vmatpush.bf16.msra.mxu0 %v1350
  %2047 = vmatpush.bf16.msra.mxu0 %v1346
  %2048 = vmatpush.bf16.msra.mxu0 %v1342
  %2049 = vmatpush.bf16.msra.mxu0 %v1338
  %2050 = vmatpush.bf16.msra.mxu0 %v1334
  %2051 = vmatpush.bf16.msra.mxu0 %v1330
  %2052 = vmatpush.bf16.msra.mxu0 %v1326
  %2053 = vmatmul.bf16.gmra.mxu0 %v322
  %v2054 = vpop.f32.mrf.mxu0
  %v2055 = vadd.f32 %v2041, %v2054
  %v2056 = vpop.f32.mrf.mxu0
  %v2057 = vadd.f32 %v2043, %v2056
  %2058 = vdwg.mxu0
  %v2059 = vmax.f32 %v1719, 0.0
  %v2060 = vmax.f32 %v1831, 0.0
  %v2061 = vmax.f32 %v1943, 0.0
  %v2062 = vmax.f32 %v2055, 0.0
  %v2063 = vmax.f32 %v1721, 0.0
  %v2064 = vmax.f32 %v1833, 0.0
  %v2065 = vmax.f32 %v1945, 0.0
  %v2066 = vmax.f32 %v2057, 0.0
  %v2067 = vpack.c.bf16 %v2060, %v2059
  %v2068 = vpack.c.bf16 %v2062, %v2061
  %v2069 = vpack.c.bf16 %v2064, %v2063
  %v2070 = vpack.c.bf16 %v2066, %v2065
  %2071 = vst [vmem:[%s3] sm:$0xff] %v2067
  %2072 = vst [vmem:[%s3 + $0x8] sm:$0xff] %v2068
  %2073 = vst [vmem:[%s3 + $0x10] sm:$0xff] %v2069
  %2074 = vst [vmem:[%s3 + $0x18] sm:$0xff] %v2070
  %v2075 = vadd.f32 %v2059, %v2063
  %v2076 = vrot.slane %v2075, 4
  %v2077 = vadd.f32 %v2075, %v2076
  %v2078 = vrot.slane %v2077, 2
  %v2079 = vadd.f32 %v2077, %v2078
  %v2080 = vrot.slane %v2079, 1
  %v2081 = vadd.f32 %v2079, %v2080
  %v2082 = vadd.f32 %v2060, %v2064
  %v2083 = vrot.slane %v2082, 4
  %v2084 = vadd.f32 %v2082, %v2083
  %v2085 = vrot.slane %v2084, 2
  %v2086 = vadd.f32 %v2084, %v2085
  %v2087 = vrot.slane %v2086, 1
  %v2088 = vadd.f32 %v2086, %v2087
  %v2089 = vadd.f32 %v2061, %v2065
  %v2090 = vrot.slane %v2089, 4
  %v2091 = vadd.f32 %v2089, %v2090
  %v2092 = vrot.slane %v2091, 2
  %v2093 = vadd.f32 %v2091, %v2092
  %v2094 = vrot.slane %v2093, 1
  %v2095 = vadd.f32 %v2093, %v2094
  %v2096 = vadd.f32 %v2062, %v2066
  %v2097 = vrot.slane %v2096, 4
  %v2098 = vadd.f32 %v2096, %v2097
  %v2099 = vrot.slane %v2098, 2
  %v2100 = vadd.f32 %v2098, %v2099
  %v2101 = vrot.slane %v2100, 1
  %v2102 = vadd.f32 %v2100, %v2101
  %v2103 = vmul.f32 %v2059, %v2059
  %v2104 = vmul.f32 %v2060, %v2060
  %v2105 = vmul.f32 %v2061, %v2061
  %v2106 = vmul.f32 %v2062, %v2062
  %v2107 = vmul.f32 %v2063, %v2063
  %v2108 = vmul.f32 %v2064, %v2064
  %v2109 = vmul.f32 %v2065, %v2065
  %v2110 = vmul.f32 %v2066, %v2066
  %v2111 = vadd.f32 %v2103, %v2107
  %v2112 = vrot.slane %v2111, 4
  %v2113 = vadd.f32 %v2111, %v2112
  %v2114 = vrot.slane %v2113, 2
  %v2115 = vadd.f32 %v2113, %v2114
  %v2116 = vrot.slane %v2115, 1
  %v2117 = vadd.f32 %v2115, %v2116
  %v2118 = vadd.f32 %v2104, %v2108
  %v2119 = vrot.slane %v2118, 4
  %v2120 = vadd.f32 %v2118, %v2119
  %v2121 = vrot.slane %v2120, 2
  %v2122 = vadd.f32 %v2120, %v2121
  %v2123 = vrot.slane %v2122, 1
  %v2124 = vadd.f32 %v2122, %v2123
  %v2125 = vadd.f32 %v2105, %v2109
  %v2126 = vrot.slane %v2125, 4
  %v2127 = vadd.f32 %v2125, %v2126
  %v2128 = vrot.slane %v2127, 2
  %v2129 = vadd.f32 %v2127, %v2128
  %v2130 = vrot.slane %v2129, 1
  %v2131 = vadd.f32 %v2129, %v2130
  %v2132 = vadd.f32 %v2106, %v2110
  %v2133 = vrot.slane %v2132, 4
  %v2134 = vadd.f32 %v2132, %v2133
  %v2135 = vrot.slane %v2134, 2
  %v2136 = vadd.f32 %v2134, %v2135
  %v2137 = vrot.slane %v2136, 1
  %v2138 = vadd.f32 %v2136, %v2137
  %2139 = vst [vmem:[%s4] sm:$0xff] %v2081
  %2140 = vst [vmem:[%s4 + $0x8] sm:$0xff] %v2088
  %2141 = vst [vmem:[%s4 + $0x10] sm:$0xff] %v2095
  %2142 = vst [vmem:[%s4 + $0x18] sm:$0xff] %v2102
  %2143 = vst [vmem:[%s5] sm:$0xff] %v2117
  %2144 = vst [vmem:[%s5 + $0x8] sm:$0xff] %v2124
  %2145 = vst [vmem:[%s5 + $0x10] sm:$0xff] %v2131
  %2146 = vst [vmem:[%s5 + $0x18] sm:$0xff] %v2138
  // Predicated region
  $region14: #{_lambda_.13} parent=0 // pred_check
    _
  $region15: #{_lambda_.13} parent=0 // pred_check_branch
    %2148 = sbr.rel (0) target = $region17
  $region16: #{_lambda_.13} parent=0 // pred_region
    _
  $region17: #{_lambda_.13} parent=0 // pred_fallthru
    _
  // Predicated region
  $region18: #{_lambda_.13} parent=0 // pred_check
    _
  $region19: #{_lambda_.13} parent=0 // pred_check_branch
    %2150 = sbr.rel (0) target = $region21
  $region20: #{_lambda_.13} parent=0 // pred_region
    _
  $region21: #{_lambda_.13} parent=0 // pred_fallthru
    _
  // Predicated region
  $region22: #{_lambda_.13} parent=0 // pred_check
    _
  $region23: #{_lambda_.13} parent=0 // pred_check_branch
    %2152 = sbr.rel (0) target = $region25
  $region24: #{_lambda_.13} parent=0 // pred_region
    _
  $region25: #{_lambda_.13} parent=0 // pred_fallthru
    _
  // Predicated region
  $region26: #{_lambda_.13} parent=0 // pred_check
    _
  $region27: #{_lambda_.13} parent=0 // pred_check_branch
    %2154 = sbr.rel (0) target = $region29
  $region28: #{_lambda_.13} parent=0 // pred_region
    _
  $region29: #{_lambda_.13} parent=0 // pred_fallthru
    _
  // Predicated region
  $region30: #{_lambda_.13} parent=0 // pred_check
    _
  $region31: #{_lambda_.13} parent=0 // pred_check_branch
    %2156 = sbr.rel (0) target = $region33
  $region32: #{_lambda_.13} parent=0 // pred_region
    _
  $region33: #{_lambda_.13} parent=0 // pred_fallthru
    _
  // Predicated region
  $region34: #{_lambda_.13} parent=0 // pred_check
    _
  $region35: #{_lambda_.13} parent=0 // pred_check_branch
    %2158 = sbr.rel (0) target = $region37
  $region36: #{_lambda_.13} parent=0 // pred_region
    _
  $region37: #{_lambda_.13} parent=0 // pred_fallthru
    _

// kernel: _lambda_.14
$region0: #{_lambda_.14}
  #allocation0 [shape = 'u32[]', space=smem, size = 0x4, offset = 0x4, fixed_abs, tag = 'smem constant byte address 0x4 - core index']
  #allocation1 [shape = 'u32[72,128]{1,0:T(1,128)}', space=vmem, size = 0x9000, scoped, tag = 'internal scratch']
  %s0 = inlined_call_operand.vmem [shape: bf16[16,512], index: 0, kind: input, shape index: {}]
  %s1 = inlined_call_operand.vmem [shape: bf16[512,256], index: 1, kind: input, shape index: {}]
  %s2 = inlined_call_operand.vmem [shape: f32[1,256], index: 2, kind: input, shape index: {}]
  %s3 = inlined_call_operand.vmem [shape: bf16[16,256], index: 3, kind: output, shape index: {0}]
  %s4 = inlined_call_operand.vmem [shape: f32[8,256], index: 4, kind: output, shape index: {1}]
  %s5 = inlined_call_operand.vmem [shape: f32[8,256], index: 5, kind: output, shape index: {2}]
  %6 = xla_tuple %s3, %s4, %s5
  %s7 = sld [smem:[#allocation0]]
  $region38: #{_lambda_.14} parent=0
    _
  %s9 = ssub.s32 1, %s7
  %s10 = scalar_select 0, %s9, %s7
  // Predicated region
  $region2: #{_lambda_.14} parent=0 // pred_check
    _
  $region3: #{_lambda_.14} parent=0 // pred_check_branch
    %12 = sbr.rel (0) target = $region5
  $region4: #{_lambda_.14} parent=0 // pred_region
    _
  $region5: #{_lambda_.14} parent=0 // pred_fallthru
    _
  // Predicated region
  $region6: #{_lambda_.14} parent=0 // pred_check
    _
  $region7: #{_lambda_.14} parent=0 // pred_check_branch
    %14 = sbr.rel (0) target = $region9
  $region8: #{_lambda_.14} parent=0 // pred_region
    _
  $region9: #{_lambda_.14} parent=0 // pred_fallthru
    _
  // Predicated region
  $region10: #{_lambda_.14} parent=0 // pred_check
    _
  $region11: #{_lambda_.14} parent=0 // pred_check_branch
    %16 = sbr.rel (0) target = $region13
  $region12: #{_lambda_.14} parent=0 // pred_region
    _
  $region13: #{_lambda_.14} parent=0 // pred_fallthru
    _
  %v17 = vld [vmem:[%s0] sm:$0xff]
  %v18 = vld [vmem:[%s0 + $0x8] sm:$0xff]
  %v19 = vld [vmem:[%s0 + $0x10] sm:$0xff]
  %v20 = vld [vmem:[%s0 + $0x18] sm:$0xff]
  %v21 = vld [vmem:[%s1] sm:$0xff]
  %v22 = vld [vmem:[%s1 + $0x8] sm:$0xff]
  %v23 = vld [vmem:[%s1 + $0x10] sm:$0xff]
  %v24 = vld [vmem:[%s1 + $0x18] sm:$0xff]
  %v25 = vld [vmem:[%s1 + $0x20] sm:$0xff]
  %v26 = vld [vmem:[%s1 + $0x28] sm:$0xff]
  %v27 = vld [vmem:[%s1 + $0x30] sm:$0xff]
  %v28 = vld [vmem:[%s1 + $0x38] sm:$0xff]
  %v29 = vld [vmem:[%s1 + $0x40] sm:$0xff]
  %v30 = vld [vmem:[%s1 + $0x48] sm:$0xff]
  %v31 = vld [vmem:[%s1 + $0x50] sm:$0xff]
  %v32 = vld [vmem:[%s1 + $0x58] sm:$0xff]
  %v33 = vld [vmem:[%s1 + $0x60] sm:$0xff]
  %v34 = vld [vmem:[%s1 + $0x68] sm:$0xff]
  %v35 = vld [vmem:[%s1 + $0x70] sm:$0xff]
  %v36 = vld [vmem:[%s1 + $0x78] sm:$0xff]
  %v37 = vld [vmem:[%s1 + $0x80] sm:$0xff]
  %v38 = vld [vmem:[%s1 + $0x88] sm:$0xff]
  %v39 = vld [vmem:[%s1 + $0x90] sm:$0xff]
  %v40 = vld [vmem:[%s1 + $0x98] sm:$0xff]
  %v41 = vld [vmem:[%s1 + $0xa0] sm:$0xff]
  %v42 = vld [vmem:[%s1 + $0xa8] sm:$0xff]
  %v43 = vld [vmem:[%s1 + $0xb0] sm:$0xff]
  %v44 = vld [vmem:[%s1 + $0xb8] sm:$0xff]
  %v45 = vld [vmem:[%s1 + $0xc0] sm:$0xff]
  %v46 = vld [vmem:[%s1 + $0xc8] sm:$0xff]
  %v47 = vld [vmem:[%s1 + $0xd0] sm:$0xff]
  %v48 = vld [vmem:[%s1 + $0xd8] sm:$0xff]
  %v49 = vld [vmem:[%s1 + $0xe0] sm:$0xff]
  %v50 = vld [vmem:[%s1 + $0xe8] sm:$0xff]
  %v51 = vld [vmem:[%s1 + $0xf0] sm:$0xff]
  %v52 = vld [vmem:[%s1 + $0xf8] sm:$0xff]
  %v53 = vld [vmem:[%s1 + $0x100] sm:$0xff]
  %v54 = vld [vmem:[%s1 + $0x108] sm:$0xff]
  %v55 = vld [vmem:[%s1 + $0x110] sm:$0xff]
  %v56 = vld [vmem:[%s1 + $0x118] sm:$0xff]
  %v57 = vld [vmem:[%s1 + $0x120] sm:$0xff]
  %v58 = vld [vmem:[%s1 + $0x128] sm:$0xff]
  %v59 = vld [vmem:[%s1 + $0x130] sm:$0xff]
  %v60 = vld [vmem:[%s1 + $0x138] sm:$0xff]
  %v61 = vld [vmem:[%s1 + $0x140] sm:$0xff]
  %v62 = vld [vmem:[%s1 + $0x148] sm:$0xff]
  %v63 = vld [vmem:[%s1 + $0x150] sm:$0xff]
  %v64 = vld [vmem:[%s1 + $0x158] sm:$0xff]
  %v65 = vld [vmem:[%s1 + $0x160] sm:$0xff]
  %v66 = vld [vmem:[%s1 + $0x168] sm:$0xff]
  %v67 = vld [vmem:[%s1 + $0x170] sm:$0xff]
  %v68 = vld [vmem:[%s1 + $0x178] sm:$0xff]
  %v69 = vld [vmem:[%s1 + $0x180] sm:$0xff]
  %v70 = vld [vmem:[%s1 + $0x188] sm:$0xff]
  %v71 = vld [vmem:[%s1 + $0x190] sm:$0xff]
  %v72 = vld [vmem:[%s1 + $0x198] sm:$0xff]
  %v73 = vld [vmem:[%s1 + $0x1a0] sm:$0xff]
  %v74 = vld [vmem:[%s1 + $0x1a8] sm:$0xff]
  %v75 = vld [vmem:[%s1 + $0x1b0] sm:$0xff]
  %v76 = vld [vmem:[%s1 + $0x1b8] sm:$0xff]
  %v77 = vld [vmem:[%s1 + $0x1c0] sm:$0xff]
  %v78 = vld [vmem:[%s1 + $0x1c8] sm:$0xff]
  %v79 = vld [vmem:[%s1 + $0x1d0] sm:$0xff]
  %v80 = vld [vmem:[%s1 + $0x1d8] sm:$0xff]
  %v81 = vld [vmem:[%s1 + $0x1e0] sm:$0xff]
  %v82 = vld [vmem:[%s1 + $0x1e8] sm:$0xff]
  %v83 = vld [vmem:[%s1 + $0x1f0] sm:$0xff]
  %v84 = vld [vmem:[%s1 + $0x1f8] sm:$0xff]
  %v85 = vld [vmem:[%s2] sm:$0x3]
  %v87 = vperm.slane %v85, 0
  %v88 = vperm.slane %v85, 1
  %v95 = vunpack.c.l.b16 %v17
  %v96 = vunpack.c.h.b16 %v17
  %v97 = vunpack.c.l.b16 %v18
  %v98 = vunpack.c.h.b16 %v18
  %v99 = vunpack.c.l.b16 %v19
  %v100 = vunpack.c.h.b16 %v19
  %v101 = vunpack.c.l.b16 %v20
  %v102 = vunpack.c.h.b16 %v20
  %v103 = vpack.c.b16 %v99, %v95
  %v104 = vpack.c.b16 %v100, %v96
  %v105 = vpack.c.b16 %v101, %v97
  %v106 = vpack.c.b16 %v102, %v98
  %v175 = vunpack.c.l.b16 %v21
  %v176 = vunpack.c.h.b16 %v21
  %v177 = vunpack.c.l.b16 %v22
  %v178 = vunpack.c.h.b16 %v22
  %v179 = vunpack.c.l.b16 %v23
  %v180 = vunpack.c.h.b16 %v23
  %v181 = vunpack.c.l.b16 %v24
  %v182 = vunpack.c.h.b16 %v24
  %v183 = vunpack.c.l.b16 %v25
  %v184 = vunpack.c.h.b16 %v25
  %v185 = vunpack.c.l.b16 %v26
  %v186 = vunpack.c.h.b16 %v26
  %v187 = vunpack.c.l.b16 %v27
  %v188 = vunpack.c.h.b16 %v27
  %v189 = vunpack.c.l.b16 %v28
  %v190 = vunpack.c.h.b16 %v28
  %v191 = vunpack.c.l.b16 %v29
  %v192 = vunpack.c.h.b16 %v29
  %v193 = vunpack.c.l.b16 %v30
  %v194 = vunpack.c.h.b16 %v30
  %v195 = vunpack.c.l.b16 %v31
  %v196 = vunpack.c.h.b16 %v31
  %v197 = vunpack.c.l.b16 %v32
  %v198 = vunpack.c.h.b16 %v32
  %v199 = vunpack.c.l.b16 %v33
  %v200 = vunpack.c.h.b16 %v33
  %v201 = vunpack.c.l.b16 %v34
  %v202 = vunpack.c.h.b16 %v34
  %v203 = vunpack.c.l.b16 %v35
  %v204 = vunpack.c.h.b16 %v35
  %v205 = vunpack.c.l.b16 %v36
  %v206 = vunpack.c.h.b16 %v36
  %v207 = vunpack.c.l.b16 %v37
  %v208 = vunpack.c.h.b16 %v37
  %v209 = vunpack.c.l.b16 %v38
  %v210 = vunpack.c.h.b16 %v38
  %v211 = vunpack.c.l.b16 %v39
  %v212 = vunpack.c.h.b16 %v39
  %v213 = vunpack.c.l.b16 %v40
  %v214 = vunpack.c.h.b16 %v40
  %v215 = vunpack.c.l.b16 %v41
  %v216 = vunpack.c.h.b16 %v41
  %v217 = vunpack.c.l.b16 %v42
  %v218 = vunpack.c.h.b16 %v42
  %v219 = vunpack.c.l.b16 %v43
  %v220 = vunpack.c.h.b16 %v43
  %v221 = vunpack.c.l.b16 %v44
  %v222 = vunpack.c.h.b16 %v44
  %v223 = vunpack.c.l.b16 %v45
  %v224 = vunpack.c.h.b16 %v45
  %v225 = vunpack.c.l.b16 %v46
  %v226 = vunpack.c.h.b16 %v46
  %v227 = vunpack.c.l.b16 %v47
  %v228 = vunpack.c.h.b16 %v47
  %v229 = vunpack.c.l.b16 %v48
  %v230 = vunpack.c.h.b16 %v48
  %v231 = vunpack.c.l.b16 %v49
  %v232 = vunpack.c.h.b16 %v49
  %v233 = vunpack.c.l.b16 %v50
  %v234 = vunpack.c.h.b16 %v50
  %v235 = vunpack.c.l.b16 %v51
  %v236 = vunpack.c.h.b16 %v51
  %v237 = vunpack.c.l.b16 %v52
  %v238 = vunpack.c.h.b16 %v52
  %v239 = vunpack.c.l.b16 %v53
  %v240 = vunpack.c.h.b16 %v53
  %v241 = vunpack.c.l.b16 %v54
  %v242 = vunpack.c.h.b16 %v54
  %v243 = vunpack.c.l.b16 %v55
  %v244 = vunpack.c.h.b16 %v55
  %v245 = vunpack.c.l.b16 %v56
  %v246 = vunpack.c.h.b16 %v56
  %v247 = vunpack.c.l.b16 %v57
  %v248 = vunpack.c.h.b16 %v57
  %v249 = vunpack.c.l.b16 %v58
  %v250 = vunpack.c.h.b16 %v58
  %v251 = vunpack.c.l.b16 %v59
  %v252 = vunpack.c.h.b16 %v59
  %v253 = vunpack.c.l.b16 %v60
  %v254 = vunpack.c.h.b16 %v60
  %v255 = vunpack.c.l.b16 %v61
  %v256 = vunpack.c.h.b16 %v61
  %v257 = vunpack.c.l.b16 %v62
  %v258 = vunpack.c.h.b16 %v62
  %v259 = vunpack.c.l.b16 %v63
  %v260 = vunpack.c.h.b16 %v63
  %v261 = vunpack.c.l.b16 %v64
  %v262 = vunpack.c.h.b16 %v64
  %v263 = vunpack.c.l.b16 %v65
  %v264 = vunpack.c.h.b16 %v65
  %v265 = vunpack.c.l.b16 %v66
  %v266 = vunpack.c.h.b16 %v66
  %v267 = vunpack.c.l.b16 %v67
  %v268 = vunpack.c.h.b16 %v67
  %v269 = vunpack.c.l.b16 %v68
  %v270 = vunpack.c.h.b16 %v68
  %v271 = vunpack.c.l.b16 %v69
  %v272 = vunpack.c.h.b16 %v69
  %v273 = vunpack.c.l.b16 %v70
  %v274 = vunpack.c.h.b16 %v70
  %v275 = vunpack.c.l.b16 %v71
  %v276 = vunpack.c.h.b16 %v71
  %v277 = vunpack.c.l.b16 %v72
  %v278 = vunpack.c.h.b16 %v72
  %v279 = vunpack.c.l.b16 %v73
  %v280 = vunpack.c.h.b16 %v73
  %v281 = vunpack.c.l.b16 %v74
  %v282 = vunpack.c.h.b16 %v74
  %v283 = vunpack.c.l.b16 %v75
  %v284 = vunpack.c.h.b16 %v75
  %v285 = vunpack.c.l.b16 %v76
  %v286 = vunpack.c.h.b16 %v76
  %v287 = vunpack.c.l.b16 %v77
  %v288 = vunpack.c.h.b16 %v77
  %v289 = vunpack.c.l.b16 %v78
  %v290 = vunpack.c.h.b16 %v78
  %v291 = vunpack.c.l.b16 %v79
  %v292 = vunpack.c.h.b16 %v79
  %v293 = vunpack.c.l.b16 %v80
  %v294 = vunpack.c.h.b16 %v80
  %v295 = vunpack.c.l.b16 %v81
  %v296 = vunpack.c.h.b16 %v81
  %v297 = vunpack.c.l.b16 %v82
  %v298 = vunpack.c.h.b16 %v82
  %v299 = vunpack.c.l.b16 %v83
  %v300 = vunpack.c.h.b16 %v83
  %v301 = vunpack.c.l.b16 %v84
  %v302 = vunpack.c.h.b16 %v84
  %v303 = vpack.c.b16 %v177, %v175
  %v304 = vpack.c.b16 %v178, %v176
  %v305 = vpack.c.b16 %v181, %v179
  %v306 = vpack.c.b16 %v182, %v180
  %v307 = vpack.c.b16 %v185, %v183
  %v308 = vpack.c.b16 %v186, %v184
  %v309 = vpack.c.b16 %v189, %v187
  %v310 = vpack.c.b16 %v190, %v188
  %v311 = vpack.c.b16 %v193, %v191
  %v312 = vpack.c.b16 %v194, %v192
  %v313 = vpack.c.b16 %v197, %v195
  %v314 = vpack.c.b16 %v198, %v196
  %v315 = vpack.c.b16 %v201, %v199
  %v316 = vpack.c.b16 %v202, %v200
  %v317 = vpack.c.b16 %v205, %v203
  %v318 = vpack.c.b16 %v206, %v204
  %v319 = vpack.c.b16 %v209, %v207
  %v320 = vpack.c.b16 %v210, %v208
  %v321 = vpack.c.b16 %v213, %v211
  %v322 = vpack.c.b16 %v214, %v212
  %v323 = vpack.c.b16 %v217, %v215
  %v324 = vpack.c.b16 %v218, %v216
  %v325 = vpack.c.b16 %v221, %v219
  %v326 = vpack.c.b16 %v222, %v220
  %v327 = vpack.c.b16 %v225, %v223
  %v328 = vpack.c.b16 %v226, %v224
  %v329 = vpack.c.b16 %v229, %v227
  %v330 = vpack.c.b16 %v230, %v228
  %v331 = vpack.c.b16 %v233, %v231
  %v332 = vpack.c.b16 %v234, %v232
  %v333 = vpack.c.b16 %v237, %v235
  %v334 = vpack.c.b16 %v238, %v236
  %v335 = vpack.c.b16 %v241, %v239
  %v336 = vpack.c.b16 %v242, %v240
  %v337 = vpack.c.b16 %v245, %v243
  %v338 = vpack.c.b16 %v246, %v244
  %v339 = vpack.c.b16 %v249, %v247
  %v340 = vpack.c.b16 %v250, %v248
  %v341 = vpack.c.b16 %v253, %v251
  %v342 = vpack.c.b16 %v254, %v252
  %v343 = vpack.c.b16 %v257, %v255
  %v344 = vpack.c.b16 %v258, %v256
  %v345 = vpack.c.b16 %v261, %v259
  %v346 = vpack.c.b16 %v262, %v260
  %v347 = vpack.c.b16 %v265, %v263
  %v348 = vpack.c.b16 %v266, %v264
  %v349 = vpack.c.b16 %v269, %v267
  %v350 = vpack.c.b16 %v270, %v268
  %v351 = vpack.c.b16 %v273, %v271
  %v352 = vpack.c.b16 %v274, %v272
  %v353 = vpack.c.b16 %v277, %v275
  %v354 = vpack.c.b16 %v278, %v276
  %v355 = vpack.c.b16 %v281, %v279
  %v356 = vpack.c.b16 %v282, %v280
  %v357 = vpack.c.b16 %v285, %v283
  %v358 = vpack.c.b16 %v286, %v284
  %v359 = vpack.c.b16 %v289, %v287
  %v360 = vpack.c.b16 %v290, %v288
  %v361 = vpack.c.b16 %v293, %v291
  %v362 = vpack.c.b16 %v294, %v292
  %v363 = vpack.c.b16 %v297, %v295
  %v364 = vpack.c.b16 %v298, %v296
  %v365 = vpack.c.b16 %v301, %v299
  %v366 = vpack.c.b16 %v302, %v300
  %431 = vmatpush.bf16.msra.mxu0 %v317
  %432 = vmatpush.bf16.msra.mxu0 %v315
  %433 = vmatpush.bf16.msra.mxu0 %v313
  %434 = vmatpush.bf16.msra.mxu0 %v311
  %435 = vmatpush.bf16.msra.mxu0 %v309
  %436 = vmatpush.bf16.msra.mxu0 %v307
  %437 = vmatpush.bf16.msra.mxu0 %v305
  %438 = vmatpush.bf16.msra.mxu0 %v303
  %439 = vmatmul.bf16.gmra.mxu0 %v103
  %v440 = vpop.f32.mrf.mxu0
  %v441 = vadd.f32 %v87, %v440
  %v442 = vpop.f32.mrf.mxu0
  %v443 = vadd.f32 %v87, %v442
  %444 = vdwg.mxu0
  %445 = vmatpush.bf16.msra.mxu0 %v333
  %446 = vmatpush.bf16.msra.mxu0 %v331
  %447 = vmatpush.bf16.msra.mxu0 %v329
  %448 = vmatpush.bf16.msra.mxu0 %v327
  %449 = vmatpush.bf16.msra.mxu0 %v325
  %450 = vmatpush.bf16.msra.mxu0 %v323
  %451 = vmatpush.bf16.msra.mxu0 %v321
  %452 = vmatpush.bf16.msra.mxu0 %v319
  %453 = vmatmul.bf16.gmra.mxu0 %v104
  %v454 = vpop.f32.mrf.mxu0
  %v455 = vadd.f32 %v441, %v454
  %v456 = vpop.f32.mrf.mxu0
  %v457 = vadd.f32 %v443, %v456
  %458 = vdwg.mxu0
  %459 = vmatpush.bf16.msra.mxu0 %v349
  %460 = vmatpush.bf16.msra.mxu0 %v347
  %461 = vmatpush.bf16.msra.mxu0 %v345
  %462 = vmatpush.bf16.msra.mxu0 %v343
  %463 = vmatpush.bf16.msra.mxu0 %v341
  %464 = vmatpush.bf16.msra.mxu0 %v339
  %465 = vmatpush.bf16.msra.mxu0 %v337
  %466 = vmatpush.bf16.msra.mxu0 %v335
  %467 = vmatmul.bf16.gmra.mxu0 %v105
  %v468 = vpop.f32.mrf.mxu0
  %v469 = vadd.f32 %v455, %v468
  %v470 = vpop.f32.mrf.mxu0
  %v471 = vadd.f32 %v457, %v470
  %472 = vdwg.mxu0
  %473 = vmatpush.bf16.msra.mxu0 %v365
  %474 = vmatpush.bf16.msra.mxu0 %v363
  %475 = vmatpush.bf16.msra.mxu0 %v361
  %476 = vmatpush.bf16.msra.mxu0 %v359
  %477 = vmatpush.bf16.msra.mxu0 %v357
  %478 = vmatpush.bf16.msra.mxu0 %v355
  %479 = vmatpush.bf16.msra.mxu0 %v353
  %480 = vmatpush.bf16.msra.mxu0 %v351
  %481 = vmatmul.bf16.gmra.mxu0 %v106
  %v482 = vpop.f32.mrf.mxu0
  %v483 = vadd.f32 %v469, %v482
  %v484 = vpop.f32.mrf.mxu0
  %v485 = vadd.f32 %v471, %v484
  %486 = vdwg.mxu0
  %487 = vmatpush.bf16.msra.mxu0 %v318
  %488 = vmatpush.bf16.msra.mxu0 %v316
  %489 = vmatpush.bf16.msra.mxu0 %v314
  %490 = vmatpush.bf16.msra.mxu0 %v312
  %491 = vmatpush.bf16.msra.mxu0 %v310
  %492 = vmatpush.bf16.msra.mxu0 %v308
  %493 = vmatpush.bf16.msra.mxu0 %v306
  %494 = vmatpush.bf16.msra.mxu0 %v304
  %495 = vmatmul.bf16.gmra.mxu0 %v103
  %v496 = vpop.f32.mrf.mxu0
  %v497 = vadd.f32 %v88, %v496
  %v498 = vpop.f32.mrf.mxu0
  %v499 = vadd.f32 %v88, %v498
  %500 = vdwg.mxu0
  %501 = vmatpush.bf16.msra.mxu0 %v334
  %502 = vmatpush.bf16.msra.mxu0 %v332
  %503 = vmatpush.bf16.msra.mxu0 %v330
  %504 = vmatpush.bf16.msra.mxu0 %v328
  %505 = vmatpush.bf16.msra.mxu0 %v326
  %506 = vmatpush.bf16.msra.mxu0 %v324
  %507 = vmatpush.bf16.msra.mxu0 %v322
  %508 = vmatpush.bf16.msra.mxu0 %v320
  %509 = vmatmul.bf16.gmra.mxu0 %v104
  %v510 = vpop.f32.mrf.mxu0
  %v511 = vadd.f32 %v497, %v510
  %v512 = vpop.f32.mrf.mxu0
  %v513 = vadd.f32 %v499, %v512
  %514 = vdwg.mxu0
  %515 = vmatpush.bf16.msra.mxu0 %v350
  %516 = vmatpush.bf16.msra.mxu0 %v348
  %517 = vmatpush.bf16.msra.mxu0 %v346
  %518 = vmatpush.bf16.msra.mxu0 %v344
  %519 = vmatpush.bf16.msra.mxu0 %v342
  %520 = vmatpush.bf16.msra.mxu0 %v340
  %521 = vmatpush.bf16.msra.mxu0 %v338
  %522 = vmatpush.bf16.msra.mxu0 %v336
  %523 = vmatmul.bf16.gmra.mxu0 %v105
  %v524 = vpop.f32.mrf.mxu0
  %v525 = vadd.f32 %v511, %v524
  %v526 = vpop.f32.mrf.mxu0
  %v527 = vadd.f32 %v513, %v526
  %528 = vdwg.mxu0
  %529 = vmatpush.bf16.msra.mxu0 %v366
  %530 = vmatpush.bf16.msra.mxu0 %v364
  %531 = vmatpush.bf16.msra.mxu0 %v362
  %532 = vmatpush.bf16.msra.mxu0 %v360
  %533 = vmatpush.bf16.msra.mxu0 %v358
  %534 = vmatpush.bf16.msra.mxu0 %v356
  %535 = vmatpush.bf16.msra.mxu0 %v354
  %536 = vmatpush.bf16.msra.mxu0 %v352
  %537 = vmatmul.bf16.gmra.mxu0 %v106
  %v538 = vpop.f32.mrf.mxu0
  %v539 = vadd.f32 %v525, %v538
  %v540 = vpop.f32.mrf.mxu0
  %v541 = vadd.f32 %v527, %v540
  %542 = vdwg.mxu0
  %v543 = vmax.f32 %v483, 0.0
  %v544 = vmax.f32 %v539, 0.0
  %v545 = vmax.f32 %v485, 0.0
  %v546 = vmax.f32 %v541, 0.0
  %v547 = vpack.c.bf16 %v544, %v543
  %v548 = vpack.c.bf16 %v546, %v545
  %549 = vst [vmem:[%s3] sm:$0xff] %v547
  %550 = vst [vmem:[%s3 + $0x8] sm:$0xff] %v548
  %v551 = vadd.f32 %v543, %v545
  %v552 = vrot.slane %v551, 4
  %v553 = vadd.f32 %v551, %v552
  %v554 = vrot.slane %v553, 2
  %v555 = vadd.f32 %v553, %v554
  %v556 = vrot.slane %v555, 1
  %v557 = vadd.f32 %v555, %v556
  %v558 = vadd.f32 %v544, %v546
  %v559 = vrot.slane %v558, 4
  %v560 = vadd.f32 %v558, %v559
  %v561 = vrot.slane %v560, 2
  %v562 = vadd.f32 %v560, %v561
  %v563 = vrot.slane %v562, 1
  %v564 = vadd.f32 %v562, %v563
  %v565 = vmul.f32 %v543, %v543
  %v566 = vmul.f32 %v544, %v544
  %v567 = vmul.f32 %v545, %v545
  %v568 = vmul.f32 %v546, %v546
  %v569 = vadd.f32 %v565, %v567
  %v570 = vrot.slane %v569, 4
  %v571 = vadd.f32 %v569, %v570
  %v572 = vrot.slane %v571, 2
  %v573 = vadd.f32 %v571, %v572
  %v574 = vrot.slane %v573, 1
  %v575 = vadd.f32 %v573, %v574
  %v576 = vadd.f32 %v566, %v568
  %v577 = vrot.slane %v576, 4
  %v578 = vadd.f32 %v576, %v577
  %v579 = vrot.slane %v578, 2
  %v580 = vadd.f32 %v578, %v579
  %v581 = vrot.slane %v580, 1
  %v582 = vadd.f32 %v580, %v581
  %583 = vst [vmem:[%s4] sm:$0xff] %v557
  %584 = vst [vmem:[%s4 + $0x8] sm:$0xff] %v564
  %585 = vst [vmem:[%s5] sm:$0xff] %v575
  %586 = vst [vmem:[%s5 + $0x8] sm:$0xff] %v582
  // Predicated region
  $region14: #{_lambda_.14} parent=0 // pred_check
    _
  $region15: #{_lambda_.14} parent=0 // pred_check_branch
    %588 = sbr.rel (0) target = $region17
  $region16: #{_lambda_.14} parent=0 // pred_region
    _
  $region17: #{_lambda_.14} parent=0 // pred_fallthru
    _
  // Predicated region
  $region18: #{_lambda_.14} parent=0 // pred_check
    _
  $region19: #{_lambda_.14} parent=0 // pred_check_branch
    %590 = sbr.rel (0) target = $region21
  $region20: #{_lambda_.14} parent=0 // pred_region
    _
  $region21: #{_lambda_.14} parent=0 // pred_fallthru
    _
  // Predicated region
  $region22: #{_lambda_.14} parent=0 // pred_check
    _
  $region23: #{_lambda_.14} parent=0 // pred_check_branch
    %592 = sbr.rel (0) target = $region25
  $region24: #{_lambda_.14} parent=0 // pred_region
    _
  $region25: #{_lambda_.14} parent=0 // pred_fallthru
    _
  // Predicated region
  $region26: #{_lambda_.14} parent=0 // pred_check
    _
  $region27: #{_lambda_.14} parent=0 // pred_check_branch
    %594 = sbr.rel (0) target = $region29
  $region28: #{_lambda_.14} parent=0 // pred_region
    _
  $region29: #{_lambda_.14} parent=0 // pred_fallthru
    _
  // Predicated region
  $region30: #{_lambda_.14} parent=0 // pred_check
    _
  $region31: #{_lambda_.14} parent=0 // pred_check_branch
    %596 = sbr.rel (0) target = $region33
  $region32: #{_lambda_.14} parent=0 // pred_region
    _
  $region33: #{_lambda_.14} parent=0 // pred_fallthru
    _
  // Predicated region
  $region34: #{_lambda_.14} parent=0 // pred_check
    _
  $region35: #{_lambda_.14} parent=0 // pred_check_branch
    %598 = sbr.rel (0) target = $region37
  $region36: #{_lambda_.14} parent=0 // pred_region
    _
  $region37: #{_lambda_.14} parent=0 // pred_fallthru
    _

// kernel: mul.72
$region0: #{mul.72}
  %s0 = inlined_call_operand.vmem [shape: f32[4,32], index: 0, kind: input, shape index: {}]
  %s1 = inlined_call_operand.vmem [shape: f32[128], index: 1, kind: output, shape index: {}]
  $region1: #{mul.72} parent=0
    #allocation0 [shape = 'u8[4096]{0}', space=vmem, size = 0x1000, scoped, tag = 'scoped mem for output reshape']
    #allocation1 [shape = 'u8[4096]{0}', space=vmem, size = 0x1000, scoped, tag = 'scoped mem for input reshape']
    %s3 = ssub.s32 16, 1
    %v4 = vld [vmem:[%s0] sm:%s3]
    %5 = vst [vmem:[#allocation1] sm:%s3] %v4
    %v6 = vld [vmem:[#allocation1] sm:$0x1]
    %vm7 = vcmask 261120
    %8 = vst.msk [vmem:[#allocation0] sm:$0x1] %vm7, %v6
    %s9 = scalar_lea.vmem [#allocation1], 3
    %v10 = vld [vmem:[%s9] sm:$0x1]
    %11 = vrot.lane.b32.xlu0 %v10, 96
    %v12 = vpop.permute.xlu0 %11
    %vm13 = vcmask 1048320
    %14 = vst.msk [vmem:[#allocation0] sm:$0x1] %vm13, %v12
    %s15 = scalar_lea.vmem [#allocation1], 2
    %v16 = vld [vmem:[%s15] sm:$0x1]
    %17 = vrot.lane.b32.xlu0 %v16, 64
    %v18 = vpop.permute.xlu0 %17
    %vm19 = vcmask 785920
    %20 = vst.msk [vmem:[#allocation0] sm:$0x1] %vm19, %v18
    %s21 = scalar_lea.vmem [#allocation1], 1
    %v22 = vld [vmem:[%s21] sm:$0x1]
    %23 = vrot.lane.b32.xlu0 %v22, 32
    %v24 = vpop.permute.xlu0 %23
    %vm25 = vcmask 523520
    %26 = vst.msk [vmem:[#allocation0] sm:$0x1] %vm25, %v24
    %s28 = ssub.s32 2, 1
    %v29 = vld [vmem:[#allocation0] sm:%s28]
    %s31 = ssub.s32 2, 1
    %32 = vst [vmem:[%s1] sm:%s31] %v29

// kernel: tile.69
$region0: #{tile.69}
  #allocation0 [shape = 's32[1]{0}', space=sflag, size = 0x4, scoped, tag = 'scoped memory for tile.69']
  %s0 = inlined_call_operand.vmem [shape: f32[32], index: 0, kind: input, shape index: {}]
  %s1 = inlined_call_operand.vmem [shape: f32[4,32], index: 1, kind: output, shape index: {}]
  // Predicated region
  $region2: #{tile.69} parent=0 // pred_check
    _
  $region3: #{tile.69} parent=0 // pred_check_branch
    %3 = sbr.rel (0) target = $region5
  $region4: #{tile.69} parent=0 // pred_region
    _
  $region5: #{tile.69} parent=0 // pred_fallthru
    _
  %v4 = vld [vmem:[%s0] ss:$0 sm:$0xff]
  %5 = vst [vmem:[%s1] sm:$0xf] %v4

// kernel: _lambda_.15
$region0: #{_lambda_.15}
  #allocation0 [shape = 'u32[]', space=smem, size = 0x4, offset = 0x4, fixed_abs, tag = 'smem constant byte address 0x4 - core index']
  #allocation1 [shape = 'u32[72,128]{1,0:T(1,128)}', space=vmem, size = 0x9000, scoped, tag = 'internal scratch']
  %s0 = inlined_call_operand.vmem [shape: bf16[32,256], index: 0, kind: input, shape index: {}]
  %s1 = inlined_call_operand.vmem [shape: bf16[256,128], index: 1, kind: input, shape index: {}]
  %s2 = inlined_call_operand.vmem [shape: f32[1,128], index: 2, kind: input, shape index: {}]
  %s3 = inlined_call_operand.vmem [shape: bf16[32,128], index: 3, kind: output, shape index: {0}]
  %s4 = inlined_call_operand.vmem [shape: f32[8,128], index: 4, kind: output, shape index: {1}]
  %s5 = inlined_call_operand.vmem [shape: f32[8,128], index: 5, kind: output, shape index: {2}]
  %6 = xla_tuple %s3, %s4, %s5
  %s7 = sld [smem:[#allocation0]]
  $region38: #{_lambda_.15} parent=0
    _
  %s9 = ssub.s32 1, %s7
  %s10 = scalar_select 0, %s9, %s7
  // Predicated region
  $region2: #{_lambda_.15} parent=0 // pred_check
    _
  $region3: #{_lambda_.15} parent=0 // pred_check_branch
    %12 = sbr.rel (0) target = $region5
  $region4: #{_lambda_.15} parent=0 // pred_region
    _
  $region5: #{_lambda_.15} parent=0 // pred_fallthru
    _
  // Predicated region
  $region6: #{_lambda_.15} parent=0 // pred_check
    _
  $region7: #{_lambda_.15} parent=0 // pred_check_branch
    %14 = sbr.rel (0) target = $region9
  $region8: #{_lambda_.15} parent=0 // pred_region
    _
  $region9: #{_lambda_.15} parent=0 // pred_fallthru
    _
  // Predicated region
  $region10: #{_lambda_.15} parent=0 // pred_check
    _
  $region11: #{_lambda_.15} parent=0 // pred_check_branch
    %16 = sbr.rel (0) target = $region13
  $region12: #{_lambda_.15} parent=0 // pred_region
    _
  $region13: #{_lambda_.15} parent=0 // pred_fallthru
    _
  %v17 = vld [vmem:[%s0] sm:$0xff]
  %v18 = vld [vmem:[%s0 + $0x8] sm:$0xff]
  %v19 = vld [vmem:[%s0 + $0x10] sm:$0xff]
  %v20 = vld [vmem:[%s0 + $0x18] sm:$0xff]
  %v21 = vld [vmem:[%s1] sm:$0xf]
  %v22 = vld [vmem:[%s1 + $0x4] sm:$0xf]
  %v23 = vld [vmem:[%s1 + $0x8] sm:$0xf]
  %v24 = vld [vmem:[%s1 + $0xc] sm:$0xf]
  %v25 = vld [vmem:[%s1 + $0x10] sm:$0xf]
  %v26 = vld [vmem:[%s1 + $0x14] sm:$0xf]
  %v27 = vld [vmem:[%s1 + $0x18] sm:$0xf]
  %v28 = vld [vmem:[%s1 + $0x1c] sm:$0xf]
  %v29 = vld [vmem:[%s1 + $0x20] sm:$0xf]
  %v30 = vld [vmem:[%s1 + $0x24] sm:$0xf]
  %v31 = vld [vmem:[%s1 + $0x28] sm:$0xf]
  %v32 = vld [vmem:[%s1 + $0x2c] sm:$0xf]
  %v33 = vld [vmem:[%s1 + $0x30] sm:$0xf]
  %v34 = vld [vmem:[%s1 + $0x34] sm:$0xf]
  %v35 = vld [vmem:[%s1 + $0x38] sm:$0xf]
  %v36 = vld [vmem:[%s1 + $0x3c] sm:$0xf]
  %v37 = vld [vmem:[%s1 + $0x40] sm:$0xf]
  %v38 = vld [vmem:[%s1 + $0x44] sm:$0xf]
  %v39 = vld [vmem:[%s1 + $0x48] sm:$0xf]
  %v40 = vld [vmem:[%s1 + $0x4c] sm:$0xf]
  %v41 = vld [vmem:[%s1 + $0x50] sm:$0xf]
  %v42 = vld [vmem:[%s1 + $0x54] sm:$0xf]
  %v43 = vld [vmem:[%s1 + $0x58] sm:$0xf]
  %v44 = vld [vmem:[%s1 + $0x5c] sm:$0xf]
  %v45 = vld [vmem:[%s1 + $0x60] sm:$0xf]
  %v46 = vld [vmem:[%s1 + $0x64] sm:$0xf]
  %v47 = vld [vmem:[%s1 + $0x68] sm:$0xf]
  %v48 = vld [vmem:[%s1 + $0x6c] sm:$0xf]
  %v49 = vld [vmem:[%s1 + $0x70] sm:$0xf]
  %v50 = vld [vmem:[%s1 + $0x74] sm:$0xf]
  %v51 = vld [vmem:[%s1 + $0x78] sm:$0xf]
  %v52 = vld [vmem:[%s1 + $0x7c] sm:$0xf]
  %v53 = vld [vmem:[%s2] sm:$0x1]
  %v55 = vperm.slane %v53, 0
  %v61 = vunpack.c.l.b16 %v17
  %v62 = vunpack.c.h.b16 %v17
  %v63 = vunpack.c.l.b16 %v18
  %v64 = vunpack.c.h.b16 %v18
  %v65 = vunpack.c.l.b16 %v19
  %v66 = vunpack.c.h.b16 %v19
  %v67 = vunpack.c.l.b16 %v20
  %v68 = vunpack.c.h.b16 %v20
  %v69 = vpack.c.b16 %v63, %v61
  %v70 = vpack.c.b16 %v64, %v62
  %v71 = vpack.c.b16 %v67, %v65
  %v72 = vpack.c.b16 %v68, %v66
  %v109 = vunpack.c.l.b16 %v21
  %v110 = vunpack.c.l.b16 %v22
  %v111 = vunpack.c.l.b16 %v23
  %v112 = vunpack.c.l.b16 %v24
  %v113 = vunpack.c.l.b16 %v25
  %v114 = vunpack.c.l.b16 %v26
  %v115 = vunpack.c.l.b16 %v27
  %v116 = vunpack.c.l.b16 %v28
  %v117 = vunpack.c.l.b16 %v29
  %v118 = vunpack.c.l.b16 %v30
  %v119 = vunpack.c.l.b16 %v31
  %v120 = vunpack.c.l.b16 %v32
  %v121 = vunpack.c.l.b16 %v33
  %v122 = vunpack.c.l.b16 %v34
  %v123 = vunpack.c.l.b16 %v35
  %v124 = vunpack.c.l.b16 %v36
  %v125 = vunpack.c.l.b16 %v37
  %v126 = vunpack.c.l.b16 %v38
  %v127 = vunpack.c.l.b16 %v39
  %v128 = vunpack.c.l.b16 %v40
  %v129 = vunpack.c.l.b16 %v41
  %v130 = vunpack.c.l.b16 %v42
  %v131 = vunpack.c.l.b16 %v43
  %v132 = vunpack.c.l.b16 %v44
  %v133 = vunpack.c.l.b16 %v45
  %v134 = vunpack.c.l.b16 %v46
  %v135 = vunpack.c.l.b16 %v47
  %v136 = vunpack.c.l.b16 %v48
  %v137 = vunpack.c.l.b16 %v49
  %v138 = vunpack.c.l.b16 %v50
  %v139 = vunpack.c.l.b16 %v51
  %v140 = vunpack.c.l.b16 %v52
  %v141 = vpack.c.b16 %v110, %v109
  %v142 = vpack.c.b16 %v112, %v111
  %v143 = vpack.c.b16 %v114, %v113
  %v144 = vpack.c.b16 %v116, %v115
  %v145 = vpack.c.b16 %v118, %v117
  %v146 = vpack.c.b16 %v120, %v119
  %v147 = vpack.c.b16 %v122, %v121
  %v148 = vpack.c.b16 %v124, %v123
  %v149 = vpack.c.b16 %v126, %v125
  %v150 = vpack.c.b16 %v128, %v127
  %v151 = vpack.c.b16 %v130, %v129
  %v152 = vpack.c.b16 %v132, %v131
  %v153 = vpack.c.b16 %v134, %v133
  %v154 = vpack.c.b16 %v136, %v135
  %v155 = vpack.c.b16 %v138, %v137
  %v156 = vpack.c.b16 %v140, %v139
  %173 = vmatpush.bf16.msra.mxu0 %v148
  %174 = vmatpush.bf16.msra.mxu0 %v147
  %175 = vmatpush.bf16.msra.mxu0 %v146
  %176 = vmatpush.bf16.msra.mxu0 %v145
  %177 = vmatpush.bf16.msra.mxu0 %v144
  %178 = vmatpush.bf16.msra.mxu0 %v143
  %179 = vmatpush.bf16.msra.mxu0 %v142
  %180 = vmatpush.bf16.msra.mxu0 %v141
  %181 = vmatmul.bf16.gmra.mxu0 %v69
  %v182 = vpop.f32.mrf.mxu0
  %v183 = vadd.f32 %v55, %v182
  %v184 = vpop.f32.mrf.mxu0
  %v185 = vadd.f32 %v55, %v184
  %186 = vmatmul.bf16.gmra.mxu0 %v71
  %v187 = vpop.f32.mrf.mxu0
  %v188 = vadd.f32 %v55, %v187
  %v189 = vpop.f32.mrf.mxu0
  %v190 = vadd.f32 %v55, %v189
  %191 = vdwg.mxu0
  %192 = vmatpush.bf16.msra.mxu0 %v156
  %193 = vmatpush.bf16.msra.mxu0 %v155
  %194 = vmatpush.bf16.msra.mxu0 %v154
  %195 = vmatpush.bf16.msra.mxu0 %v153
  %196 = vmatpush.bf16.msra.mxu0 %v152
  %197 = vmatpush.bf16.msra.mxu0 %v151
  %198 = vmatpush.bf16.msra.mxu0 %v150
  %199 = vmatpush.bf16.msra.mxu0 %v149
  %200 = vmatmul.bf16.gmra.mxu0 %v70
  %v201 = vpop.f32.mrf.mxu0
  %v202 = vadd.f32 %v183, %v201
  %v203 = vpop.f32.mrf.mxu0
  %v204 = vadd.f32 %v185, %v203
  %205 = vmatmul.bf16.gmra.mxu0 %v72
  %v206 = vpop.f32.mrf.mxu0
  %v207 = vadd.f32 %v188, %v206
  %v208 = vpop.f32.mrf.mxu0
  %v209 = vadd.f32 %v190, %v208
  %210 = vdwg.mxu0
  %v211 = vmax.f32 %v202, 0.0
  %v212 = vmax.f32 %v204, 0.0
  %v213 = vmax.f32 %v207, 0.0
  %v214 = vmax.f32 %v209, 0.0
  %v215 = vpack.c.bf16 %v211, %v211
  %v216 = vpack.c.bf16 %v212, %v212
  %v217 = vpack.c.bf16 %v213, %v213
  %v218 = vpack.c.bf16 %v214, %v214
  %219 = vst [vmem:[%s3] sm:$0xf] %v215
  %220 = vst [vmem:[%s3 + $0x4] sm:$0xf] %v216
  %221 = vst [vmem:[%s3 + $0x8] sm:$0xf] %v217
  %222 = vst [vmem:[%s3 + $0xc] sm:$0xf] %v218
  %v223 = vadd.f32 %v211, %v212
  %v224 = vadd.f32 %v223, %v213
  %v225 = vadd.f32 %v224, %v214
  %v226 = vrot.slane %v225, 4
  %v227 = vadd.f32 %v225, %v226
  %v228 = vrot.slane %v227, 2
  %v229 = vadd.f32 %v227, %v228
  %v230 = vrot.slane %v229, 1
  %v231 = vadd.f32 %v229, %v230
  %v232 = vmul.f32 %v211, %v211
  %v233 = vmul.f32 %v212, %v212
  %v234 = vmul.f32 %v213, %v213
  %v235 = vmul.f32 %v214, %v214
  %v236 = vadd.f32 %v232, %v233
  %v237 = vadd.f32 %v236, %v234
  %v238 = vadd.f32 %v237, %v235
  %v239 = vrot.slane %v238, 4
  %v240 = vadd.f32 %v238, %v239
  %v241 = vrot.slane %v240, 2
  %v242 = vadd.f32 %v240, %v241
  %v243 = vrot.slane %v242, 1
  %v244 = vadd.f32 %v242, %v243
  %245 = vst [vmem:[%s4] sm:$0xff] %v231
  %246 = vst [vmem:[%s5] sm:$0xff] %v244
  // Predicated region
  $region14: #{_lambda_.15} parent=0 // pred_check
    _
  $region15: #{_lambda_.15} parent=0 // pred_check_branch
    %248 = sbr.rel (0) target = $region17
  $region16: #{_lambda_.15} parent=0 // pred_region
    _
  $region17: #{_lambda_.15} parent=0 // pred_fallthru
    _
  // Predicated region
  $region18: #{_lambda_.15} parent=0 // pred_check
    _
  $region19: #{_lambda_.15} parent=0 // pred_check_branch
    %250 = sbr.rel (0) target = $region21
  $region20: #{_lambda_.15} parent=0 // pred_region
    _
  $region21: #{_lambda_.15} parent=0 // pred_fallthru
    _
  // Predicated region
  $region22: #{_lambda_.15} parent=0 // pred_check
    _
  $region23: #{_lambda_.15} parent=0 // pred_check_branch
    %252 = sbr.rel (0) target = $region25
  $region24: #{_lambda_.15} parent=0 // pred_region
    _
  $region25: #{_lambda_.15} parent=0 // pred_fallthru
    _
  // Predicated region
  $region26: #{_lambda_.15} parent=0 // pred_check
    _
  $region27: #{_lambda_.15} parent=0 // pred_check_branch
    %254 = sbr.rel (0) target = $region29
  $region28: #{_lambda_.15} parent=0 // pred_region
    _
  $region29: #{_lambda_.15} parent=0 // pred_fallthru
    _
  // Predicated region
  $region30: #{_lambda_.15} parent=0 // pred_check
    _
  $region31: #{_lambda_.15} parent=0 // pred_check_branch
    %256 = sbr.rel (0) target = $region33
  $region32: #{_lambda_.15} parent=0 // pred_region
    _
  $region33: #{_lambda_.15} parent=0 // pred_fallthru
    _
  // Predicated region
  $region34: #{_lambda_.15} parent=0 // pred_check
    _
  $region35: #{_lambda_.15} parent=0 // pred_check_branch
    %258 = sbr.rel (0) target = $region37
  $region36: #{_lambda_.15} parent=0 // pred_region
    _
  $region37: #{_lambda_.15} parent=0 // pred_fallthru
    _

// kernel: _lambda_.16
$region0: #{_lambda_.16}
  #allocation0 [shape = 'u32[]', space=smem, size = 0x4, offset = 0x4, fixed_abs, tag = 'smem constant byte address 0x4 - core index']
  #allocation1 [shape = 'u32[72,128]{1,0:T(1,128)}', space=vmem, size = 0x9000, scoped, tag = 'internal scratch']
  %s0 = inlined_call_operand.vmem [shape: bf16[128,128], index: 0, kind: input, shape index: {}]
  %s1 = inlined_call_operand.vmem [shape: bf16[128,128], index: 1, kind: input, shape index: {}]
  %s2 = inlined_call_operand.vmem [shape: f32[1,128], index: 2, kind: input, shape index: {}]
  %s3 = inlined_call_operand.vmem [shape: bf16[128,128], index: 3, kind: output, shape index: {0}]
  %s4 = inlined_call_operand.vmem [shape: f32[8,128], index: 4, kind: output, shape index: {1}]
  %s5 = inlined_call_operand.vmem [shape: f32[8,128], index: 5, kind: output, shape index: {2}]
  %6 = xla_tuple %s3, %s4, %s5
  %s7 = sld [smem:[#allocation0]]
  $region38: #{_lambda_.16} parent=0
    _
  %s9 = ssub.s32 1, %s7
  %s10 = scalar_select 0, %s9, %s7
  // Predicated region
  $region2: #{_lambda_.16} parent=0 // pred_check
    _
  $region3: #{_lambda_.16} parent=0 // pred_check_branch
    %12 = sbr.rel (0) target = $region5
  $region4: #{_lambda_.16} parent=0 // pred_region
    _
  $region5: #{_lambda_.16} parent=0 // pred_fallthru
    _
  // Predicated region
  $region6: #{_lambda_.16} parent=0 // pred_check
    _
  $region7: #{_lambda_.16} parent=0 // pred_check_branch
    %14 = sbr.rel (0) target = $region9
  $region8: #{_lambda_.16} parent=0 // pred_region
    _
  $region9: #{_lambda_.16} parent=0 // pred_fallthru
    _
  // Predicated region
  $region10: #{_lambda_.16} parent=0 // pred_check
    _
  $region11: #{_lambda_.16} parent=0 // pred_check_branch
    %16 = sbr.rel (0) target = $region13
  $region12: #{_lambda_.16} parent=0 // pred_region
    _
  $region13: #{_lambda_.16} parent=0 // pred_fallthru
    _
  %v17 = vld [vmem:[%s0] sm:$0xf]
  %v18 = vld [vmem:[%s0 + $0x4] sm:$0xf]
  %v19 = vld [vmem:[%s0 + $0x8] sm:$0xf]
  %v20 = vld [vmem:[%s0 + $0xc] sm:$0xf]
  %v21 = vld [vmem:[%s0 + $0x10] sm:$0xf]
  %v22 = vld [vmem:[%s0 + $0x14] sm:$0xf]
  %v23 = vld [vmem:[%s0 + $0x18] sm:$0xf]
  %v24 = vld [vmem:[%s0 + $0x1c] sm:$0xf]
  %v25 = vld [vmem:[%s0 + $0x20] sm:$0xf]
  %v26 = vld [vmem:[%s0 + $0x24] sm:$0xf]
  %v27 = vld [vmem:[%s0 + $0x28] sm:$0xf]
  %v28 = vld [vmem:[%s0 + $0x2c] sm:$0xf]
  %v29 = vld [vmem:[%s0 + $0x30] sm:$0xf]
  %v30 = vld [vmem:[%s0 + $0x34] sm:$0xf]
  %v31 = vld [vmem:[%s0 + $0x38] sm:$0xf]
  %v32 = vld [vmem:[%s0 + $0x3c] sm:$0xf]
  %v33 = vld [vmem:[%s1] sm:$0xf]
  %v34 = vld [vmem:[%s1 + $0x4] sm:$0xf]
  %v35 = vld [vmem:[%s1 + $0x8] sm:$0xf]
  %v36 = vld [vmem:[%s1 + $0xc] sm:$0xf]
  %v37 = vld [vmem:[%s1 + $0x10] sm:$0xf]
  %v38 = vld [vmem:[%s1 + $0x14] sm:$0xf]
  %v39 = vld [vmem:[%s1 + $0x18] sm:$0xf]
  %v40 = vld [vmem:[%s1 + $0x1c] sm:$0xf]
  %v41 = vld [vmem:[%s1 + $0x20] sm:$0xf]
  %v42 = vld [vmem:[%s1 + $0x24] sm:$0xf]
  %v43 = vld [vmem:[%s1 + $0x28] sm:$0xf]
  %v44 = vld [vmem:[%s1 + $0x2c] sm:$0xf]
  %v45 = vld [vmem:[%s1 + $0x30] sm:$0xf]
  %v46 = vld [vmem:[%s1 + $0x34] sm:$0xf]
  %v47 = vld [vmem:[%s1 + $0x38] sm:$0xf]
  %v48 = vld [vmem:[%s1 + $0x3c] sm:$0xf]
  %v49 = vld [vmem:[%s2] sm:$0x1]
  %v51 = vperm.slane %v49, 0
  %v69 = vunpack.c.l.b16 %v17
  %v70 = vunpack.c.l.b16 %v18
  %v71 = vunpack.c.l.b16 %v19
  %v72 = vunpack.c.l.b16 %v20
  %v73 = vunpack.c.l.b16 %v21
  %v74 = vunpack.c.l.b16 %v22
  %v75 = vunpack.c.l.b16 %v23
  %v76 = vunpack.c.l.b16 %v24
  %v77 = vunpack.c.l.b16 %v25
  %v78 = vunpack.c.l.b16 %v26
  %v79 = vunpack.c.l.b16 %v27
  %v80 = vunpack.c.l.b16 %v28
  %v81 = vunpack.c.l.b16 %v29
  %v82 = vunpack.c.l.b16 %v30
  %v83 = vunpack.c.l.b16 %v31
  %v84 = vunpack.c.l.b16 %v32
  %v85 = vpack.c.b16 %v70, %v69
  %v86 = vpack.c.b16 %v72, %v71
  %v87 = vpack.c.b16 %v74, %v73
  %v88 = vpack.c.b16 %v76, %v75
  %v89 = vpack.c.b16 %v78, %v77
  %v90 = vpack.c.b16 %v80, %v79
  %v91 = vpack.c.b16 %v82, %v81
  %v92 = vpack.c.b16 %v84, %v83
  %v117 = vunpack.c.l.b16 %v33
  %v118 = vunpack.c.l.b16 %v34
  %v119 = vunpack.c.l.b16 %v35
  %v120 = vunpack.c.l.b16 %v36
  %v121 = vunpack.c.l.b16 %v37
  %v122 = vunpack.c.l.b16 %v38
  %v123 = vunpack.c.l.b16 %v39
  %v124 = vunpack.c.l.b16 %v40
  %v125 = vunpack.c.l.b16 %v41
  %v126 = vunpack.c.l.b16 %v42
  %v127 = vunpack.c.l.b16 %v43
  %v128 = vunpack.c.l.b16 %v44
  %v129 = vunpack.c.l.b16 %v45
  %v130 = vunpack.c.l.b16 %v46
  %v131 = vunpack.c.l.b16 %v47
  %v132 = vunpack.c.l.b16 %v48
  %v133 = vpack.c.b16 %v118, %v117
  %v134 = vpack.c.b16 %v120, %v119
  %v135 = vpack.c.b16 %v122, %v121
  %v136 = vpack.c.b16 %v124, %v123
  %v137 = vpack.c.b16 %v126, %v125
  %v138 = vpack.c.b16 %v128, %v127
  %v139 = vpack.c.b16 %v130, %v129
  %v140 = vpack.c.b16 %v132, %v131
  %149 = vmatpush.bf16.msra.mxu0 %v140
  %150 = vmatpush.bf16.msra.mxu0 %v139
  %151 = vmatpush.bf16.msra.mxu0 %v138
  %152 = vmatpush.bf16.msra.mxu0 %v137
  %153 = vmatpush.bf16.msra.mxu0 %v136
  %154 = vmatpush.bf16.msra.mxu0 %v135
  %155 = vmatpush.bf16.msra.mxu0 %v134
  %156 = vmatpush.bf16.msra.mxu0 %v133
  %157 = vmatmul.bf16.gmra.mxu0 %v85
  %v158 = vpop.f32.mrf.mxu0
  %v159 = vadd.f32 %v51, %v158
  %v160 = vpop.f32.mrf.mxu0
  %v161 = vadd.f32 %v51, %v160
  %162 = vmatmul.bf16.gmra.mxu0 %v86
  %v163 = vpop.f32.mrf.mxu0
  %v164 = vadd.f32 %v51, %v163
  %v165 = vpop.f32.mrf.mxu0
  %v166 = vadd.f32 %v51, %v165
  %167 = vmatmul.bf16.gmra.mxu0 %v87
  %v168 = vpop.f32.mrf.mxu0
  %v169 = vadd.f32 %v51, %v168
  %v170 = vpop.f32.mrf.mxu0
  %v171 = vadd.f32 %v51, %v170
  %172 = vmatmul.bf16.gmra.mxu0 %v88
  %v173 = vpop.f32.mrf.mxu0
  %v174 = vadd.f32 %v51, %v173
  %v175 = vpop.f32.mrf.mxu0
  %v176 = vadd.f32 %v51, %v175
  %177 = vmatmul.bf16.gmra.mxu0 %v89
  %v178 = vpop.f32.mrf.mxu0
  %v179 = vadd.f32 %v51, %v178
  %v180 = vpop.f32.mrf.mxu0
  %v181 = vadd.f32 %v51, %v180
  %182 = vmatmul.bf16.gmra.mxu0 %v90
  %v183 = vpop.f32.mrf.mxu0
  %v184 = vadd.f32 %v51, %v183
  %v185 = vpop.f32.mrf.mxu0
  %v186 = vadd.f32 %v51, %v185
  %187 = vmatmul.bf16.gmra.mxu0 %v91
  %v188 = vpop.f32.mrf.mxu0
  %v189 = vadd.f32 %v51, %v188
  %v190 = vpop.f32.mrf.mxu0
  %v191 = vadd.f32 %v51, %v190
  %192 = vmatmul.bf16.gmra.mxu0 %v92
  %v193 = vpop.f32.mrf.mxu0
  %v194 = vadd.f32 %v51, %v193
  %v195 = vpop.f32.mrf.mxu0
  %v196 = vadd.f32 %v51, %v195
  %197 = vdwg.mxu0
  %v198 = vmax.f32 %v159, 0.0
  %v199 = vmax.f32 %v161, 0.0
  %v200 = vmax.f32 %v164, 0.0
  %v201 = vmax.f32 %v166, 0.0
  %v202 = vmax.f32 %v169, 0.0
  %v203 = vmax.f32 %v171, 0.0
  %v204 = vmax.f32 %v174, 0.0
  %v205 = vmax.f32 %v176, 0.0
  %v206 = vmax.f32 %v179, 0.0
  %v207 = vmax.f32 %v181, 0.0
  %v208 = vmax.f32 %v184, 0.0
  %v209 = vmax.f32 %v186, 0.0
  %v210 = vmax.f32 %v189, 0.0
  %v211 = vmax.f32 %v191, 0.0
  %v212 = vmax.f32 %v194, 0.0
  %v213 = vmax.f32 %v196, 0.0
  %v214 = vpack.c.bf16 %v198, %v198
  %v215 = vpack.c.bf16 %v199, %v199
  %v216 = vpack.c.bf16 %v200, %v200
  %v217 = vpack.c.bf16 %v201, %v201
  %v218 = vpack.c.bf16 %v202, %v202
  %v219 = vpack.c.bf16 %v203, %v203
  %v220 = vpack.c.bf16 %v204, %v204
  %v221 = vpack.c.bf16 %v205, %v205
  %v222 = vpack.c.bf16 %v206, %v206
  %v223 = vpack.c.bf16 %v207, %v207
  %v224 = vpack.c.bf16 %v208, %v208
  %v225 = vpack.c.bf16 %v209, %v209
  %v226 = vpack.c.bf16 %v210, %v210
  %v227 = vpack.c.bf16 %v211, %v211
  %v228 = vpack.c.bf16 %v212, %v212
  %v229 = vpack.c.bf16 %v213, %v213
  %230 = vst [vmem:[%s3] sm:$0xf] %v214
  %231 = vst [vmem:[%s3 + $0x4] sm:$0xf] %v215
  %232 = vst [vmem:[%s3 + $0x8] sm:$0xf] %v216
  %233 = vst [vmem:[%s3 + $0xc] sm:$0xf] %v217
  %234 = vst [vmem:[%s3 + $0x10] sm:$0xf] %v218
  %235 = vst [vmem:[%s3 + $0x14] sm:$0xf] %v219
  %236 = vst [vmem:[%s3 + $0x18] sm:$0xf] %v220
  %237 = vst [vmem:[%s3 + $0x1c] sm:$0xf] %v221
  %238 = vst [vmem:[%s3 + $0x20] sm:$0xf] %v222
  %239 = vst [vmem:[%s3 + $0x24] sm:$0xf] %v223
  %240 = vst [vmem:[%s3 + $0x28] sm:$0xf] %v224
  %241 = vst [vmem:[%s3 + $0x2c] sm:$0xf] %v225
  %242 = vst [vmem:[%s3 + $0x30] sm:$0xf] %v226
  %243 = vst [vmem:[%s3 + $0x34] sm:$0xf] %v227
  %244 = vst [vmem:[%s3 + $0x38] sm:$0xf] %v228
  %245 = vst [vmem:[%s3 + $0x3c] sm:$0xf] %v229
  %v246 = vadd.f32 %v198, %v199
  %v247 = vadd.f32 %v246, %v200
  %v248 = vadd.f32 %v247, %v201
  %v249 = vadd.f32 %v248, %v202
  %v250 = vadd.f32 %v249, %v203
  %v251 = vadd.f32 %v250, %v204
  %v252 = vadd.f32 %v251, %v205
  %v253 = vadd.f32 %v252, %v206
  %v254 = vadd.f32 %v253, %v207
  %v255 = vadd.f32 %v254, %v208
  %v256 = vadd.f32 %v255, %v209
  %v257 = vadd.f32 %v256, %v210
  %v258 = vadd.f32 %v257, %v211
  %v259 = vadd.f32 %v258, %v212
  %v260 = vadd.f32 %v259, %v213
  %v261 = vrot.slane %v260, 4
  %v262 = vadd.f32 %v260, %v261
  %v263 = vrot.slane %v262, 2
  %v264 = vadd.f32 %v262, %v263
  %v265 = vrot.slane %v264, 1
  %v266 = vadd.f32 %v264, %v265
  %v267 = vmul.f32 %v198, %v198
  %v268 = vmul.f32 %v199, %v199
  %v269 = vmul.f32 %v200, %v200
  %v270 = vmul.f32 %v201, %v201
  %v271 = vmul.f32 %v202, %v202
  %v272 = vmul.f32 %v203, %v203
  %v273 = vmul.f32 %v204, %v204
  %v274 = vmul.f32 %v205, %v205
  %v275 = vmul.f32 %v206, %v206
  %v276 = vmul.f32 %v207, %v207
  %v277 = vmul.f32 %v208, %v208
  %v278 = vmul.f32 %v209, %v209
  %v279 = vmul.f32 %v210, %v210
  %v280 = vmul.f32 %v211, %v211
  %v281 = vmul.f32 %v212, %v212
  %v282 = vmul.f32 %v213, %v213
  %v283 = vadd.f32 %v267, %v268
  %v284 = vadd.f32 %v283, %v269
  %v285 = vadd.f32 %v284, %v270
  %v286 = vadd.f32 %v285, %v271
  %v287 = vadd.f32 %v286, %v272
  %v288 = vadd.f32 %v287, %v273
  %v289 = vadd.f32 %v288, %v274
  %v290 = vadd.f32 %v289, %v275
  %v291 = vadd.f32 %v290, %v276
  %v292 = vadd.f32 %v291, %v277
  %v293 = vadd.f32 %v292, %v278
  %v294 = vadd.f32 %v293, %v279
  %v295 = vadd.f32 %v294, %v280
  %v296 = vadd.f32 %v295, %v281
  %v297 = vadd.f32 %v296, %v282
  %v298 = vrot.slane %v297, 4
  %v299 = vadd.f32 %v297, %v298
  %v300 = vrot.slane %v299, 2
  %v301 = vadd.f32 %v299, %v300
  %v302 = vrot.slane %v301, 1
  %v303 = vadd.f32 %v301, %v302
  %304 = vst [vmem:[%s4] sm:$0xff] %v266
  %305 = vst [vmem:[%s5] sm:$0xff] %v303
  // Predicated region
  $region14: #{_lambda_.16} parent=0 // pred_check
    _
  $region15: #{_lambda_.16} parent=0 // pred_check_branch
    %307 = sbr.rel (0) target = $region17
  $region16: #{_lambda_.16} parent=0 // pred_region
    _
  $region17: #{_lambda_.16} parent=0 // pred_fallthru
    _
  // Predicated region
  $region18: #{_lambda_.16} parent=0 // pred_check
    _
  $region19: #{_lambda_.16} parent=0 // pred_check_branch
    %309 = sbr.rel (0) target = $region21
  $region20: #{_lambda_.16} parent=0 // pred_region
    _
  $region21: #{_lambda_.16} parent=0 // pred_fallthru
    _
  // Predicated region
  $region22: #{_lambda_.16} parent=0 // pred_check
    _
  $region23: #{_lambda_.16} parent=0 // pred_check_branch
    %311 = sbr.rel (0) target = $region25
  $region24: #{_lambda_.16} parent=0 // pred_region
    _
  $region25: #{_lambda_.16} parent=0 // pred_fallthru
    _
  // Predicated region
  $region26: #{_lambda_.16} parent=0 // pred_check
    _
  $region27: #{_lambda_.16} parent=0 // pred_check_branch
    %313 = sbr.rel (0) target = $region29
  $region28: #{_lambda_.16} parent=0 // pred_region
    _
  $region29: #{_lambda_.16} parent=0 // pred_fallthru
    _
  // Predicated region
  $region30: #{_lambda_.16} parent=0 // pred_check
    _
  $region31: #{_lambda_.16} parent=0 // pred_check_branch
    %315 = sbr.rel (0) target = $region33
  $region32: #{_lambda_.16} parent=0 // pred_region
    _
  $region33: #{_lambda_.16} parent=0 // pred_fallthru
    _
  // Predicated region
  $region34: #{_lambda_.16} parent=0 // pred_check
    _
  $region35: #{_lambda_.16} parent=0 // pred_check_branch
    %317 = sbr.rel (0) target = $region37
  $region36: #{_lambda_.16} parent=0 // pred_region
    _
  $region37: #{_lambda_.16} parent=0 // pred_fallthru
    _

// kernel: _lambda_.17
$region0: #{_lambda_.17}
  #allocation0 [shape = 'u32[]', space=smem, size = 0x4, offset = 0x4, fixed_abs, tag = 'smem constant byte address 0x4 - core index']
  #allocation1 [shape = 'u32[72,128]{1,0:T(1,128)}', space=vmem, size = 0x9000, scoped, tag = 'internal scratch']
  %s0 = inlined_call_operand.vmem [shape: bf16[512,32], index: 0, kind: input, shape index: {}]
  %s1 = inlined_call_operand.vmem [shape: bf16[32,128], index: 1, kind: input, shape index: {}]
  %s2 = inlined_call_operand.vmem [shape: f32[1,128], index: 2, kind: input, shape index: {}]
  %s3 = inlined_call_operand.vmem [shape: f32[512,128], index: 3, kind: output, shape index: {}]
  %s4 = sld [smem:[#allocation0]]
  $region22: #{_lambda_.17} parent=0
    _
  %s6 = ssub.s32 1, %s4
  %s7 = scalar_select 0, %s6, %s4
  // Predicated region
  $region2: #{_lambda_.17} parent=0 // pred_check
    _
  $region3: #{_lambda_.17} parent=0 // pred_check_branch
    %9 = sbr.rel (0) target = $region5
  $region4: #{_lambda_.17} parent=0 // pred_region
    _
  $region5: #{_lambda_.17} parent=0 // pred_fallthru
    _
  // Predicated region
  $region6: #{_lambda_.17} parent=0 // pred_check
    _
  $region7: #{_lambda_.17} parent=0 // pred_check_branch
    %11 = sbr.rel (0) target = $region9
  $region8: #{_lambda_.17} parent=0 // pred_region
    _
  $region9: #{_lambda_.17} parent=0 // pred_fallthru
    _
  // Predicated region
  $region10: #{_lambda_.17} parent=0 // pred_check
    _
  $region11: #{_lambda_.17} parent=0 // pred_check_branch
    %13 = sbr.rel (0) target = $region13
  $region12: #{_lambda_.17} parent=0 // pred_region
    _
  $region13: #{_lambda_.17} parent=0 // pred_fallthru
    _
  %v15 = vld [vmem:[%s0] sm:$0xf]
  %v16 = vld [vmem:[%s0 + $0x4] sm:$0xf]
  %v17 = vld [vmem:[%s0 + $0x8] sm:$0xf]
  %v18 = vld [vmem:[%s0 + $0xc] sm:$0xf]
  %v19 = vld [vmem:[%s0 + $0x10] sm:$0xf]
  %v20 = vld [vmem:[%s0 + $0x14] sm:$0xf]
  %v21 = vld [vmem:[%s0 + $0x18] sm:$0xf]
  %v22 = vld [vmem:[%s0 + $0x1c] sm:$0xf]
  %v23 = vld [vmem:[%s0 + $0x20] sm:$0xf]
  %v24 = vld [vmem:[%s0 + $0x24] sm:$0xf]
  %v25 = vld [vmem:[%s0 + $0x28] sm:$0xf]
  %v26 = vld [vmem:[%s0 + $0x2c] sm:$0xf]
  %v27 = vld [vmem:[%s0 + $0x30] sm:$0xf]
  %v28 = vld [vmem:[%s0 + $0x34] sm:$0xf]
  %v29 = vld [vmem:[%s0 + $0x38] sm:$0xf]
  %v30 = vld [vmem:[%s0 + $0x3c] sm:$0xf]
  %v31 = vld [vmem:[%s0 + $0x40] sm:$0xf]
  %v32 = vld [vmem:[%s0 + $0x44] sm:$0xf]
  %v33 = vld [vmem:[%s0 + $0x48] sm:$0xf]
  %v34 = vld [vmem:[%s0 + $0x4c] sm:$0xf]
  %v35 = vld [vmem:[%s0 + $0x50] sm:$0xf]
  %v36 = vld [vmem:[%s0 + $0x54] sm:$0xf]
  %v37 = vld [vmem:[%s0 + $0x58] sm:$0xf]
  %v38 = vld [vmem:[%s0 + $0x5c] sm:$0xf]
  %v39 = vld [vmem:[%s0 + $0x60] sm:$0xf]
  %v40 = vld [vmem:[%s0 + $0x64] sm:$0xf]
  %v41 = vld [vmem:[%s0 + $0x68] sm:$0xf]
  %v42 = vld [vmem:[%s0 + $0x6c] sm:$0xf]
  %v43 = vld [vmem:[%s0 + $0x70] sm:$0xf]
  %v44 = vld [vmem:[%s0 + $0x74] sm:$0xf]
  %v45 = vld [vmem:[%s0 + $0x78] sm:$0xf]
  %v46 = vld [vmem:[%s0 + $0x7c] sm:$0xf]
  %v47 = vld [vmem:[%s0 + $0x80] sm:$0xf]
  %v48 = vld [vmem:[%s0 + $0x84] sm:$0xf]
  %v49 = vld [vmem:[%s0 + $0x88] sm:$0xf]
  %v50 = vld [vmem:[%s0 + $0x8c] sm:$0xf]
  %v51 = vld [vmem:[%s0 + $0x90] sm:$0xf]
  %v52 = vld [vmem:[%s0 + $0x94] sm:$0xf]
  %v53 = vld [vmem:[%s0 + $0x98] sm:$0xf]
  %v54 = vld [vmem:[%s0 + $0x9c] sm:$0xf]
  %v55 = vld [vmem:[%s0 + $0xa0] sm:$0xf]
  %v56 = vld [vmem:[%s0 + $0xa4] sm:$0xf]
  %v57 = vld [vmem:[%s0 + $0xa8] sm:$0xf]
  %v58 = vld [vmem:[%s0 + $0xac] sm:$0xf]
  %v59 = vld [vmem:[%s0 + $0xb0] sm:$0xf]
  %v60 = vld [vmem:[%s0 + $0xb4] sm:$0xf]
  %v61 = vld [vmem:[%s0 + $0xb8] sm:$0xf]
  %v62 = vld [vmem:[%s0 + $0xbc] sm:$0xf]
  %v63 = vld [vmem:[%s0 + $0xc0] sm:$0xf]
  %v64 = vld [vmem:[%s0 + $0xc4] sm:$0xf]
  %v65 = vld [vmem:[%s0 + $0xc8] sm:$0xf]
  %v66 = vld [vmem:[%s0 + $0xcc] sm:$0xf]
  %v67 = vld [vmem:[%s0 + $0xd0] sm:$0xf]
  %v68 = vld [vmem:[%s0 + $0xd4] sm:$0xf]
  %v69 = vld [vmem:[%s0 + $0xd8] sm:$0xf]
  %v70 = vld [vmem:[%s0 + $0xdc] sm:$0xf]
  %v71 = vld [vmem:[%s0 + $0xe0] sm:$0xf]
  %v72 = vld [vmem:[%s0 + $0xe4] sm:$0xf]
  %v73 = vld [vmem:[%s0 + $0xe8] sm:$0xf]
  %v74 = vld [vmem:[%s0 + $0xec] sm:$0xf]
  %v75 = vld [vmem:[%s0 + $0xf0] sm:$0xf]
  %v76 = vld [vmem:[%s0 + $0xf4] sm:$0xf]
  %v77 = vld [vmem:[%s0 + $0xf8] sm:$0xf]
  %v78 = vld [vmem:[%s0 + $0xfc] sm:$0xf]
  %v79 = vld [vmem:[%s1] sm:$0xf]
  %v80 = vld [vmem:[%s1 + $0x4] sm:$0xf]
  %v81 = vld [vmem:[%s1 + $0x8] sm:$0xf]
  %v82 = vld [vmem:[%s1 + $0xc] sm:$0xf]
  %v83 = vld [vmem:[%s2] sm:$0x1]
  %v85 = vperm.slane %v83, 0
  %v151 = vunpack.c.l.b16 %v15
  %v152 = vunpack.c.l.b16 %v16
  %v153 = vunpack.c.l.b16 %v17
  %v154 = vunpack.c.l.b16 %v18
  %v155 = vunpack.c.l.b16 %v19
  %v156 = vunpack.c.l.b16 %v20
  %v157 = vunpack.c.l.b16 %v21
  %v158 = vunpack.c.l.b16 %v22
  %v159 = vunpack.c.l.b16 %v23
  %v160 = vunpack.c.l.b16 %v24
  %v161 = vunpack.c.l.b16 %v25
  %v162 = vunpack.c.l.b16 %v26
  %v163 = vunpack.c.l.b16 %v27
  %v164 = vunpack.c.l.b16 %v28
  %v165 = vunpack.c.l.b16 %v29
  %v166 = vunpack.c.l.b16 %v30
  %v167 = vunpack.c.l.b16 %v31
  %v168 = vunpack.c.l.b16 %v32
  %v169 = vunpack.c.l.b16 %v33
  %v170 = vunpack.c.l.b16 %v34
  %v171 = vunpack.c.l.b16 %v35
  %v172 = vunpack.c.l.b16 %v36
  %v173 = vunpack.c.l.b16 %v37
  %v174 = vunpack.c.l.b16 %v38
  %v175 = vunpack.c.l.b16 %v39
  %v176 = vunpack.c.l.b16 %v40
  %v177 = vunpack.c.l.b16 %v41
  %v178 = vunpack.c.l.b16 %v42
  %v179 = vunpack.c.l.b16 %v43
  %v180 = vunpack.c.l.b16 %v44
  %v181 = vunpack.c.l.b16 %v45
  %v182 = vunpack.c.l.b16 %v46
  %v183 = vunpack.c.l.b16 %v47
  %v184 = vunpack.c.l.b16 %v48
  %v185 = vunpack.c.l.b16 %v49
  %v186 = vunpack.c.l.b16 %v50
  %v187 = vunpack.c.l.b16 %v51
  %v188 = vunpack.c.l.b16 %v52
  %v189 = vunpack.c.l.b16 %v53
  %v190 = vunpack.c.l.b16 %v54
  %v191 = vunpack.c.l.b16 %v55
  %v192 = vunpack.c.l.b16 %v56
  %v193 = vunpack.c.l.b16 %v57
  %v194 = vunpack.c.l.b16 %v58
  %v195 = vunpack.c.l.b16 %v59
  %v196 = vunpack.c.l.b16 %v60
  %v197 = vunpack.c.l.b16 %v61
  %v198 = vunpack.c.l.b16 %v62
  %v199 = vunpack.c.l.b16 %v63
  %v200 = vunpack.c.l.b16 %v64
  %v201 = vunpack.c.l.b16 %v65
  %v202 = vunpack.c.l.b16 %v66
  %v203 = vunpack.c.l.b16 %v67
  %v204 = vunpack.c.l.b16 %v68
  %v205 = vunpack.c.l.b16 %v69
  %v206 = vunpack.c.l.b16 %v70
  %v207 = vunpack.c.l.b16 %v71
  %v208 = vunpack.c.l.b16 %v72
  %v209 = vunpack.c.l.b16 %v73
  %v210 = vunpack.c.l.b16 %v74
  %v211 = vunpack.c.l.b16 %v75
  %v212 = vunpack.c.l.b16 %v76
  %v213 = vunpack.c.l.b16 %v77
  %v214 = vunpack.c.l.b16 %v78
  %v215 = vpack.c.b16 %v152, %v151
  %v216 = vpack.c.b16 %v154, %v153
  %v217 = vpack.c.b16 %v156, %v155
  %v218 = vpack.c.b16 %v158, %v157
  %v219 = vpack.c.b16 %v160, %v159
  %v220 = vpack.c.b16 %v162, %v161
  %v221 = vpack.c.b16 %v164, %v163
  %v222 = vpack.c.b16 %v166, %v165
  %v223 = vpack.c.b16 %v168, %v167
  %v224 = vpack.c.b16 %v170, %v169
  %v225 = vpack.c.b16 %v172, %v171
  %v226 = vpack.c.b16 %v174, %v173
  %v227 = vpack.c.b16 %v176, %v175
  %v228 = vpack.c.b16 %v178, %v177
  %v229 = vpack.c.b16 %v180, %v179
  %v230 = vpack.c.b16 %v182, %v181
  %v231 = vpack.c.b16 %v184, %v183
  %v232 = vpack.c.b16 %v186, %v185
  %v233 = vpack.c.b16 %v188, %v187
  %v234 = vpack.c.b16 %v190, %v189
  %v235 = vpack.c.b16 %v192, %v191
  %v236 = vpack.c.b16 %v194, %v193
  %v237 = vpack.c.b16 %v196, %v195
  %v238 = vpack.c.b16 %v198, %v197
  %v239 = vpack.c.b16 %v200, %v199
  %v240 = vpack.c.b16 %v202, %v201
  %v241 = vpack.c.b16 %v204, %v203
  %v242 = vpack.c.b16 %v206, %v205
  %v243 = vpack.c.b16 %v208, %v207
  %v244 = vpack.c.b16 %v210, %v209
  %v245 = vpack.c.b16 %v212, %v211
  %v246 = vpack.c.b16 %v214, %v213
  %v251 = vunpack.c.l.b16 %v79
  %v252 = vunpack.c.l.b16 %v80
  %v253 = vunpack.c.l.b16 %v81
  %v254 = vunpack.c.l.b16 %v82
  %v255 = vpack.c.b16 %v252, %v251
  %v256 = vpack.c.b16 %v254, %v253
  %vm259 = vcmask 261120
  %v261 = vsel %vm259, %v215, 0
  %v264 = vsel %vm259, %v216, 0
  %v267 = vsel %vm259, %v217, 0
  %v270 = vsel %vm259, %v218, 0
  %v273 = vsel %vm259, %v219, 0
  %v276 = vsel %vm259, %v220, 0
  %v279 = vsel %vm259, %v221, 0
  %v282 = vsel %vm259, %v222, 0
  %v285 = vsel %vm259, %v223, 0
  %v288 = vsel %vm259, %v224, 0
  %v291 = vsel %vm259, %v225, 0
  %v294 = vsel %vm259, %v226, 0
  %v297 = vsel %vm259, %v227, 0
  %v300 = vsel %vm259, %v228, 0
  %v303 = vsel %vm259, %v229, 0
  %v306 = vsel %vm259, %v230, 0
  %v309 = vsel %vm259, %v231, 0
  %v312 = vsel %vm259, %v232, 0
  %v315 = vsel %vm259, %v233, 0
  %v318 = vsel %vm259, %v234, 0
  %v321 = vsel %vm259, %v235, 0
  %v324 = vsel %vm259, %v236, 0
  %v327 = vsel %vm259, %v237, 0
  %v330 = vsel %vm259, %v238, 0
  %v333 = vsel %vm259, %v239, 0
  %v336 = vsel %vm259, %v240, 0
  %v339 = vsel %vm259, %v241, 0
  %v342 = vsel %vm259, %v242, 0
  %v345 = vsel %vm259, %v243, 0
  %v348 = vsel %vm259, %v244, 0
  %v351 = vsel %vm259, %v245, 0
  %v354 = vsel %vm259, %v246, 0
  %356 = vmatpush.bf16.msra.mxu0 0
  %357 = vmatpush.bf16.msra.mxu0 0
  %358 = vmatpush.bf16.msra.mxu0 0
  %359 = vmatpush.bf16.msra.mxu0 0
  %360 = vmatpush.bf16.msra.mxu0 0
  %361 = vmatpush.bf16.msra.mxu0 0
  %362 = vmatpush.bf16.msra.mxu0 %v256
  %363 = vmatpush.bf16.msra.mxu0 %v255
  %364 = vmatmul.bf16.gmra.mxu0 %v261
  %v365 = vpop.f32.mrf.mxu0
  %v366 = vadd.f32 %v85, %v365
  %v367 = vpop.f32.mrf.mxu0
  %v368 = vadd.f32 %v85, %v367
  %369 = vmatmul.bf16.gmra.mxu0 %v264
  %v370 = vpop.f32.mrf.mxu0
  %v371 = vadd.f32 %v85, %v370
  %v372 = vpop.f32.mrf.mxu0
  %v373 = vadd.f32 %v85, %v372
  %374 = vmatmul.bf16.gmra.mxu0 %v267
  %v375 = vpop.f32.mrf.mxu0
  %v376 = vadd.f32 %v85, %v375
  %v377 = vpop.f32.mrf.mxu0
  %v378 = vadd.f32 %v85, %v377
  %379 = vmatmul.bf16.gmra.mxu0 %v270
  %v380 = vpop.f32.mrf.mxu0
  %v381 = vadd.f32 %v85, %v380
  %v382 = vpop.f32.mrf.mxu0
  %v383 = vadd.f32 %v85, %v382
  %384 = vmatmul.bf16.gmra.mxu0 %v273
  %v385 = vpop.f32.mrf.mxu0
  %v386 = vadd.f32 %v85, %v385
  %v387 = vpop.f32.mrf.mxu0
  %v388 = vadd.f32 %v85, %v387
  %389 = vmatmul.bf16.gmra.mxu0 %v276
  %v390 = vpop.f32.mrf.mxu0
  %v391 = vadd.f32 %v85, %v390
  %v392 = vpop.f32.mrf.mxu0
  %v393 = vadd.f32 %v85, %v392
  %394 = vmatmul.bf16.gmra.mxu0 %v279
  %v395 = vpop.f32.mrf.mxu0
  %v396 = vadd.f32 %v85, %v395
  %v397 = vpop.f32.mrf.mxu0
  %v398 = vadd.f32 %v85, %v397
  %399 = vmatmul.bf16.gmra.mxu0 %v282
  %v400 = vpop.f32.mrf.mxu0
  %v401 = vadd.f32 %v85, %v400
  %v402 = vpop.f32.mrf.mxu0
  %v403 = vadd.f32 %v85, %v402
  %404 = vmatmul.bf16.gmra.mxu0 %v285
  %v405 = vpop.f32.mrf.mxu0
  %v406 = vadd.f32 %v85, %v405
  %v407 = vpop.f32.mrf.mxu0
  %v408 = vadd.f32 %v85, %v407
  %409 = vmatmul.bf16.gmra.mxu0 %v288
  %v410 = vpop.f32.mrf.mxu0
  %v411 = vadd.f32 %v85, %v410
  %v412 = vpop.f32.mrf.mxu0
  %v413 = vadd.f32 %v85, %v412
  %414 = vmatmul.bf16.gmra.mxu0 %v291
  %v415 = vpop.f32.mrf.mxu0
  %v416 = vadd.f32 %v85, %v415
  %v417 = vpop.f32.mrf.mxu0
  %v418 = vadd.f32 %v85, %v417
  %419 = vmatmul.bf16.gmra.mxu0 %v294
  %v420 = vpop.f32.mrf.mxu0
  %v421 = vadd.f32 %v85, %v420
  %v422 = vpop.f32.mrf.mxu0
  %v423 = vadd.f32 %v85, %v422
  %424 = vmatmul.bf16.gmra.mxu0 %v297
  %v425 = vpop.f32.mrf.mxu0
  %v426 = vadd.f32 %v85, %v425
  %v427 = vpop.f32.mrf.mxu0
  %v428 = vadd.f32 %v85, %v427
  %429 = vmatmul.bf16.gmra.mxu0 %v300
  %v430 = vpop.f32.mrf.mxu0
  %v431 = vadd.f32 %v85, %v430
  %v432 = vpop.f32.mrf.mxu0
  %v433 = vadd.f32 %v85, %v432
  %434 = vmatmul.bf16.gmra.mxu0 %v303
  %v435 = vpop.f32.mrf.mxu0
  %v436 = vadd.f32 %v85, %v435
  %v437 = vpop.f32.mrf.mxu0
  %v438 = vadd.f32 %v85, %v437
  %439 = vmatmul.bf16.gmra.mxu0 %v306
  %v440 = vpop.f32.mrf.mxu0
  %v441 = vadd.f32 %v85, %v440
  %v442 = vpop.f32.mrf.mxu0
  %v443 = vadd.f32 %v85, %v442
  %444 = vmatmul.bf16.gmra.mxu0 %v309
  %v445 = vpop.f32.mrf.mxu0
  %v446 = vadd.f32 %v85, %v445
  %v447 = vpop.f32.mrf.mxu0
  %v448 = vadd.f32 %v85, %v447
  %449 = vmatmul.bf16.gmra.mxu0 %v312
  %v450 = vpop.f32.mrf.mxu0
  %v451 = vadd.f32 %v85, %v450
  %v452 = vpop.f32.mrf.mxu0
  %v453 = vadd.f32 %v85, %v452
  %454 = vmatmul.bf16.gmra.mxu0 %v315
  %v455 = vpop.f32.mrf.mxu0
  %v456 = vadd.f32 %v85, %v455
  %v457 = vpop.f32.mrf.mxu0
  %v458 = vadd.f32 %v85, %v457
  %459 = vmatmul.bf16.gmra.mxu0 %v318
  %v460 = vpop.f32.mrf.mxu0
  %v461 = vadd.f32 %v85, %v460
  %v462 = vpop.f32.mrf.mxu0
  %v463 = vadd.f32 %v85, %v462
  %464 = vmatmul.bf16.gmra.mxu0 %v321
  %v465 = vpop.f32.mrf.mxu0
  %v466 = vadd.f32 %v85, %v465
  %v467 = vpop.f32.mrf.mxu0
  %v468 = vadd.f32 %v85, %v467
  %469 = vmatmul.bf16.gmra.mxu0 %v324
  %v470 = vpop.f32.mrf.mxu0
  %v471 = vadd.f32 %v85, %v470
  %v472 = vpop.f32.mrf.mxu0
  %v473 = vadd.f32 %v85, %v472
  %474 = vmatmul.bf16.gmra.mxu0 %v327
  %v475 = vpop.f32.mrf.mxu0
  %v476 = vadd.f32 %v85, %v475
  %v477 = vpop.f32.mrf.mxu0
  %v478 = vadd.f32 %v85, %v477
  %479 = vmatmul.bf16.gmra.mxu0 %v330
  %v480 = vpop.f32.mrf.mxu0
  %v481 = vadd.f32 %v85, %v480
  %v482 = vpop.f32.mrf.mxu0
  %v483 = vadd.f32 %v85, %v482
  %484 = vmatmul.bf16.gmra.mxu0 %v333
  %v485 = vpop.f32.mrf.mxu0
  %v486 = vadd.f32 %v85, %v485
  %v487 = vpop.f32.mrf.mxu0
  %v488 = vadd.f32 %v85, %v487
  %489 = vmatmul.bf16.gmra.mxu0 %v336
  %v490 = vpop.f32.mrf.mxu0
  %v491 = vadd.f32 %v85, %v490
  %v492 = vpop.f32.mrf.mxu0
  %v493 = vadd.f32 %v85, %v492
  %494 = vmatmul.bf16.gmra.mxu0 %v339
  %v495 = vpop.f32.mrf.mxu0
  %v496 = vadd.f32 %v85, %v495
  %v497 = vpop.f32.mrf.mxu0
  %v498 = vadd.f32 %v85, %v497
  %499 = vmatmul.bf16.gmra.mxu0 %v342
  %v500 = vpop.f32.mrf.mxu0
  %v501 = vadd.f32 %v85, %v500
  %v502 = vpop.f32.mrf.mxu0
  %v503 = vadd.f32 %v85, %v502
  %504 = vmatmul.bf16.gmra.mxu0 %v345
  %v505 = vpop.f32.mrf.mxu0
  %v506 = vadd.f32 %v85, %v505
  %v507 = vpop.f32.mrf.mxu0
  %v508 = vadd.f32 %v85, %v507
  %509 = vmatmul.bf16.gmra.mxu0 %v348
  %v510 = vpop.f32.mrf.mxu0
  %v511 = vadd.f32 %v85, %v510
  %v512 = vpop.f32.mrf.mxu0
  %v513 = vadd.f32 %v85, %v512
  %514 = vmatmul.bf16.gmra.mxu0 %v351
  %v515 = vpop.f32.mrf.mxu0
  %v516 = vadd.f32 %v85, %v515
  %v517 = vpop.f32.mrf.mxu0
  %v518 = vadd.f32 %v85, %v517
  %519 = vmatmul.bf16.gmra.mxu0 %v354
  %v520 = vpop.f32.mrf.mxu0
  %v521 = vadd.f32 %v85, %v520
  %v522 = vpop.f32.mrf.mxu0
  %v523 = vadd.f32 %v85, %v522
  %524 = vdwg.mxu0
  %525 = vst [vmem:[%s3] sm:$0xff] %v366
  %526 = vst [vmem:[%s3 + $0x8] sm:$0xff] %v368
  %527 = vst [vmem:[%s3 + $0x10] sm:$0xff] %v371
  %528 = vst [vmem:[%s3 + $0x18] sm:$0xff] %v373
  %529 = vst [vmem:[%s3 + $0x20] sm:$0xff] %v376
  %530 = vst [vmem:[%s3 + $0x28] sm:$0xff] %v378
  %531 = vst [vmem:[%s3 + $0x30] sm:$0xff] %v381
  %532 = vst [vmem:[%s3 + $0x38] sm:$0xff] %v383
  %533 = vst [vmem:[%s3 + $0x40] sm:$0xff] %v386
  %534 = vst [vmem:[%s3 + $0x48] sm:$0xff] %v388
  %535 = vst [vmem:[%s3 + $0x50] sm:$0xff] %v391
  %536 = vst [vmem:[%s3 + $0x58] sm:$0xff] %v393
  %537 = vst [vmem:[%s3 + $0x60] sm:$0xff] %v396
  %538 = vst [vmem:[%s3 + $0x68] sm:$0xff] %v398
  %539 = vst [vmem:[%s3 + $0x70] sm:$0xff] %v401
  %540 = vst [vmem:[%s3 + $0x78] sm:$0xff] %v403
  %541 = vst [vmem:[%s3 + $0x80] sm:$0xff] %v406
  %542 = vst [vmem:[%s3 + $0x88] sm:$0xff] %v408
  %543 = vst [vmem:[%s3 + $0x90] sm:$0xff] %v411
  %544 = vst [vmem:[%s3 + $0x98] sm:$0xff] %v413
  %545 = vst [vmem:[%s3 + $0xa0] sm:$0xff] %v416
  %546 = vst [vmem:[%s3 + $0xa8] sm:$0xff] %v418
  %547 = vst [vmem:[%s3 + $0xb0] sm:$0xff] %v421
  %548 = vst [vmem:[%s3 + $0xb8] sm:$0xff] %v423
  %549 = vst [vmem:[%s3 + $0xc0] sm:$0xff] %v426
  %550 = vst [vmem:[%s3 + $0xc8] sm:$0xff] %v428
  %551 = vst [vmem:[%s3 + $0xd0] sm:$0xff] %v431
  %552 = vst [vmem:[%s3 + $0xd8] sm:$0xff] %v433
  %553 = vst [vmem:[%s3 + $0xe0] sm:$0xff] %v436
  %554 = vst [vmem:[%s3 + $0xe8] sm:$0xff] %v438
  %555 = vst [vmem:[%s3 + $0xf0] sm:$0xff] %v441
  %556 = vst [vmem:[%s3 + $0xf8] sm:$0xff] %v443
  %557 = vst [vmem:[%s3 + $0x100] sm:$0xff] %v446
  %558 = vst [vmem:[%s3 + $0x108] sm:$0xff] %v448
  %559 = vst [vmem:[%s3 + $0x110] sm:$0xff] %v451
  %560 = vst [vmem:[%s3 + $0x118] sm:$0xff] %v453
  %561 = vst [vmem:[%s3 + $0x120] sm:$0xff] %v456
  %562 = vst [vmem:[%s3 + $0x128] sm:$0xff] %v458
  %563 = vst [vmem:[%s3 + $0x130] sm:$0xff] %v461
  %564 = vst [vmem:[%s3 + $0x138] sm:$0xff] %v463
  %565 = vst [vmem:[%s3 + $0x140] sm:$0xff] %v466
  %566 = vst [vmem:[%s3 + $0x148] sm:$0xff] %v468
  %567 = vst [vmem:[%s3 + $0x150] sm:$0xff] %v471
  %568 = vst [vmem:[%s3 + $0x158] sm:$0xff] %v473
  %569 = vst [vmem:[%s3 + $0x160] sm:$0xff] %v476
  %570 = vst [vmem:[%s3 + $0x168] sm:$0xff] %v478
  %571 = vst [vmem:[%s3 + $0x170] sm:$0xff] %v481
  %572 = vst [vmem:[%s3 + $0x178] sm:$0xff] %v483
  %573 = vst [vmem:[%s3 + $0x180] sm:$0xff] %v486
  %574 = vst [vmem:[%s3 + $0x188] sm:$0xff] %v488
  %575 = vst [vmem:[%s3 + $0x190] sm:$0xff] %v491
  %576 = vst [vmem:[%s3 + $0x198] sm:$0xff] %v493
  %577 = vst [vmem:[%s3 + $0x1a0] sm:$0xff] %v496
  %578 = vst [vmem:[%s3 + $0x1a8] sm:$0xff] %v498
  %579 = vst [vmem:[%s3 + $0x1b0] sm:$0xff] %v501
  %580 = vst [vmem:[%s3 + $0x1b8] sm:$0xff] %v503
  %581 = vst [vmem:[%s3 + $0x1c0] sm:$0xff] %v506
  %582 = vst [vmem:[%s3 + $0x1c8] sm:$0xff] %v508
  %583 = vst [vmem:[%s3 + $0x1d0] sm:$0xff] %v511
  %584 = vst [vmem:[%s3 + $0x1d8] sm:$0xff] %v513
  %585 = vst [vmem:[%s3 + $0x1e0] sm:$0xff] %v516
  %586 = vst [vmem:[%s3 + $0x1e8] sm:$0xff] %v518
  %587 = vst [vmem:[%s3 + $0x1f0] sm:$0xff] %v521
  %588 = vst [vmem:[%s3 + $0x1f8] sm:$0xff] %v523
  // Predicated region
  $region14: #{_lambda_.17} parent=0 // pred_check
    _
  $region15: #{_lambda_.17} parent=0 // pred_check_branch
    %590 = sbr.rel (0) target = $region17
  $region16: #{_lambda_.17} parent=0 // pred_region
    _
  $region17: #{_lambda_.17} parent=0 // pred_fallthru
    _
  // Predicated region
  $region18: #{_lambda_.17} parent=0 // pred_check
    _
  $region19: #{_lambda_.17} parent=0 // pred_check_branch
    %592 = sbr.rel (0) target = $region21
  $region20: #{_lambda_.17} parent=0 // pred_region
    _
  $region21: #{_lambda_.17} parent=0 // pred_fallthru
    _

</llo_original>
